<compile_context>
chip_gen: v6e
topology: v6e:2x2x1
jax: 0.10.0
libtpu: 0.0.40
codegen_flags: <defaults>
</compile_context>

<pallas_src>
import functools
import math

import jax
import jax.numpy as jnp
from jax.experimental import pallas as pl
from jax.experimental.pallas import tpu as pltpu


# ------------------------------ fused kernel --------------------------------


def _update_block_kernel(x_ref, w1_ref, b1_ref, wm2_ref, bm2_ref, wf_ref,
                         bf2_ref, mask_ref, flow_ref, patch_ref, zfx_ref,
                         *, TH, W, Cin, CH_M):
    f32 = jnp.float32
    bf16 = jnp.bfloat16
    RT = TH + 2                      # hidden rows computed per tile (1-row halo)
    rows = RT * W
    Cmask = mask_ref.shape[-1]

    # ---- shared first conv3x3 (mask ++ flow weights): one K=9*Cin matmul ----
    # im2col patch built tap-by-tap directly into a bf16 VMEM scratch.
    for ky in range(3):
        for kx in range(3):
            t = ky * 3 + kx
            patch_ref[:, t * Cin:(t + 1) * Cin] = (
                x_ref[0, ky:ky + RT, kx:kx + W, :].reshape(rows, Cin))
    h = jnp.dot(patch_ref[...], w1_ref[...], preferred_element_type=f32)
    h = jnp.maximum(h + b1_ref[...], 0.0)                       # (rows, 512) f32

    # ---- mask head: 1x1 conv, 0.25 already folded into wm2/bm2 --------------
    hm = h[W:(TH + 1) * W, :CH_M].astype(bf16)                  # interior rows
    mask = jnp.dot(hm, wm2_ref[...], preferred_element_type=f32) + bm2_ref[...]
    mask_ref[...] = mask.reshape(1, TH, W, Cmask).astype(mask_ref.dtype)

    # ---- flow head: ONE matmul to 9*2 tap-channels, then 9 shifted adds -----
    zf = jnp.dot(h[:, CH_M:].astype(bf16), wf_ref[...],
                 preferred_element_type=f32)                    # (rows, 18) f32
    zfx_ref[:, 1:W + 1, :] = zf.reshape(RT, W, 18)
    # conv2 zero-padding: 1-px column borders, re-zeroed every step (tiny).
    zfx_ref[:, 0:1, :] = jnp.zeros((RT, 1, 18), f32)
    zfx_ref[:, W + 1:W + 2, :] = jnp.zeros((RT, 1, 18), f32)

    t_idx = pl.program_id(1)

    @pl.when(t_idx == 0)                                        # image top edge
    def _():
        zfx_ref[0:1, :, :] = jnp.zeros((1, W + 2, 18), f32)

    @pl.when(t_idx == pl.num_programs(1) - 1)                   # image bottom edge
    def _():
        zfx_ref[RT - 1:RT, :, :] = jnp.zeros((1, W + 2, 18), f32)

    acc = jnp.zeros((TH, W, 2), f32)
    for ky in range(3):
        for kx in range(3):
            t = ky * 3 + kx
            acc = acc + zfx_ref[ky:ky + TH, kx:kx + W, 2 * t:2 * t + 2]
    flow_ref[...] = (acc + bf2_ref[...]).reshape(1, TH, W, 2).astype(flow_ref.dtype)


# ------------------------------ wrapper --------------------------------------


def _to_im2col(w):
    """(Cout, Cin, 3, 3) -> (9*Cin, Cout); row = (ky*3+kx)*Cin + cin."""
    cout, cin = w.shape[0], w.shape[1]
    return jnp.transpose(w, (2, 3, 1, 0)).reshape(9 * cin, cout)


def _pick_row_tile(H):
    for th in (32, 16, 8, 4, 2):
        if th <= H and H % th == 0:
            return th
    return H


def update_block_pallas(imgf_nchw, coords1_nchw, params, *, row_tile=None,
                        mask_dtype=jnp.float32):
    """imgf:(N,hidden,H,W), coords1:(N,2,H,W) -> (mask:(N,576,H,W), coords1)."""
    N, Cin, H, W = imgf_nchw.shape
    Cmask = params['mk_w2'].shape[0]                  # 64*9 = 576
    CH_M = params['mk_w1'].shape[0]                   # 256 (mask hidden)
    CH_F = params['fh_w1'].shape[0]                   # 256 (flow hidden)
    Chid = CH_M + CH_F

    TH = _pick_row_tile(H) if row_tile is None else row_tile
    assert H % TH == 0, "row_tile must divide H"
    HT = H // TH
    RT = TH + 2

    # ---- input: NCHW -> NHWC bf16, pad H by 2 / W by 1, overlapping row slabs
    # (2-row halo needed by the stacked 3x3 convs).  One XLA copy pass over the
    # small input tensor; removes all in-kernel zero fills / halo handling.
    x = jnp.transpose(imgf_nchw, (0, 2, 3, 1)).astype(jnp.bfloat16)
    xp = jnp.pad(x, ((0, 0), (2, 2), (1, 1), (0, 0)))           # (N, H+4, W+2, Cin)
    slabs = jnp.stack([xp[:, t * TH:t * TH + TH + 4] for t in range(HT)], axis=1)
    slabs = slabs.reshape(N * HT, TH + 4, W + 2, Cin)

    # ---- weights: concat mask/flow first convs; fold 0.25; bf16 MXU operands.
    w1 = jnp.concatenate([_to_im2col(params['mk_w1']),
                          _to_im2col(params['fh_w1'])],
                         axis=1).astype(jnp.bfloat16)           # (9*Cin, 512)
    b1 = jnp.concatenate([params['mk_b1'], params['fh_b1']]
                         ).reshape(1, Chid).astype(jnp.float32)
    wm2 = (0.25 * jnp.transpose(params['mk_w2'][:, :, 0, 0], (1, 0))
           ).astype(jnp.bfloat16)                               # (256, 576), scaled
    bm2 = (0.25 * params['mk_b2']).reshape(1, Cmask).astype(jnp.float32)
    # flow conv2 weight: (co,ci,ky,kx) -> (ci, (ky*3+kx)*2 + co) = (256, 18)
    wf = jnp.transpose(params['fh_w2'], (1, 2, 3, 0)).reshape(CH_F, 18
                       ).astype(jnp.bfloat16)
    bf2 = params['fh_b2'].reshape(1, 2).astype(jnp.float32)

    flops = 2 * N * ((H + 2 * HT) * W * (9 * Cin * Chid + CH_F * 18)
                     + H * W * CH_M * Cmask)
    bytes_accessed = (slabs.size * 2 + (w1.size + wm2.size + wf.size) * 2
                      + N * H * W * (Cmask * jnp.dtype(mask_dtype).itemsize + 8))

    kern = functools.partial(_update_block_kernel, TH=TH, W=W, Cin=Cin, CH_M=CH_M)
    mask_nhwc, dflow_nhwc = pl.pallas_call(
        kern,
        out_shape=(jax.ShapeDtypeStruct((N, H, W, Cmask), mask_dtype),
                   jax.ShapeDtypeStruct((N, H, W, 2), jnp.float32)),
        grid=(N, HT),
        in_specs=[
            pl.BlockSpec((1, TH + 4, W + 2, Cin),
                         lambda n, t: (n * HT + t, 0, 0, 0)),
            pl.BlockSpec((9 * Cin, Chid), lambda n, t: (0, 0)),
            pl.BlockSpec((1, Chid), lambda n, t: (0, 0)),
            pl.BlockSpec((CH_M, Cmask), lambda n, t: (0, 0)),
            pl.BlockSpec((1, Cmask), lambda n, t: (0, 0)),
            pl.BlockSpec((CH_F, 18), lambda n, t: (0, 0)),
            pl.BlockSpec((1, 2), lambda n, t: (0, 0)),
        ],
        out_specs=(
            pl.BlockSpec((1, TH, W, Cmask), lambda n, t: (n, t, 0, 0)),
            pl.BlockSpec((1, TH, W, 2), lambda n, t: (n, t, 0, 0)),
        ),
        scratch_shapes=[
            pltpu.VMEM((RT * W, 9 * Cin), jnp.bfloat16),   # bf16 im2col patch
            pltpu.VMEM((RT, W + 2, 18), jnp.float32),      # flow taps (+1px pad)
        ],
        compiler_params=pltpu.CompilerParams(
            dimension_semantics=("parallel", "parallel")),
        cost_estimate=pl.CostEstimate(flops=int(flops), transcendentals=0,
                                      bytes_accessed=int(bytes_accessed)),
    )(slabs, w1, b1, wm2, bm2, wf, bf2)

    # TODO(synk): keep the 576-channel mask in NHWC if the surrounding model can
    #             consume it; this transpose is a full HBM round-trip of the
    #             largest tensor and exists only for NCHW interface parity.
    mask = jnp.transpose(mask_nhwc, (0, 3, 1, 2))
    coords_out = coords1_nchw + jnp.transpose(dflow_nhwc, (0, 3, 1, 2))
    return mask, coords_out


# ------------------------------ params ---------------------------------------


def init_params(key, hidden_dim):
    """Deterministic PyTorch-style (kaiming-uniform-ish bound) init."""
    ks = jax.random.split(key, 8)

    def conv_w(k, cout, cin, kh, kw):
        bound = 1.0 / math.sqrt(cin * kh * kw)
        return jax.random.uniform(k, (cout, cin, kh, kw), jnp.float32, -bound, bound)

    def conv_b(k, cout, fan_in):
        bound = 1.0 / math.sqrt(fan_in)
        return jax.random.uniform(k, (cout,), jnp.float32, -bound, bound)

    return dict(
        fh_w1=conv_w(ks[0], 256, hidden_dim, 3, 3),
        fh_b1=conv_b(ks[1], 256, hidden_dim * 9),
        fh_w2=conv_w(ks[2], 2, 256, 3, 3),
        fh_b2=conv_b(ks[3], 2, 256 * 9),
        mk_w1=conv_w(ks[4], 256, hidden_dim, 3, 3),
        mk_b1=conv_b(ks[5], 256, hidden_dim * 9),
        mk_w2=conv_w(ks[6], 64 * 9, 256, 1, 1),
        mk_b2=conv_b(ks[7], 64 * 9, 256),
    )


# ------------------------------ pure-JAX reference ---------------------------


def _conv2d_ref(x, w, b, pad):
    y = jax.lax.conv_general_dilated(
        x, w, (1, 1), [(pad, pad), (pad, pad)],
        dimension_numbers=('NCHW', 'OIHW', 'NCHW'),
        precision=jax.lax.Precision.HIGHEST)
    return y + b[None, :, None, None]


def update_block_ref(imgf, coords1, p):
    h_m = jnp.maximum(_conv2d_ref(imgf, p['mk_w1'], p['mk_b1'], 1), 0.0)
    mask = 0.25 * _conv2d_ref(h_m, p['mk_w2'], p['mk_b2'], 0)
    h_f = jnp.maximum(_conv2d_ref(imgf, p['fh_w1'], p['fh_b1'], 1), 0.0)
    dflow = _conv2d_ref(h_f, p['fh_w2'], p['fh_b2'], 1)
    return mask, coords1 + dflow


# ----------------------------------- main ------------------------------------


if __name__ == "__main__":
    N, hidden_dim, H, W = 2, 32, 16, 16

    key = jax.random.PRNGKey(0)
    k_img, k_coord, k_param = jax.random.split(key, 3)

    imgf = jax.random.normal(k_img, (N, hidden_dim, H, W), jnp.float32)
    coords1 = jax.random.normal(k_coord, (N, 2, H, W), jnp.float32)
    params = init_params(k_param, hidden_dim)

    # row_tile=4 -> 4 row tiles per image: exercises top / middle / bottom halo
    # handling of the tiled kernel at the small test shape.
    fwd = jax.jit(functools.partial(update_block_pallas, row_tile=4))
    mask, coords_out = fwd(imgf, coords1, params)
    jax.block_until_ready((mask, coords_out))

    mask_ref, coords_ref = update_block_ref(imgf, coords1, params)
    assert mask.shape == (N, 64 * 9, H, W)
    assert coords_out.shape == (N, 2, H, W)
    # bf16 MXU operands with f32 accumulation -> slightly looser tolerance.
    assert bool(jnp.allclose(mask, mask_ref, rtol=2e-2, atol=2e-2))
    assert bool(jnp.allclose(coords_out, coords_ref, rtol=2e-2, atol=2e-2))

    print("KERNEL_OK")
</pallas_src>

<mosaic_0001>
module attributes {stable_mosaic.version = 11 : i64} {
  func.func @_update_block_kernel(%arg0: i32, %arg1: i32, %arg2: memref<1x8x18x32xbf16, #tpu.memory_space<vmem>>, %arg3: memref<288x512xbf16, #tpu.memory_space<vmem>>, %arg4: memref<1x512xf32, #tpu.memory_space<vmem>>, %arg5: memref<256x576xbf16, #tpu.memory_space<vmem>>, %arg6: memref<1x576xf32, #tpu.memory_space<vmem>>, %arg7: memref<256x18xbf16, #tpu.memory_space<vmem>>, %arg8: memref<1x2xf32, #tpu.memory_space<vmem>>, %arg9: memref<1x4x16x576xf32, #tpu.memory_space<vmem>>, %arg10: memref<1x4x16x2xf32, #tpu.memory_space<vmem>>, %arg11: memref<96x288xbf16, #tpu.memory_space<vmem>>, %arg12: memref<6x18x18xf32, #tpu.memory_space<vmem>>) attributes {dimension_semantics = [#tpu.dimension_semantics<parallel>, #tpu.dimension_semantics<parallel>], iteration_bounds = array<i64: 2, 4>, scalar_prefetch = 0 : i64, scratch_operands = 2 : i64, tpu.core_type = #tpu.core_type<tc>, window_params = [{transform_indices = @transform_0, window_bounds = array<i64: 1, 8, 18, 32>}, {pipeline_mode = #tpu.pipeline_mode<synchronous>, transform_indices = @transform_1, window_bounds = array<i64: 288, 512>}, {pipeline_mode = #tpu.pipeline_mode<synchronous>, transform_indices = @transform_2, window_bounds = array<i64: 1, 512>}, {pipeline_mode = #tpu.pipeline_mode<synchronous>, transform_indices = @transform_3, window_bounds = array<i64: 256, 576>}, {pipeline_mode = #tpu.pipeline_mode<synchronous>, transform_indices = @transform_4, window_bounds = array<i64: 1, 576>}, {pipeline_mode = #tpu.pipeline_mode<synchronous>, transform_indices = @transform_5, window_bounds = array<i64: 256, 18>}, {pipeline_mode = #tpu.pipeline_mode<synchronous>, transform_indices = @transform_6, window_bounds = array<i64: 1, 2>}, {transform_indices = @transform_7, window_bounds = array<i64: 1, 4, 16, 576>}, {transform_indices = @transform_8, window_bounds = array<i64: 1, 4, 16, 2>}]} {
    %c0 = arith.constant 0 : index
    %c0_0 = arith.constant 0 : index
    %c0_1 = arith.constant 0 : index
    %c0_2 = arith.constant 0 : index
    %0 = vector.load %arg2[%c0, %c0_0, %c0_1, %c0_2] : memref<1x8x18x32xbf16, #tpu.memory_space<vmem>>, vector<1x6x16x32xbf16>
    %1 = vector.shape_cast %0 : vector<1x6x16x32xbf16> to vector<6x16x32xbf16>
    %2 = vector.shape_cast %1 : vector<6x16x32xbf16> to vector<96x32xbf16>
    %c0_3 = arith.constant 0 : index
    %c0_4 = arith.constant 0 : index
    %3 = vector.load %arg11[%c0_3, %c0_4] : memref<96x288xbf16, #tpu.memory_space<vmem>>, vector<96x32xbf16>
    tpu.vector_store %arg11[%c0_3, %c0_4], %2 {strides = array<i32>} : memref<96x288xbf16, #tpu.memory_space<vmem>>, vector<96x32xbf16>,
    %c0_5 = arith.constant 0 : index
    %c0_6 = arith.constant 0 : index
    %c1 = arith.constant 1 : index
    %c0_7 = arith.constant 0 : index
    %4 = vector.load %arg2[%c0_5, %c0_6, %c1, %c0_7] : memref<1x8x18x32xbf16, #tpu.memory_space<vmem>>, vector<1x6x16x32xbf16>
    %5 = vector.shape_cast %4 : vector<1x6x16x32xbf16> to vector<6x16x32xbf16>
    %6 = vector.shape_cast %5 : vector<6x16x32xbf16> to vector<96x32xbf16>
    %c0_8 = arith.constant 0 : index
    %c32 = arith.constant 32 : index
    %7 = vector.load %arg11[%c0_8, %c32] : memref<96x288xbf16, #tpu.memory_space<vmem>>, vector<96x32xbf16>
    tpu.vector_store %arg11[%c0_8, %c32], %6 {strides = array<i32>} : memref<96x288xbf16, #tpu.memory_space<vmem>>, vector<96x32xbf16>,
    %c0_9 = arith.constant 0 : index
    %c0_10 = arith.constant 0 : index
    %c2 = arith.constant 2 : index
    %c0_11 = arith.constant 0 : index
    %8 = vector.load %arg2[%c0_9, %c0_10, %c2, %c0_11] : memref<1x8x18x32xbf16, #tpu.memory_space<vmem>>, vector<1x6x16x32xbf16>
    %9 = vector.shape_cast %8 : vector<1x6x16x32xbf16> to vector<6x16x32xbf16>
    %10 = vector.shape_cast %9 : vector<6x16x32xbf16> to vector<96x32xbf16>
    %c0_12 = arith.constant 0 : index
    %c64 = arith.constant 64 : index
    %11 = vector.load %arg11[%c0_12, %c64] : memref<96x288xbf16, #tpu.memory_space<vmem>>, vector<96x32xbf16>
    tpu.vector_store %arg11[%c0_12, %c64], %10 {strides = array<i32>} : memref<96x288xbf16, #tpu.memory_space<vmem>>, vector<96x32xbf16>,
    %c0_13 = arith.constant 0 : index
    %c1_14 = arith.constant 1 : index
    %c0_15 = arith.constant 0 : index
    %c0_16 = arith.constant 0 : index
    %12 = vector.load %arg2[%c0_13, %c1_14, %c0_15, %c0_16] : memref<1x8x18x32xbf16, #tpu.memory_space<vmem>>, vector<1x6x16x32xbf16>
    %13 = vector.shape_cast %12 : vector<1x6x16x32xbf16> to vector<6x16x32xbf16>
    %14 = vector.shape_cast %13 : vector<6x16x32xbf16> to vector<96x32xbf16>
    %c0_17 = arith.constant 0 : index
    %c96 = arith.constant 96 : index
    %15 = vector.load %arg11[%c0_17, %c96] : memref<96x288xbf16, #tpu.memory_space<vmem>>, vector<96x32xbf16>
    tpu.vector_store %arg11[%c0_17, %c96], %14 {strides = array<i32>} : memref<96x288xbf16, #tpu.memory_space<vmem>>, vector<96x32xbf16>,
    %c0_18 = arith.constant 0 : index
    %c1_19 = arith.constant 1 : index
    %c1_20 = arith.constant 1 : index
    %c0_21 = arith.constant 0 : index
    %16 = vector.load %arg2[%c0_18, %c1_19, %c1_20, %c0_21] : memref<1x8x18x32xbf16, #tpu.memory_space<vmem>>, vector<1x6x16x32xbf16>
    %17 = vector.shape_cast %16 : vector<1x6x16x32xbf16> to vector<6x16x32xbf16>
    %18 = vector.shape_cast %17 : vector<6x16x32xbf16> to vector<96x32xbf16>
    %c0_22 = arith.constant 0 : index
    %c128 = arith.constant 128 : index
    %19 = vector.load %arg11[%c0_22, %c128] : memref<96x288xbf16, #tpu.memory_space<vmem>>, vector<96x32xbf16>
    tpu.vector_store %arg11[%c0_22, %c128], %18 {strides = array<i32>} : memref<96x288xbf16, #tpu.memory_space<vmem>>, vector<96x32xbf16>,
    %c0_23 = arith.constant 0 : index
    %c1_24 = arith.constant 1 : index
    %c2_25 = arith.constant 2 : index
    %c0_26 = arith.constant 0 : index
    %20 = vector.load %arg2[%c0_23, %c1_24, %c2_25, %c0_26] : memref<1x8x18x32xbf16, #tpu.memory_space<vmem>>, vector<1x6x16x32xbf16>
    %21 = vector.shape_cast %20 : vector<1x6x16x32xbf16> to vector<6x16x32xbf16>
    %22 = vector.shape_cast %21 : vector<6x16x32xbf16> to vector<96x32xbf16>
    %c0_27 = arith.constant 0 : index
    %c160 = arith.constant 160 : index
    %23 = vector.load %arg11[%c0_27, %c160] : memref<96x288xbf16, #tpu.memory_space<vmem>>, vector<96x32xbf16>
    tpu.vector_store %arg11[%c0_27, %c160], %22 {strides = array<i32>} : memref<96x288xbf16, #tpu.memory_space<vmem>>, vector<96x32xbf16>,
    %c0_28 = arith.constant 0 : index
    %c2_29 = arith.constant 2 : index
    %c0_30 = arith.constant 0 : index
    %c0_31 = arith.constant 0 : index
    %24 = vector.load %arg2[%c0_28, %c2_29, %c0_30, %c0_31] : memref<1x8x18x32xbf16, #tpu.memory_space<vmem>>, vector<1x6x16x32xbf16>
    %25 = vector.shape_cast %24 : vector<1x6x16x32xbf16> to vector<6x16x32xbf16>
    %26 = vector.shape_cast %25 : vector<6x16x32xbf16> to vector<96x32xbf16>
    %c0_32 = arith.constant 0 : index
    %c192 = arith.constant 192 : index
    %27 = vector.load %arg11[%c0_32, %c192] : memref<96x288xbf16, #tpu.memory_space<vmem>>, vector<96x32xbf16>
    tpu.vector_store %arg11[%c0_32, %c192], %26 {strides = array<i32>} : memref<96x288xbf16, #tpu.memory_space<vmem>>, vector<96x32xbf16>,
    %c0_33 = arith.constant 0 : index
    %c2_34 = arith.constant 2 : index
    %c1_35 = arith.constant 1 : index
    %c0_36 = arith.constant 0 : index
    %28 = vector.load %arg2[%c0_33, %c2_34, %c1_35, %c0_36] : memref<1x8x18x32xbf16, #tpu.memory_space<vmem>>, vector<1x6x16x32xbf16>
    %29 = vector.shape_cast %28 : vector<1x6x16x32xbf16> to vector<6x16x32xbf16>
    %30 = vector.shape_cast %29 : vector<6x16x32xbf16> to vector<96x32xbf16>
    %c0_37 = arith.constant 0 : index
    %c224 = arith.constant 224 : index
    %31 = vector.load %arg11[%c0_37, %c224] : memref<96x288xbf16, #tpu.memory_space<vmem>>, vector<96x32xbf16>
    tpu.vector_store %arg11[%c0_37, %c224], %30 {strides = array<i32>} : memref<96x288xbf16, #tpu.memory_space<vmem>>, vector<96x32xbf16>,
    %c0_38 = arith.constant 0 : index
    %c2_39 = arith.constant 2 : index
    %c2_40 = arith.constant 2 : index
    %c0_41 = arith.constant 0 : index
    %32 = vector.load %arg2[%c0_38, %c2_39, %c2_40, %c0_41] : memref<1x8x18x32xbf16, #tpu.memory_space<vmem>>, vector<1x6x16x32xbf16>
    %33 = vector.shape_cast %32 : vector<1x6x16x32xbf16> to vector<6x16x32xbf16>
    %34 = vector.shape_cast %33 : vector<6x16x32xbf16> to vector<96x32xbf16>
    %c0_42 = arith.constant 0 : index
    %c256 = arith.constant 256 : index
    %35 = vector.load %arg11[%c0_42, %c256] : memref<96x288xbf16, #tpu.memory_space<vmem>>, vector<96x32xbf16>
    tpu.vector_store %arg11[%c0_42, %c256], %34 {strides = array<i32>} : memref<96x288xbf16, #tpu.memory_space<vmem>>, vector<96x32xbf16>,
    %c0_43 = arith.constant 0 : index
    %c0_44 = arith.constant 0 : index
    %36 = vector.load %arg11[%c0_43, %c0_44] : memref<96x288xbf16, #tpu.memory_space<vmem>>, vector<96x288xbf16>
    %c0_45 = arith.constant 0 : index
    %c0_46 = arith.constant 0 : index
    %37 = vector.load %arg3[%c0_45, %c0_46] : memref<288x512xbf16, #tpu.memory_space<vmem>>, vector<288x512xbf16>
    %cst = arith.constant dense<0.000000e+00> : vector<96x512xf32>
    %38 = tpu.matmul %36, %37, %cst {dimension_numbers = #tpu.dot_dimension_numbers<[1], [0], [0], [1], [0, 0, 1, 1], [], []>} : vector<96x288xbf16>, vector<288x512xbf16>, vector<96x512xf32> -> vector<96x512xf32>
    %c0_47 = arith.constant 0 : index
    %c0_48 = arith.constant 0 : index
    %39 = vector.load %arg4[%c0_47, %c0_48] : memref<1x512xf32, #tpu.memory_space<vmem>>, vector<1x512xf32>
    %40 = vector.broadcast %39 : vector<1x512xf32> to vector<96x512xf32>
    %41 = arith.addf %38, %40 : vector<96x512xf32>
    %cst_49 = arith.constant 0.000000e+00 : f32
    %42 = vector.broadcast %cst_49 : f32 to vector<96x512xf32>
    %43 = arith.maximumf %41, %42 : vector<96x512xf32>
    %44 = vector.extract_strided_slice %43 {offsets = [16, 0], sizes = [64, 256], strides = [1, 1]} : vector<96x512xf32> to vector<64x256xf32>
    %45 = arith.truncf %44 : vector<64x256xf32> to vector<64x256xbf16>
    %c0_50 = arith.constant 0 : index
    %c0_51 = arith.constant 0 : index
    %46 = vector.load %arg5[%c0_50, %c0_51] : memref<256x576xbf16, #tpu.memory_space<vmem>>, vector<256x576xbf16>
    %cst_52 = arith.constant dense<0.000000e+00> : vector<64x576xf32>
    %47 = tpu.matmul %45, %46, %cst_52 {dimension_numbers = #tpu.dot_dimension_numbers<[1], [0], [0], [1], [0, 0, 1, 1], [], []>} : vector<64x256xbf16>, vector<256x576xbf16>, vector<64x576xf32> -> vector<64x576xf32>
    %c0_53 = arith.constant 0 : index
    %c0_54 = arith.constant 0 : index
    %48 = vector.load %arg6[%c0_53, %c0_54] : memref<1x576xf32, #tpu.memory_space<vmem>>, vector<1x576xf32>
    %49 = vector.broadcast %48 : vector<1x576xf32> to vector<64x576xf32>
    %50 = arith.addf %47, %49 : vector<64x576xf32>
    %51 = vector.shape_cast %50 : vector<64x576xf32> to vector<1x4x16x576xf32>
    %c0_55 = arith.constant 0 : index
    %c0_56 = arith.constant 0 : index
    %c0_57 = arith.constant 0 : index
    %c0_58 = arith.constant 0 : index
    %52 = vector.load %arg9[%c0_55, %c0_56, %c0_57, %c0_58] : memref<1x4x16x576xf32, #tpu.memory_space<vmem>>, vector<1x4x16x576xf32>
    tpu.vector_store %arg9[%c0_55, %c0_56, %c0_57, %c0_58], %51 {strides = array<i32>} : memref<1x4x16x576xf32, #tpu.memory_space<vmem>>, vector<1x4x16x576xf32>,
    %53 = vector.extract_strided_slice %43 {offsets = [0, 256], sizes = [96, 256], strides = [1, 1]} : vector<96x512xf32> to vector<96x256xf32>
    %54 = arith.truncf %53 : vector<96x256xf32> to vector<96x256xbf16>
    %c0_59 = arith.constant 0 : index
    %c0_60 = arith.constant 0 : index
    %55 = vector.load %arg7[%c0_59, %c0_60] : memref<256x18xbf16, #tpu.memory_space<vmem>>, vector<256x18xbf16>
    %cst_61 = arith.constant dense<0.000000e+00> : vector<96x18xf32>
    %56 = tpu.matmul %54, %55, %cst_61 {dimension_numbers = #tpu.dot_dimension_numbers<[1], [0], [0], [1], [0, 0, 1, 1], [], []>} : vector<96x256xbf16>, vector<256x18xbf16>, vector<96x18xf32> -> vector<96x18xf32>
    %57 = vector.shape_cast %56 : vector<96x18xf32> to vector<6x16x18xf32>
    %c0_62 = arith.constant 0 : index
    %c1_63 = arith.constant 1 : index
    %c0_64 = arith.constant 0 : index
    %58 = vector.load %arg12[%c0_62, %c1_63, %c0_64] : memref<6x18x18xf32, #tpu.memory_space<vmem>>, vector<6x16x18xf32>
    tpu.vector_store %arg12[%c0_62, %c1_63, %c0_64], %57 {strides = array<i32>} : memref<6x18x18xf32, #tpu.memory_space<vmem>>, vector<6x16x18xf32>,
    %cst_65 = arith.constant 0.000000e+00 : f32
    %59 = vector.broadcast %cst_65 : f32 to vector<6x1x18xf32>
    %c0_66 = arith.constant 0 : index
    %c0_67 = arith.constant 0 : index
    %c0_68 = arith.constant 0 : index
    %60 = vector.load %arg12[%c0_66, %c0_67, %c0_68] : memref<6x18x18xf32, #tpu.memory_space<vmem>>, vector<6x1x18xf32>
    tpu.vector_store %arg12[%c0_66, %c0_67, %c0_68], %59 {strides = array<i32>} : memref<6x18x18xf32, #tpu.memory_space<vmem>>, vector<6x1x18xf32>,
    %cst_69 = arith.constant 0.000000e+00 : f32
    %61 = vector.broadcast %cst_69 : f32 to vector<6x1x18xf32>
    %c0_70 = arith.constant 0 : index
    %c17 = arith.constant 17 : index
    %c0_71 = arith.constant 0 : index
    %62 = vector.load %arg12[%c0_70, %c17, %c0_71] : memref<6x18x18xf32, #tpu.memory_space<vmem>>, vector<6x1x18xf32>
    tpu.vector_store %arg12[%c0_70, %c17, %c0_71], %61 {strides = array<i32>} : memref<6x18x18xf32, #tpu.memory_space<vmem>>, vector<6x1x18xf32>,
    %c0_i32 = arith.constant 0 : i32
    %63 = arith.cmpi eq, %arg1, %c0_i32 : i32
    %64 = arith.extui %63 : i1 to i32
    %c0_i32_72 = arith.constant 0 : i32
    %65 = arith.cmpi ne, %64, %c0_i32_72 : i32
    scf.if %65 {
      %cst_101 = arith.constant 0.000000e+00 : f32
      %94 = vector.broadcast %cst_101 : f32 to vector<1x18x18xf32>
      %c0_102 = arith.constant 0 : index
      %c0_103 = arith.constant 0 : index
      %c0_104 = arith.constant 0 : index
      %95 = vector.load %arg12[%c0_102, %c0_103, %c0_104] : memref<6x18x18xf32, #tpu.memory_space<vmem>>, vector<1x18x18xf32>
      tpu.vector_store %arg12[%c0_102, %c0_103, %c0_104], %94 {strides = array<i32>} : memref<6x18x18xf32, #tpu.memory_space<vmem>>, vector<1x18x18xf32>,
    } else {
    }
    %c3_i32 = arith.constant 3 : i32
    %66 = arith.cmpi eq, %arg1, %c3_i32 : i32
    %67 = arith.extui %66 : i1 to i32
    %c0_i32_73 = arith.constant 0 : i32
    %68 = arith.cmpi ne, %67, %c0_i32_73 : i32
    scf.if %68 {
      %cst_101 = arith.constant 0.000000e+00 : f32
      %94 = vector.broadcast %cst_101 : f32 to vector<1x18x18xf32>
      %c5 = arith.constant 5 : index
      %c0_102 = arith.constant 0 : index
      %c0_103 = arith.constant 0 : index
      %95 = vector.load %arg12[%c5, %c0_102, %c0_103] : memref<6x18x18xf32, #tpu.memory_space<vmem>>, vector<1x18x18xf32>
      tpu.vector_store %arg12[%c5, %c0_102, %c0_103], %94 {strides = array<i32>} : memref<6x18x18xf32, #tpu.memory_space<vmem>>, vector<1x18x18xf32>,
    } else {
    }
    %cst_74 = arith.constant 0.000000e+00 : f32
    %69 = vector.broadcast %cst_74 : f32 to vector<4x16x2xf32>
    %c0_75 = arith.constant 0 : index
    %c0_76 = arith.constant 0 : index
    %c0_77 = arith.constant 0 : index
    %70 = vector.load %arg12[%c0_75, %c0_76, %c0_77] : memref<6x18x18xf32, #tpu.memory_space<vmem>>, vector<4x16x2xf32>
    %71 = arith.addf %69, %70 : vector<4x16x2xf32>
    %c0_78 = arith.constant 0 : index
    %c1_79 = arith.constant 1 : index
    %c2_80 = arith.constant 2 : index
    %72 = vector.load %arg12[%c0_78, %c1_79, %c2_80] : memref<6x18x18xf32, #tpu.memory_space<vmem>>, vector<4x16x2xf32>
    %73 = arith.addf %71, %72 : vector<4x16x2xf32>
    %c0_81 = arith.constant 0 : index
    %c2_82 = arith.constant 2 : index
    %c4 = arith.constant 4 : index
    %74 = vector.load %arg12[%c0_81, %c2_82, %c4] : memref<6x18x18xf32, #tpu.memory_space<vmem>>, vector<4x16x2xf32>
    %75 = arith.addf %73, %74 : vector<4x16x2xf32>
    %c1_83 = arith.constant 1 : index
    %c0_84 = arith.constant 0 : index
    %c6 = arith.constant 6 : index
    %76 = vector.load %arg12[%c1_83, %c0_84, %c6] : memref<6x18x18xf32, #tpu.memory_space<vmem>>, vector<4x16x2xf32>
    %77 = arith.addf %75, %76 : vector<4x16x2xf32>
    %c1_85 = arith.constant 1 : index
    %c1_86 = arith.constant 1 : index
    %c8 = arith.constant 8 : index
    %78 = vector.load %arg12[%c1_85, %c1_86, %c8] : memref<6x18x18xf32, #tpu.memory_space<vmem>>, vector<4x16x2xf32>
    %79 = arith.addf %77, %78 : vector<4x16x2xf32>
    %c1_87 = arith.constant 1 : index
    %c2_88 = arith.constant 2 : index
    %c10 = arith.constant 10 : index
    %80 = vector.load %arg12[%c1_87, %c2_88, %c10] : memref<6x18x18xf32, #tpu.memory_space<vmem>>, vector<4x16x2xf32>
    %81 = arith.addf %79, %80 : vector<4x16x2xf32>
    %c2_89 = arith.constant 2 : index
    %c0_90 = arith.constant 0 : index
    %c12 = arith.constant 12 : index
    %82 = vector.load %arg12[%c2_89, %c0_90, %c12] : memref<6x18x18xf32, #tpu.memory_space<vmem>>, vector<4x16x2xf32>
    %83 = arith.addf %81, %82 : vector<4x16x2xf32>
    %c2_91 = arith.constant 2 : index
    %c1_92 = arith.constant 1 : index
    %c14 = arith.constant 14 : index
    %84 = vector.load %arg12[%c2_91, %c1_92, %c14] : memref<6x18x18xf32, #tpu.memory_space<vmem>>, vector<4x16x2xf32>
    %85 = arith.addf %83, %84 : vector<4x16x2xf32>
    %c2_93 = arith.constant 2 : index
    %c2_94 = arith.constant 2 : index
    %c16 = arith.constant 16 : index
    %86 = vector.load %arg12[%c2_93, %c2_94, %c16] : memref<6x18x18xf32, #tpu.memory_space<vmem>>, vector<4x16x2xf32>
    %87 = arith.addf %85, %86 : vector<4x16x2xf32>
    %c0_95 = arith.constant 0 : index
    %c0_96 = arith.constant 0 : index
    %88 = vector.load %arg8[%c0_95, %c0_96] : memref<1x2xf32, #tpu.memory_space<vmem>>, vector<1x2xf32>
    %89 = vector.shape_cast %88 : vector<1x2xf32> to vector<1x1x2xf32>
    %90 = vector.broadcast %89 : vector<1x1x2xf32> to vector<4x16x2xf32>
    %91 = arith.addf %87, %90 : vector<4x16x2xf32>
    %92 = vector.shape_cast %91 : vector<4x16x2xf32> to vector<1x4x16x2xf32>
    %c0_97 = arith.constant 0 : index
    %c0_98 = arith.constant 0 : index
    %c0_99 = arith.constant 0 : index
    %c0_100 = arith.constant 0 : index
    %93 = vector.load %arg10[%c0_97, %c0_98, %c0_99, %c0_100] : memref<1x4x16x2xf32, #tpu.memory_space<vmem>>, vector<1x4x16x2xf32>
    tpu.vector_store %arg10[%c0_97, %c0_98, %c0_99, %c0_100], %92 {strides = array<i32>} : memref<1x4x16x2xf32, #tpu.memory_space<vmem>>, vector<1x4x16x2xf32>,
    return
  }
  func.func @transform_0(%arg0: i32, %arg1: i32) -> (i32, i32, i32, i32) {
    %c4_i32 = arith.constant 4 : i32
    %0 = arith.muli %arg0, %c4_i32 : i32
    %1 = arith.addi %0, %arg1 : i32
    %c0_i32 = arith.constant 0 : i32
    %c0_i32_0 = arith.constant 0 : i32
    %c0_i32_1 = arith.constant 0 : i32
    %c0_i32_2 = arith.constant 0 : i32
    return %1, %c0_i32, %c0_i32_0, %c0_i32_1 : i32, i32, i32, i32
  }
  func.func @transform_1(%arg0: i32, %arg1: i32) -> (i32, i32) {
    %c0_i32 = arith.constant 0 : i32
    %c0_i32_0 = arith.constant 0 : i32
    %c0_i32_1 = arith.constant 0 : i32
    return %c0_i32, %c0_i32_0 : i32, i32
  }
  func.func @transform_2(%arg0: i32, %arg1: i32) -> (i32, i32) {
    %c0_i32 = arith.constant 0 : i32
    %c0_i32_0 = arith.constant 0 : i32
    %c0_i32_1 = arith.constant 0 : i32
    return %c0_i32, %c0_i32_0 : i32, i32
  }
  func.func @transform_3(%arg0: i32, %arg1: i32) -> (i32, i32) {
    %c0_i32 = arith.constant 0 : i32
    %c0_i32_0 = arith.constant 0 : i32
    %c0_i32_1 = arith.constant 0 : i32
    return %c0_i32, %c0_i32_0 : i32, i32
  }
  func.func @transform_4(%arg0: i32, %arg1: i32) -> (i32, i32) {
    %c0_i32 = arith.constant 0 : i32
    %c0_i32_0 = arith.constant 0 : i32
    %c0_i32_1 = arith.constant 0 : i32
    return %c0_i32, %c0_i32_0 : i32, i32
  }
  func.func @transform_5(%arg0: i32, %arg1: i32) -> (i32, i32) {
    %c0_i32 = arith.constant 0 : i32
    %c0_i32_0 = arith.constant 0 : i32
    %c0_i32_1 = arith.constant 0 : i32
    return %c0_i32, %c0_i32_0 : i32, i32
  }
  func.func @transform_6(%arg0: i32, %arg1: i32) -> (i32, i32) {
    %c0_i32 = arith.constant 0 : i32
    %c0_i32_0 = arith.constant 0 : i32
    %c0_i32_1 = arith.constant 0 : i32
    return %c0_i32, %c0_i32_0 : i32, i32
  }
  func.func @transform_7(%arg0: i32, %arg1: i32) -> (i32, i32, i32, i32) {
    %c0_i32 = arith.constant 0 : i32
    %c0_i32_0 = arith.constant 0 : i32
    %c0_i32_1 = arith.constant 0 : i32
    return %arg0, %arg1, %c0_i32, %c0_i32_0 : i32, i32, i32, i32
  }
  func.func @transform_8(%arg0: i32, %arg1: i32) -> (i32, i32, i32, i32) {
    %c0_i32 = arith.constant 0 : i32
    %c0_i32_0 = arith.constant 0 : i32
    %c0_i32_1 = arith.constant 0 : i32
    return %arg0, %arg1, %c0_i32, %c0_i32_0 : i32, i32, i32, i32
  }
}

</mosaic_0001>

<llo_original>
// kernel: update_block_pallas.1
$region0: #{update_block_pallas.1}
  #allocation0 [shape = 'u32[]', space=smem, size = 0x4, offset = 0x4, fixed_abs, tag = 'smem constant byte address 0x4 - core index']
  #allocation1 [shape = 'u32[144,128]{1,0:T(1,128)}', space=vmem, size = 0x12000, scoped, tag = 'internal scratch']
  #allocation2 [shape = 'bf16[96,288]{1,0:T(8,128)(2,1)}', space=vmem, size = 0x12000, scoped, tag = 'scratch operand']
  #allocation3 [shape = 'f32[6,18,18]{2,1,0:T(8,128)}', space=vmem, size = 0x12000, scoped, tag = 'scratch operand']
  %s0 = inlined_call_operand.vmem [shape: bf16[8,8,18,32], index: 0, kind: input, shape index: {}]
  %s1 = inlined_call_operand.vmem [shape: bf16[288,512], index: 1, kind: input, shape index: {}]
  %s2 = inlined_call_operand.vmem [shape: f32[1,512], index: 2, kind: input, shape index: {}]
  %s3 = inlined_call_operand.vmem [shape: bf16[256,576], index: 3, kind: input, shape index: {}]
  %s4 = inlined_call_operand.vmem [shape: f32[1,576], index: 4, kind: input, shape index: {}]
  %s5 = inlined_call_operand.vmem [shape: bf16[256,18], index: 5, kind: input, shape index: {}]
  %s6 = inlined_call_operand.vmem [shape: f32[1,2], index: 6, kind: input, shape index: {}]
  %s7 = inlined_call_operand.hbm [shape: f32[2,16,16,576], index: 7, kind: output, shape index: {0}]
  %s8 = inlined_call_operand.vmem [shape: f32[2,16,16,2], index: 8, kind: output, shape index: {1}]
  %9 = xla_tuple %s7, %s8
  %s10 = sld [smem:[#allocation0]]
  $region77: #{update_block_pallas.1} parent=0
    _
  %s12 = ssub.s32 1, %s10
  %s13 = scalar_select 0, %s12, %s10
  $region1: #{update_block_pallas.1} parent=0
    #allocation4 [shape = 'u8[327680]{0}', space=vmem, size = 0x50000, scoped, tag = 'output window, operand 0']
    #allocation5 [shape = 's32[2]{0}', space=sflag, size = 0x8, scoped, tag = 'scoped memory for update_block_pallas.1']
    %14 = vsyncpa [#allocation5], 0
    %s15 = scalar_lea.sflag [#allocation5], 1
    %16 = vsyncpa %s15, 0
    loop: start=0, step=1, limit=10
    $region2: #{update_block_pallas.1} parent=1 // loop_pre_header
      _
    $region3: #{update_block_pallas.1} parent=1 // loop_header
      %s18 = sphi 0, %s22
      %p19 = scmp.ge.s32.totalorder %s18, 10
      %s25 = sphi 0, %s37
      %s26 = sphi 0, %s33
      %s27 = sphi 0, %s25
      %s28 = sphi 0, %s26
      %s29 = sphi 0, %s27
      %s30 = sphi 0, %s28
      %s44 = sphi 0, %s46
      %s47 = sphi 0, %s44
      %s48 = sphi 0, %s47
      %s64 = sphi 0, %s48
      %s68 = sphi 0, %s68
      %s70 = sphi 0, %s68
      %s71 = sphi 0, %s70
      %s85 = sphi 0, %s71
      %s89 = sphi 0, %s89
      %s91 = sphi 0, %s89
      %s92 = sphi 0, %s91
      %s106 = sphi 0, %s92
      %s110 = sphi 0, %s110
      %s112 = sphi 0, %s110
      %s113 = sphi 0, %s112
      %s127 = sphi 0, %s113
      %s131 = sphi 0, %s131
      %s133 = sphi 0, %s131
      %s134 = sphi 0, %s133
      %s148 = sphi 0, %s134
      %s152 = sphi 0, %s152
      %s154 = sphi 0, %s152
      %s155 = sphi 0, %s154
      %s169 = sphi 0, %s155
      %s173 = sphi 0, %s173
      %s175 = sphi 0, %s173
      %s176 = sphi 0, %s175
      %s190 = sphi 0, %s176
      %s198 = sphi 0, %s200
      %s201 = sphi 0, %s198
      %s202 = sphi 0, %s201
      %s218 = sphi 0, %s202
      %s226 = sphi 0, %s228
      %s229 = sphi 0, %s226
      %s230 = sphi 0, %s229
      %s246 = sphi 0, %s230
    $region4: #{update_block_pallas.1} parent=1 // loop_header_branch
      %21 = sbr.rel (%p19) target = $region8
    $region5: #{update_block_pallas.1} parent=1 // loop_body
      %s23 = ssub.s32 %s18, 1
      %s24 = ssub.s32 %s18, 2
      %s31 = sadd.s32 1, %s26
      %p32 = scmp.ge.s32.totalorder %s31, 4
      %s33 = scalar_select %p32, 0, %s31
      %s34 = sadd.s32 1, %s25
      %s35 = scalar_select %p32, %s34, %s25
      %p36 = scmp.ge.s32.totalorder %s35, 2
      %s37 = scalar_select %p36, 0, %s35
      %s38 = smul.u32 %s25, 4
      %s39 = sadd.s32 %s38, %s26
      %s40 = smul.u32 %s37, 4
      %s41 = sadd.s32 %s40, %s33
      %s42 = ssub.s32 %s39, %s41
      %p43 = scmp.eq.s32.totalorder %s42, 0
      %s45 = sadd.s32 %s44, 1
      %s46 = scalar_select %p43, %s44, %s45
      %p49 = pneg %p43
      %p50 = scmp.eq.s32.totalorder %s18, 7
      %p51 = por %p49, %p50
      %p52 = scmp.ne.s32.totalorder %s44, %s47
      %p53 = scmp.eq.s32.totalorder %s18, 0
      %p54 = por %p52, %p53
      %p55 = scmp.ne.s32.totalorder %s44, %s47
      %p56 = scmp.eq.s32.totalorder %s23, 7
      %p57 = por %p55, %p56
      %p58 = scmp.ne.s32.totalorder %s47, %s48
      %p59 = scmp.eq.s32.totalorder %s23, 0
      %p60 = por %p58, %p59
      %p61 = scmp.ne.s32.totalorder %s47, %s48
      %p62 = scmp.eq.s32.totalorder %s24, 7
      %p63 = por %p61, %p62
      %p65 = scmp.ne.s32.totalorder %s48, %s64
      %p66 = scmp.eq.s32.totalorder %s24, 0
      %p67 = por %p65, %p66
      %s69 = sadd.s32 %s68, 1
      %p72 = scmp.eq.s32.totalorder %s18, 7
      %p73 = scmp.ne.s32.totalorder %s68, %s70
      %p74 = scmp.eq.s32.totalorder %s18, 0
      %p75 = por %p73, %p74
      %p76 = scmp.ne.s32.totalorder %s68, %s70
      %p77 = scmp.eq.s32.totalorder %s23, 7
      %p78 = por %p76, %p77
      %p79 = scmp.ne.s32.totalorder %s70, %s71
      %p80 = scmp.eq.s32.totalorder %s23, 0
      %p81 = por %p79, %p80
      %p82 = scmp.ne.s32.totalorder %s70, %s71
      %p83 = scmp.eq.s32.totalorder %s24, 7
      %p84 = por %p82, %p83
      %p86 = scmp.ne.s32.totalorder %s71, %s85
      %p87 = scmp.eq.s32.totalorder %s24, 0
      %p88 = por %p86, %p87
      %s90 = sadd.s32 %s89, 1
      %p93 = scmp.eq.s32.totalorder %s18, 7
      %p94 = scmp.ne.s32.totalorder %s89, %s91
      %p95 = scmp.eq.s32.totalorder %s18, 0
      %p96 = por %p94, %p95
      %p97 = scmp.ne.s32.totalorder %s89, %s91
      %p98 = scmp.eq.s32.totalorder %s23, 7
      %p99 = por %p97, %p98
      %p100 = scmp.ne.s32.totalorder %s91, %s92
      %p101 = scmp.eq.s32.totalorder %s23, 0
      %p102 = por %p100, %p101
      %p103 = scmp.ne.s32.totalorder %s91, %s92
      %p104 = scmp.eq.s32.totalorder %s24, 7
      %p105 = por %p103, %p104
      %p107 = scmp.ne.s32.totalorder %s92, %s106
      %p108 = scmp.eq.s32.totalorder %s24, 0
      %p109 = por %p107, %p108
      %s111 = sadd.s32 %s110, 1
      %p114 = scmp.eq.s32.totalorder %s18, 7
      %p115 = scmp.ne.s32.totalorder %s110, %s112
      %p116 = scmp.eq.s32.totalorder %s18, 0
      %p117 = por %p115, %p116
      %p118 = scmp.ne.s32.totalorder %s110, %s112
      %p119 = scmp.eq.s32.totalorder %s23, 7
      %p120 = por %p118, %p119
      %p121 = scmp.ne.s32.totalorder %s112, %s113
      %p122 = scmp.eq.s32.totalorder %s23, 0
      %p123 = por %p121, %p122
      %p124 = scmp.ne.s32.totalorder %s112, %s113
      %p125 = scmp.eq.s32.totalorder %s24, 7
      %p126 = por %p124, %p125
      %p128 = scmp.ne.s32.totalorder %s113, %s127
      %p129 = scmp.eq.s32.totalorder %s24, 0
      %p130 = por %p128, %p129
      %s132 = sadd.s32 %s131, 1
      %p135 = scmp.eq.s32.totalorder %s18, 7
      %p136 = scmp.ne.s32.totalorder %s131, %s133
      %p137 = scmp.eq.s32.totalorder %s18, 0
      %p138 = por %p136, %p137
      %p139 = scmp.ne.s32.totalorder %s131, %s133
      %p140 = scmp.eq.s32.totalorder %s23, 7
      %p141 = por %p139, %p140
      %p142 = scmp.ne.s32.totalorder %s133, %s134
      %p143 = scmp.eq.s32.totalorder %s23, 0
      %p144 = por %p142, %p143
      %p145 = scmp.ne.s32.totalorder %s133, %s134
      %p146 = scmp.eq.s32.totalorder %s24, 7
      %p147 = por %p145, %p146
      %p149 = scmp.ne.s32.totalorder %s134, %s148
      %p150 = scmp.eq.s32.totalorder %s24, 0
      %p151 = por %p149, %p150
      %s153 = sadd.s32 %s152, 1
      %p156 = scmp.eq.s32.totalorder %s18, 7
      %p157 = scmp.ne.s32.totalorder %s152, %s154
      %p158 = scmp.eq.s32.totalorder %s18, 0
      %p159 = por %p157, %p158
      %p160 = scmp.ne.s32.totalorder %s152, %s154
      %p161 = scmp.eq.s32.totalorder %s23, 7
      %p162 = por %p160, %p161
      %p163 = scmp.ne.s32.totalorder %s154, %s155
      %p164 = scmp.eq.s32.totalorder %s23, 0
      %p165 = por %p163, %p164
      %p166 = scmp.ne.s32.totalorder %s154, %s155
      %p167 = scmp.eq.s32.totalorder %s24, 7
      %p168 = por %p166, %p167
      %p170 = scmp.ne.s32.totalorder %s155, %s169
      %p171 = scmp.eq.s32.totalorder %s24, 0
      %p172 = por %p170, %p171
      %s174 = sadd.s32 %s173, 1
      %p177 = scmp.eq.s32.totalorder %s18, 7
      %p178 = scmp.ne.s32.totalorder %s173, %s175
      %p179 = scmp.eq.s32.totalorder %s18, 0
      %p180 = por %p178, %p179
      %p181 = scmp.ne.s32.totalorder %s173, %s175
      %p182 = scmp.eq.s32.totalorder %s23, 7
      %p183 = por %p181, %p182
      %p184 = scmp.ne.s32.totalorder %s175, %s176
      %p185 = scmp.eq.s32.totalorder %s23, 0
      %p186 = por %p184, %p185
      %p187 = scmp.ne.s32.totalorder %s175, %s176
      %p188 = scmp.eq.s32.totalorder %s24, 7
      %p189 = por %p187, %p188
      %p191 = scmp.ne.s32.totalorder %s176, %s190
      %p192 = scmp.eq.s32.totalorder %s24, 0
      %p193 = por %p191, %p192
      %s194 = ssub.s32 %s25, %s37
      %s195 = ssub.s32 %s26, %s33
      %s196 = sor.u32 %s194, %s195
      %p197 = scmp.eq.s32.totalorder %s196, 0
      %s199 = sadd.s32 %s198, 1
      %s200 = scalar_select %p197, %s198, %s199
      %p203 = pneg %p197
      %p204 = scmp.eq.s32.totalorder %s18, 7
      %p205 = por %p203, %p204
      %p206 = scmp.ne.s32.totalorder %s198, %s201
      %p207 = scmp.eq.s32.totalorder %s18, 0
      %p208 = por %p206, %p207
      %p209 = scmp.ne.s32.totalorder %s198, %s201
      %p210 = scmp.eq.s32.totalorder %s23, 7
      %p211 = por %p209, %p210
      %p212 = scmp.ne.s32.totalorder %s201, %s202
      %p213 = scmp.eq.s32.totalorder %s23, 0
      %p214 = por %p212, %p213
      %p215 = scmp.ne.s32.totalorder %s201, %s202
      %p216 = scmp.eq.s32.totalorder %s24, 7
      %p217 = por %p215, %p216
      %p219 = scmp.ne.s32.totalorder %s202, %s218
      %p220 = scmp.eq.s32.totalorder %s24, 0
      %p221 = por %p219, %p220
      %s222 = ssub.s32 %s25, %s37
      %s223 = ssub.s32 %s26, %s33
      %s224 = sor.u32 %s222, %s223
      %p225 = scmp.eq.s32.totalorder %s224, 0
      %s227 = sadd.s32 %s226, 1
      %s228 = scalar_select %p225, %s226, %s227
      %p231 = pneg %p225
      %p232 = scmp.eq.s32.totalorder %s18, 7
      %p233 = por %p231, %p232
      %p234 = scmp.ne.s32.totalorder %s226, %s229
      %p235 = scmp.eq.s32.totalorder %s18, 0
      %p236 = por %p234, %p235
      %p237 = scmp.ne.s32.totalorder %s226, %s229
      %p238 = scmp.eq.s32.totalorder %s23, 7
      %p239 = por %p237, %p238
      %p240 = scmp.ne.s32.totalorder %s229, %s230
      %p241 = scmp.eq.s32.totalorder %s23, 0
      %p242 = por %p240, %p241
      %p243 = scmp.ne.s32.totalorder %s229, %s230
      %p244 = scmp.eq.s32.totalorder %s24, 7
      %p245 = por %p243, %p244
      %p247 = scmp.ne.s32.totalorder %s230, %s246
      %p248 = scmp.eq.s32.totalorder %s24, 0
      %p249 = por %p247, %p248
      %p250 = scmp.le.s32.totalorder 1, %s18
      %p251 = scmp.lt.s32.totalorder %s18, 9
      %p252 = pnand %p250, %p251
      %p253 = pneg %p252
      // Predicated region
      $region9: #{update_block_pallas.1} parent=5 // pred_check
        _
      $region10: #{update_block_pallas.1} parent=5 // pred_check_branch
        %255 = sbr.rel (%p252) target = $region12
      $region11: #{update_block_pallas.1} parent=5 // pred_region
        %s256 = ssub.s32 %s18, 1
        // Predicated region
        $region13: #{update_block_pallas.1} parent=11 // pred_check
          %p257 = pneg %p81
        $region14: #{update_block_pallas.1} parent=11 // pred_check_branch
          %259 = sbr.rel (%p257) target = $region16
        $region15: #{update_block_pallas.1} parent=11 // pred_region
          _
        $region16: #{update_block_pallas.1} parent=11 // pred_fallthru
          _
        // Predicated region
        $region17: #{update_block_pallas.1} parent=11 // pred_check
          %p260 = pneg %p102
        $region18: #{update_block_pallas.1} parent=11 // pred_check_branch
          %262 = sbr.rel (%p260) target = $region20
        $region19: #{update_block_pallas.1} parent=11 // pred_region
          _
        $region20: #{update_block_pallas.1} parent=11 // pred_fallthru
          _
        // Predicated region
        $region21: #{update_block_pallas.1} parent=11 // pred_check
          %p263 = pneg %p123
        $region22: #{update_block_pallas.1} parent=11 // pred_check_branch
          %265 = sbr.rel (%p263) target = $region24
        $region23: #{update_block_pallas.1} parent=11 // pred_region
          _
        $region24: #{update_block_pallas.1} parent=11 // pred_fallthru
          _
        // Predicated region
        $region25: #{update_block_pallas.1} parent=11 // pred_check
          %p266 = pneg %p144
        $region26: #{update_block_pallas.1} parent=11 // pred_check_branch
          %268 = sbr.rel (%p266) target = $region28
        $region27: #{update_block_pallas.1} parent=11 // pred_region
          _
        $region28: #{update_block_pallas.1} parent=11 // pred_fallthru
          _
        // Predicated region
        $region29: #{update_block_pallas.1} parent=11 // pred_check
          %p269 = pneg %p165
        $region30: #{update_block_pallas.1} parent=11 // pred_check_branch
          %271 = sbr.rel (%p269) target = $region32
        $region31: #{update_block_pallas.1} parent=11 // pred_region
          _
        $region32: #{update_block_pallas.1} parent=11 // pred_fallthru
          _
        // Predicated region
        $region33: #{update_block_pallas.1} parent=11 // pred_check
          %p272 = pneg %p186
        $region34: #{update_block_pallas.1} parent=11 // pred_check_branch
          %274 = sbr.rel (%p272) target = $region36
        $region35: #{update_block_pallas.1} parent=11 // pred_region
          _
        $region36: #{update_block_pallas.1} parent=11 // pred_fallthru
          _
      $region12: #{update_block_pallas.1} parent=5 // pred_fallthru
        _
      %p275 = scmp.lt.s32.totalorder %s18, 8
      // Predicated region
      $region37: #{update_block_pallas.1} parent=5 // pred_check
        %p276 = pneg %p275
      $region38: #{update_block_pallas.1} parent=5 // pred_check_branch
        %278 = sbr.rel (%p276) target = $region40
      $region39: #{update_block_pallas.1} parent=5 // pred_region
        // Predicated region
        $region41: #{update_block_pallas.1} parent=39 // pred_check
          %p279 = pneg %p54
        $region42: #{update_block_pallas.1} parent=39 // pred_check_branch
          %281 = sbr.rel (%p279) target = $region44
        $region43: #{update_block_pallas.1} parent=39 // pred_region
          %s282 = smul.u32 %s25, 4
          %s283 = sadd.s32 %s282, %s26
          %p284 = scmp.lt.s32.totalorder %s283, 7
          %s285 = scalar_select %p284, %s283, 7
          %s286 = smul.addr %s285, 24
          %s287 = smul.addr %s286, 4
          %s288 = scalar_lea.vmem %s0, %s287
          %s289 = smul.u32 %s25, 4
          %s290 = sadd.s32 %s289, %s26
        $region44: #{update_block_pallas.1} parent=39 // pred_fallthru
          _
      $region40: #{update_block_pallas.1} parent=5 // pred_fallthru
        _
      %p291 = scmp.le.s32.totalorder 1, %s18
      %p292 = scmp.lt.s32.totalorder %s18, 9
      %p293 = pnand %p291, %p292
      %p294 = pneg %p293
      // Predicated region
      $region45: #{update_block_pallas.1} parent=5 // pred_check
        _
      $region46: #{update_block_pallas.1} parent=5 // pred_check_branch
        %296 = sbr.rel (%p293) target = $region48
      $region47: #{update_block_pallas.1} parent=5 // pred_region
        %s297 = ssub.s32 %s18, 1
        %s298 = smul.u32 %s27, 4
        %s299 = sadd.s32 %s298, %s28
        %p300 = scmp.lt.s32.totalorder %s299, 7
        %s301 = scalar_select %p300, %s299, 7
        %s302 = smul.addr %s301, 24
        %s303 = smul.addr %s302, 4
        %s304 = scalar_lea.vmem %s0, %s303
        %p305 = pneg %p60
        %p306 = pneg %p57
        %p307 = pneg %p81
        %p308 = pneg %p78
        %p309 = pneg %p102
        %p310 = pneg %p99
        %p311 = pneg %p123
        %p312 = pneg %p120
        %p313 = pneg %p144
        %p314 = pneg %p141
        %p315 = pneg %p165
        %p316 = pneg %p162
        %p317 = pneg %p186
        %p318 = pneg %p183
        %p319 = pneg %p214
        %p320 = pneg %p211
        %s321 = sand.u32 %s201, 1
        %s322 = scalar_lea.sflag [#allocation5], %s321
        %s323 = sand.u32 %s201, 1
        %s324 = smul.addr %s323, 320
        %s325 = scalar_lea.vmem [#allocation4], %s324
        %p326 = pneg %p242
        %p327 = pneg %p239
        %s328 = smul.u32 4, %s28
        %p329 = scmp.lt.s32.totalorder %s27, 1
        %s330 = scalar_select %p329, %s27, 1
        %p331 = scmp.lt.s32.totalorder %s328, 15
        %s332 = scalar_select %p331, %s328, 15
        %s333 = smul.addr %s332, 2
        %s334 = smul.addr %s330, 32
        %s335 = sadd.s32 %s333, %s334
        %s336 = smul.addr %s335, 8
        %s337 = scalar_lea.vmem %s8, %s336
        %s338 = smul.u32 %s27, 4
        %s339 = sadd.s32 %s338, %s28
        %p340 = scmp.lt.s32.totalorder %s339, 7
        %s341 = scalar_select %p340, %s339, 7
        %s342 = smul.addr %s341, 24
        %s343 = smul.addr %s342, 4
        %s344 = scalar_lea.vmem %s0, %s343
        %s345 = smul.u32 %s27, 4
        %s346 = sadd.s32 %s345, %s28
        %s347 = smul.u32 4, %s28
        %s348 = smul.u32 4, %s28
        %p349 = scmp.lt.s32.totalorder %s27, 1
        %s350 = scalar_select %p349, %s27, 1
        %p351 = scmp.lt.s32.totalorder %s348, 15
        %s352 = scalar_select %p351, %s348, 15
        %s353 = smul.addr %s352, 2
        %s354 = smul.addr %s350, 32
        %s355 = sadd.s32 %s353, %s354
        %s356 = smul.addr %s355, 8
        %s357 = scalar_lea.vmem %s8, %s356
        %s358 = smul.u32 4, %s28
        %v360 = vld [vmem:[%s344] sm:$0xf]
        %v361 = vld [vmem:[%s344 + $0x4] sm:$0xf]
        %v362 = vld [vmem:[%s344 + $0xc] sm:$0xf]
        %v363 = vld [vmem:[%s344 + $0x10] sm:$0xf]
        %v364 = vld [vmem:[%s344 + $0x18] sm:$0xf]
        %v365 = vld [vmem:[%s344 + $0x1c] sm:$0xf]
        %v366 = vld [vmem:[%s344 + $0x24] sm:$0xf]
        %v367 = vld [vmem:[%s344 + $0x28] sm:$0xf]
        %v368 = vld [vmem:[%s344 + $0x30] sm:$0xf]
        %v369 = vld [vmem:[%s344 + $0x34] sm:$0xf]
        %v370 = vld [vmem:[%s344 + $0x3c] sm:$0xf]
        %v371 = vld [vmem:[%s344 + $0x40] sm:$0xf]
        %vm372 = vcmask 257024
        %373 = vst.msk [vmem:[#allocation2] sm:$0xf] %vm372, %v360
        %374 = vst.msk [vmem:[#allocation2 + $0xc] sm:$0xf] %vm372, %v361
        %375 = vst.msk [vmem:[#allocation2 + $0x18] sm:$0xf] %vm372, %v362
        %376 = vst.msk [vmem:[#allocation2 + $0x24] sm:$0xf] %vm372, %v363
        %377 = vst.msk [vmem:[#allocation2 + $0x30] sm:$0xf] %vm372, %v364
        %378 = vst.msk [vmem:[#allocation2 + $0x3c] sm:$0xf] %vm372, %v365
        %379 = vst.msk [vmem:[#allocation2 + $0x48] sm:$0xf] %vm372, %v366
        %380 = vst.msk [vmem:[#allocation2 + $0x54] sm:$0xf] %vm372, %v367
        %381 = vst.msk [vmem:[#allocation2 + $0x60] sm:$0xf] %vm372, %v368
        %382 = vst.msk [vmem:[#allocation2 + $0x6c] sm:$0xf] %vm372, %v369
        %383 = vst.msk [vmem:[#allocation2 + $0x78] sm:$0xf] %vm372, %v370
        %384 = vst.msk [vmem:[#allocation2 + $0x84] sm:$0xf] %vm372, %v371
        %v385 = vld [vmem:[%s344] sm:$0xf]
        %v386 = vld [vmem:[%s344 + $0x4] sm:$0xf]
        %v387 = vld [vmem:[%s344 + $0x8] sm:$0x1]
        %v388 = vld [vmem:[%s344 + $0xc] sm:$0xf]
        %v389 = vld [vmem:[%s344 + $0x10] sm:$0xf]
        %v390 = vld [vmem:[%s344 + $0x14] sm:$0x1]
        %v391 = vld [vmem:[%s344 + $0x18] sm:$0xf]
        %v392 = vld [vmem:[%s344 + $0x1c] sm:$0xf]
        %v393 = vld [vmem:[%s344 + $0x20] sm:$0x1]
        %v394 = vld [vmem:[%s344 + $0x24] sm:$0xf]
        %v395 = vld [vmem:[%s344 + $0x28] sm:$0xf]
        %v396 = vld [vmem:[%s344 + $0x2c] sm:$0x1]
        %v397 = vld [vmem:[%s344 + $0x30] sm:$0xf]
        %v398 = vld [vmem:[%s344 + $0x34] sm:$0xf]
        %v399 = vld [vmem:[%s344 + $0x38] sm:$0x1]
        %v400 = vld [vmem:[%s344 + $0x3c] sm:$0xf]
        %v401 = vld [vmem:[%s344 + $0x40] sm:$0xf]
        %v402 = vld [vmem:[%s344 + $0x44] sm:$0x1]
        %vm403 = vsmask.f32 3328
        %vm404 = vsmask.f32 7440
        %vm405 = vmor %vm403, %vm404
        %v407 = vshrl.u32 %v385, 16
        %v409 = vrot.slane %v407, 4
        %v410 = vshll.u32 %v385, 16
        %v412 = vrot.slane %v410, 5
        %v413 = vor.u32 %v409, %v412
        %v414 = vrot.slane %v413, 4
        %v416 = vshll.u32 %v386, 16
        %v418 = vrot.slane %v416, 5
        %v419 = vsel %vm405, %v414, %v418
        %v420 = vshrl.u32 %v386, 16
        %v422 = vrot.slane %v420, 4
        %v423 = vor.u32 %v422, %v418
        %v424 = vrot.slane %v423, 4
        %v426 = vshll.u32 %v387, 16
        %v428 = vrot.slane %v426, 5
        %v429 = vsel %vm405, %v424, %v428
        %v431 = vshrl.u32 %v388, 16
        %v433 = vrot.slane %v431, 4
        %v434 = vshll.u32 %v388, 16
        %v436 = vrot.slane %v434, 5
        %v437 = vor.u32 %v433, %v436
        %v438 = vrot.slane %v437, 4
        %v440 = vshll.u32 %v389, 16
        %v442 = vrot.slane %v440, 5
        %v443 = vsel %vm405, %v438, %v442
        %v444 = vshrl.u32 %v389, 16
        %v446 = vrot.slane %v444, 4
        %v447 = vor.u32 %v446, %v442
        %v448 = vrot.slane %v447, 4
        %v450 = vshll.u32 %v390, 16
        %v452 = vrot.slane %v450, 5
        %v453 = vsel %vm405, %v448, %v452
        %v455 = vshrl.u32 %v391, 16
        %v457 = vrot.slane %v455, 4
        %v458 = vshll.u32 %v391, 16
        %v460 = vrot.slane %v458, 5
        %v461 = vor.u32 %v457, %v460
        %v462 = vrot.slane %v461, 4
        %v464 = vshll.u32 %v392, 16
        %v466 = vrot.slane %v464, 5
        %v467 = vsel %vm405, %v462, %v466
        %v468 = vshrl.u32 %v392, 16
        %v470 = vrot.slane %v468, 4
        %v471 = vor.u32 %v470, %v466
        %v472 = vrot.slane %v471, 4
        %v474 = vshll.u32 %v393, 16
        %v476 = vrot.slane %v474, 5
        %v477 = vsel %vm405, %v472, %v476
        %v479 = vshrl.u32 %v394, 16
        %v481 = vrot.slane %v479, 4
        %v482 = vshll.u32 %v394, 16
        %v484 = vrot.slane %v482, 5
        %v485 = vor.u32 %v481, %v484
        %v486 = vrot.slane %v485, 4
        %v488 = vshll.u32 %v395, 16
        %v490 = vrot.slane %v488, 5
        %v491 = vsel %vm405, %v486, %v490
        %v492 = vshrl.u32 %v395, 16
        %v494 = vrot.slane %v492, 4
        %v495 = vor.u32 %v494, %v490
        %v496 = vrot.slane %v495, 4
        %v498 = vshll.u32 %v396, 16
        %v500 = vrot.slane %v498, 5
        %v501 = vsel %vm405, %v496, %v500
        %v503 = vshrl.u32 %v397, 16
        %v505 = vrot.slane %v503, 4
        %v506 = vshll.u32 %v397, 16
        %v508 = vrot.slane %v506, 5
        %v509 = vor.u32 %v505, %v508
        %v510 = vrot.slane %v509, 4
        %v512 = vshll.u32 %v398, 16
        %v514 = vrot.slane %v512, 5
        %v515 = vsel %vm405, %v510, %v514
        %v516 = vshrl.u32 %v398, 16
        %v518 = vrot.slane %v516, 4
        %v519 = vor.u32 %v518, %v514
        %v520 = vrot.slane %v519, 4
        %v522 = vshll.u32 %v399, 16
        %v524 = vrot.slane %v522, 5
        %v525 = vsel %vm405, %v520, %v524
        %v527 = vshrl.u32 %v400, 16
        %v529 = vrot.slane %v527, 4
        %v530 = vshll.u32 %v400, 16
        %v532 = vrot.slane %v530, 5
        %v533 = vor.u32 %v529, %v532
        %v534 = vrot.slane %v533, 4
        %v536 = vshll.u32 %v401, 16
        %v538 = vrot.slane %v536, 5
        %v539 = vsel %vm405, %v534, %v538
        %v540 = vshrl.u32 %v401, 16
        %v542 = vrot.slane %v540, 4
        %v543 = vor.u32 %v542, %v538
        %v544 = vrot.slane %v543, 4
        %v546 = vshll.u32 %v402, 16
        %v548 = vrot.slane %v546, 5
        %v549 = vsel %vm405, %v544, %v548
        %550 = vrot.lane.b32.xlu0 %v419, 32
        %v551 = vpop.permute.xlu0 %550
        %552 = vrot.lane.b32.xlu0 %v429, 32
        %v553 = vpop.permute.xlu0 %552
        %554 = vrot.lane.b32.xlu0 %v443, 32
        %v555 = vpop.permute.xlu0 %554
        %556 = vrot.lane.b32.xlu0 %v453, 32
        %v557 = vpop.permute.xlu0 %556
        %558 = vrot.lane.b32.xlu0 %v467, 32
        %v559 = vpop.permute.xlu0 %558
        %560 = vrot.lane.b32.xlu0 %v477, 32
        %v561 = vpop.permute.xlu0 %560
        %562 = vrot.lane.b32.xlu0 %v491, 32
        %v563 = vpop.permute.xlu0 %562
        %564 = vrot.lane.b32.xlu0 %v501, 32
        %v565 = vpop.permute.xlu0 %564
        %566 = vrot.lane.b32.xlu0 %v515, 32
        %v567 = vpop.permute.xlu0 %566
        %568 = vrot.lane.b32.xlu0 %v525, 32
        %v569 = vpop.permute.xlu0 %568
        %570 = vrot.lane.b32.xlu0 %v539, 32
        %v571 = vpop.permute.xlu0 %570
        %572 = vrot.lane.b32.xlu0 %v549, 32
        %v573 = vpop.permute.xlu0 %572
        %vm586 = vcmask 519424
        %587 = vst.msk [vmem:[#allocation2] sm:$0xf] %vm586, %v551
        %588 = vst.msk [vmem:[#allocation2 + $0xc] sm:$0xf] %vm586, %v553
        %589 = vst.msk [vmem:[#allocation2 + $0x18] sm:$0xf] %vm586, %v555
        %590 = vst.msk [vmem:[#allocation2 + $0x24] sm:$0xf] %vm586, %v557
        %591 = vst.msk [vmem:[#allocation2 + $0x30] sm:$0xf] %vm586, %v559
        %592 = vst.msk [vmem:[#allocation2 + $0x3c] sm:$0xf] %vm586, %v561
        %593 = vst.msk [vmem:[#allocation2 + $0x48] sm:$0xf] %vm586, %v563
        %594 = vst.msk [vmem:[#allocation2 + $0x54] sm:$0xf] %vm586, %v565
        %595 = vst.msk [vmem:[#allocation2 + $0x60] sm:$0xf] %vm586, %v567
        %596 = vst.msk [vmem:[#allocation2 + $0x6c] sm:$0xf] %vm586, %v569
        %597 = vst.msk [vmem:[#allocation2 + $0x78] sm:$0xf] %vm586, %v571
        %598 = vst.msk [vmem:[#allocation2 + $0x84] sm:$0xf] %vm586, %v573
        %v599 = vld [vmem:[%s344] sm:$0xe]
        %v600 = vld [vmem:[%s344 + $0x4] sm:$0xf]
        %v601 = vld [vmem:[%s344 + $0x8] sm:$0x1]
        %v602 = vld [vmem:[%s344 + $0xc] sm:$0xe]
        %v603 = vld [vmem:[%s344 + $0x10] sm:$0xf]
        %v604 = vld [vmem:[%s344 + $0x14] sm:$0x1]
        %v605 = vld [vmem:[%s344 + $0x18] sm:$0xe]
        %v606 = vld [vmem:[%s344 + $0x1c] sm:$0xf]
        %v607 = vld [vmem:[%s344 + $0x20] sm:$0x1]
        %v608 = vld [vmem:[%s344 + $0x24] sm:$0xe]
        %v609 = vld [vmem:[%s344 + $0x28] sm:$0xf]
        %v610 = vld [vmem:[%s344 + $0x2c] sm:$0x1]
        %v611 = vld [vmem:[%s344 + $0x30] sm:$0xe]
        %v612 = vld [vmem:[%s344 + $0x34] sm:$0xf]
        %v613 = vld [vmem:[%s344 + $0x38] sm:$0x1]
        %v614 = vld [vmem:[%s344 + $0x3c] sm:$0xe]
        %v615 = vld [vmem:[%s344 + $0x40] sm:$0xf]
        %v616 = vld [vmem:[%s344 + $0x44] sm:$0x1]
        %vm635 = vcmask 1042432
        %vm636 = vcmask 1046532
        %vm637 = vmor %vm635, %vm636
        %v638 = vrot.slane %v599, 5
        %v639 = vrot.slane %v638, 4
        %v640 = vrot.slane %v600, 5
        %v641 = vsel %vm637, %v639, %v640
        %v642 = vrot.slane %v640, 4
        %v643 = vrot.slane %v601, 5
        %v644 = vsel %vm637, %v642, %v643
        %v645 = vrot.slane %v602, 5
        %v646 = vrot.slane %v645, 4
        %v647 = vrot.slane %v603, 5
        %v648 = vsel %vm637, %v646, %v647
        %v649 = vrot.slane %v647, 4
        %v650 = vrot.slane %v604, 5
        %v651 = vsel %vm637, %v649, %v650
        %v652 = vrot.slane %v605, 5
        %v653 = vrot.slane %v652, 4
        %v654 = vrot.slane %v606, 5
        %v655 = vsel %vm637, %v653, %v654
        %v656 = vrot.slane %v654, 4
        %v657 = vrot.slane %v607, 5
        %v658 = vsel %vm637, %v656, %v657
        %v659 = vrot.slane %v608, 5
        %v660 = vrot.slane %v659, 4
        %v661 = vrot.slane %v609, 5
        %v662 = vsel %vm637, %v660, %v661
        %v663 = vrot.slane %v661, 4
        %v664 = vrot.slane %v610, 5
        %v665 = vsel %vm637, %v663, %v664
        %v666 = vrot.slane %v611, 5
        %v667 = vrot.slane %v666, 4
        %v668 = vrot.slane %v612, 5
        %v669 = vsel %vm637, %v667, %v668
        %v670 = vrot.slane %v668, 4
        %v671 = vrot.slane %v613, 5
        %v672 = vsel %vm637, %v670, %v671
        %v673 = vrot.slane %v614, 5
        %v674 = vrot.slane %v673, 4
        %v675 = vrot.slane %v615, 5
        %v676 = vsel %vm637, %v674, %v675
        %v677 = vrot.slane %v675, 4
        %v678 = vrot.slane %v616, 5
        %v679 = vsel %vm637, %v677, %v678
        %680 = vrot.lane.b32.xlu0 %v641, 64
        %v681 = vpop.permute.xlu0 %680
        %682 = vrot.lane.b32.xlu0 %v644, 64
        %v683 = vpop.permute.xlu0 %682
        %684 = vrot.lane.b32.xlu0 %v648, 64
        %v685 = vpop.permute.xlu0 %684
        %686 = vrot.lane.b32.xlu0 %v651, 64
        %v687 = vpop.permute.xlu0 %686
        %688 = vrot.lane.b32.xlu0 %v655, 64
        %v689 = vpop.permute.xlu0 %688
        %690 = vrot.lane.b32.xlu0 %v658, 64
        %v691 = vpop.permute.xlu0 %690
        %692 = vrot.lane.b32.xlu0 %v662, 64
        %v693 = vpop.permute.xlu0 %692
        %694 = vrot.lane.b32.xlu0 %v665, 64
        %v695 = vpop.permute.xlu0 %694
        %696 = vrot.lane.b32.xlu0 %v669, 64
        %v697 = vpop.permute.xlu0 %696
        %698 = vrot.lane.b32.xlu0 %v672, 64
        %v699 = vpop.permute.xlu0 %698
        %700 = vrot.lane.b32.xlu0 %v676, 64
        %v701 = vpop.permute.xlu0 %700
        %702 = vrot.lane.b32.xlu0 %v679, 64
        %v703 = vpop.permute.xlu0 %702
        %vm716 = vcmask 781824
        %717 = vst.msk [vmem:[#allocation2] sm:$0xf] %vm716, %v681
        %718 = vst.msk [vmem:[#allocation2 + $0xc] sm:$0xf] %vm716, %v683
        %719 = vst.msk [vmem:[#allocation2 + $0x18] sm:$0xf] %vm716, %v685
        %720 = vst.msk [vmem:[#allocation2 + $0x24] sm:$0xf] %vm716, %v687
        %721 = vst.msk [vmem:[#allocation2 + $0x30] sm:$0xf] %vm716, %v689
        %722 = vst.msk [vmem:[#allocation2 + $0x3c] sm:$0xf] %vm716, %v691
        %723 = vst.msk [vmem:[#allocation2 + $0x48] sm:$0xf] %vm716, %v693
        %724 = vst.msk [vmem:[#allocation2 + $0x54] sm:$0xf] %vm716, %v695
        %725 = vst.msk [vmem:[#allocation2 + $0x60] sm:$0xf] %vm716, %v697
        %726 = vst.msk [vmem:[#allocation2 + $0x6c] sm:$0xf] %vm716, %v699
        %727 = vst.msk [vmem:[#allocation2 + $0x78] sm:$0xf] %vm716, %v701
        %728 = vst.msk [vmem:[#allocation2 + $0x84] sm:$0xf] %vm716, %v703
        %s729 = scalar_lea.vmem %s344, 12
        %v730 = vld [vmem:[%s729] sm:$0xf]
        %v731 = vld [vmem:[%s729 + $0x4] sm:$0xf]
        %v732 = vld [vmem:[%s729 + $0xc] sm:$0xf]
        %v733 = vld [vmem:[%s729 + $0x10] sm:$0xf]
        %v734 = vld [vmem:[%s729 + $0x18] sm:$0xf]
        %v735 = vld [vmem:[%s729 + $0x1c] sm:$0xf]
        %v736 = vld [vmem:[%s729 + $0x24] sm:$0xf]
        %v737 = vld [vmem:[%s729 + $0x28] sm:$0xf]
        %v738 = vld [vmem:[%s729 + $0x30] sm:$0xf]
        %v739 = vld [vmem:[%s729 + $0x34] sm:$0xf]
        %v740 = vld [vmem:[%s729 + $0x3c] sm:$0xf]
        %v741 = vld [vmem:[%s729 + $0x40] sm:$0xf]
        %754 = vrot.lane.b32.xlu0 %v730, 96
        %v755 = vpop.permute.xlu0 %754
        %756 = vrot.lane.b32.xlu0 %v731, 96
        %v757 = vpop.permute.xlu0 %756
        %758 = vrot.lane.b32.xlu0 %v732, 96
        %v759 = vpop.permute.xlu0 %758
        %760 = vrot.lane.b32.xlu0 %v733, 96
        %v761 = vpop.permute.xlu0 %760
        %762 = vrot.lane.b32.xlu0 %v734, 96
        %v763 = vpop.permute.xlu0 %762
        %764 = vrot.lane.b32.xlu0 %v735, 96
        %v765 = vpop.permute.xlu0 %764
        %766 = vrot.lane.b32.xlu0 %v736, 96
        %v767 = vpop.permute.xlu0 %766
        %768 = vrot.lane.b32.xlu0 %v737, 96
        %v769 = vpop.permute.xlu0 %768
        %770 = vrot.lane.b32.xlu0 %v738, 96
        %v771 = vpop.permute.xlu0 %770
        %772 = vrot.lane.b32.xlu0 %v739, 96
        %v773 = vpop.permute.xlu0 %772
        %774 = vrot.lane.b32.xlu0 %v740, 96
        %v775 = vpop.permute.xlu0 %774
        %776 = vrot.lane.b32.xlu0 %v741, 96
        %v777 = vpop.permute.xlu0 %776
        %vm790 = vcmask 1044224
        %791 = vst.msk [vmem:[#allocation2] sm:$0xf] %vm790, %v755
        %792 = vst.msk [vmem:[#allocation2 + $0xc] sm:$0xf] %vm790, %v757
        %793 = vst.msk [vmem:[#allocation2 + $0x18] sm:$0xf] %vm790, %v759
        %794 = vst.msk [vmem:[#allocation2 + $0x24] sm:$0xf] %vm790, %v761
        %795 = vst.msk [vmem:[#allocation2 + $0x30] sm:$0xf] %vm790, %v763
        %796 = vst.msk [vmem:[#allocation2 + $0x3c] sm:$0xf] %vm790, %v765
        %797 = vst.msk [vmem:[#allocation2 + $0x48] sm:$0xf] %vm790, %v767
        %798 = vst.msk [vmem:[#allocation2 + $0x54] sm:$0xf] %vm790, %v769
        %799 = vst.msk [vmem:[#allocation2 + $0x60] sm:$0xf] %vm790, %v771
        %800 = vst.msk [vmem:[#allocation2 + $0x6c] sm:$0xf] %vm790, %v773
        %801 = vst.msk [vmem:[#allocation2 + $0x78] sm:$0xf] %vm790, %v775
        %802 = vst.msk [vmem:[#allocation2 + $0x84] sm:$0xf] %vm790, %v777
        %v803 = vld [vmem:[%s729] sm:$0xf]
        %v804 = vld [vmem:[%s729 + $0x4] sm:$0xf]
        %v805 = vld [vmem:[%s729 + $0x8] sm:$0x1]
        %v806 = vld [vmem:[%s729 + $0xc] sm:$0xf]
        %v807 = vld [vmem:[%s729 + $0x10] sm:$0xf]
        %v808 = vld [vmem:[%s729 + $0x14] sm:$0x1]
        %v809 = vld [vmem:[%s729 + $0x18] sm:$0xf]
        %v810 = vld [vmem:[%s729 + $0x1c] sm:$0xf]
        %v811 = vld [vmem:[%s729 + $0x20] sm:$0x1]
        %v812 = vld [vmem:[%s729 + $0x24] sm:$0xf]
        %v813 = vld [vmem:[%s729 + $0x28] sm:$0xf]
        %v814 = vld [vmem:[%s729 + $0x2c] sm:$0x1]
        %v815 = vld [vmem:[%s729 + $0x30] sm:$0xf]
        %v816 = vld [vmem:[%s729 + $0x34] sm:$0xf]
        %v817 = vld [vmem:[%s729 + $0x38] sm:$0x1]
        %v818 = vld [vmem:[%s729 + $0x3c] sm:$0xf]
        %v819 = vld [vmem:[%s729 + $0x40] sm:$0xf]
        %v820 = vld [vmem:[%s729 + $0x44] sm:$0x1]
        %v822 = vshrl.u32 %v803, 16
        %v824 = vrot.slane %v822, 4
        %v825 = vshll.u32 %v803, 16
        %v827 = vrot.slane %v825, 5
        %v828 = vor.u32 %v824, %v827
        %v829 = vrot.slane %v828, 4
        %v831 = vshll.u32 %v804, 16
        %v833 = vrot.slane %v831, 5
        %v834 = vsel %vm405, %v829, %v833
        %v835 = vshrl.u32 %v804, 16
        %v837 = vrot.slane %v835, 4
        %v838 = vor.u32 %v837, %v833
        %v839 = vrot.slane %v838, 4
        %v841 = vshll.u32 %v805, 16
        %v843 = vrot.slane %v841, 5
        %v844 = vsel %vm405, %v839, %v843
        %v846 = vshrl.u32 %v806, 16
        %v848 = vrot.slane %v846, 4
        %v849 = vshll.u32 %v806, 16
        %v851 = vrot.slane %v849, 5
        %v852 = vor.u32 %v848, %v851
        %v853 = vrot.slane %v852, 4
        %v855 = vshll.u32 %v807, 16
        %v857 = vrot.slane %v855, 5
        %v858 = vsel %vm405, %v853, %v857
        %v859 = vshrl.u32 %v807, 16
        %v861 = vrot.slane %v859, 4
        %v862 = vor.u32 %v861, %v857
        %v863 = vrot.slane %v862, 4
        %v865 = vshll.u32 %v808, 16
        %v867 = vrot.slane %v865, 5
        %v868 = vsel %vm405, %v863, %v867
        %v870 = vshrl.u32 %v809, 16
        %v872 = vrot.slane %v870, 4
        %v873 = vshll.u32 %v809, 16
        %v875 = vrot.slane %v873, 5
        %v876 = vor.u32 %v872, %v875
        %v877 = vrot.slane %v876, 4
        %v879 = vshll.u32 %v810, 16
        %v881 = vrot.slane %v879, 5
        %v882 = vsel %vm405, %v877, %v881
        %v883 = vshrl.u32 %v810, 16
        %v885 = vrot.slane %v883, 4
        %v886 = vor.u32 %v885, %v881
        %v887 = vrot.slane %v886, 4
        %v889 = vshll.u32 %v811, 16
        %v891 = vrot.slane %v889, 5
        %v892 = vsel %vm405, %v887, %v891
        %v894 = vshrl.u32 %v812, 16
        %v896 = vrot.slane %v894, 4
        %v897 = vshll.u32 %v812, 16
        %v899 = vrot.slane %v897, 5
        %v900 = vor.u32 %v896, %v899
        %v901 = vrot.slane %v900, 4
        %v903 = vshll.u32 %v813, 16
        %v905 = vrot.slane %v903, 5
        %v906 = vsel %vm405, %v901, %v905
        %v907 = vshrl.u32 %v813, 16
        %v909 = vrot.slane %v907, 4
        %v910 = vor.u32 %v909, %v905
        %v911 = vrot.slane %v910, 4
        %v913 = vshll.u32 %v814, 16
        %v915 = vrot.slane %v913, 5
        %v916 = vsel %vm405, %v911, %v915
        %v918 = vshrl.u32 %v815, 16
        %v920 = vrot.slane %v918, 4
        %v921 = vshll.u32 %v815, 16
        %v923 = vrot.slane %v921, 5
        %v924 = vor.u32 %v920, %v923
        %v925 = vrot.slane %v924, 4
        %v927 = vshll.u32 %v816, 16
        %v929 = vrot.slane %v927, 5
        %v930 = vsel %vm405, %v925, %v929
        %v931 = vshrl.u32 %v816, 16
        %v933 = vrot.slane %v931, 4
        %v934 = vor.u32 %v933, %v929
        %v935 = vrot.slane %v934, 4
        %v937 = vshll.u32 %v817, 16
        %v939 = vrot.slane %v937, 5
        %v940 = vsel %vm405, %v935, %v939
        %v942 = vshrl.u32 %v818, 16
        %v944 = vrot.slane %v942, 4
        %v945 = vshll.u32 %v818, 16
        %v947 = vrot.slane %v945, 5
        %v948 = vor.u32 %v944, %v947
        %v949 = vrot.slane %v948, 4
        %v951 = vshll.u32 %v819, 16
        %v953 = vrot.slane %v951, 5
        %v954 = vsel %vm405, %v949, %v953
        %v955 = vshrl.u32 %v819, 16
        %v957 = vrot.slane %v955, 4
        %v958 = vor.u32 %v957, %v953
        %v959 = vrot.slane %v958, 4
        %v961 = vshll.u32 %v820, 16
        %v963 = vrot.slane %v961, 5
        %v964 = vsel %vm405, %v959, %v963
        %977 = vst.msk [vmem:[#allocation2 + $0x4] sm:$0xf] %vm372, %v834
        %978 = vst.msk [vmem:[#allocation2 + $0x10] sm:$0xf] %vm372, %v844
        %979 = vst.msk [vmem:[#allocation2 + $0x1c] sm:$0xf] %vm372, %v858
        %980 = vst.msk [vmem:[#allocation2 + $0x28] sm:$0xf] %vm372, %v868
        %981 = vst.msk [vmem:[#allocation2 + $0x34] sm:$0xf] %vm372, %v882
        %982 = vst.msk [vmem:[#allocation2 + $0x40] sm:$0xf] %vm372, %v892
        %983 = vst.msk [vmem:[#allocation2 + $0x4c] sm:$0xf] %vm372, %v906
        %984 = vst.msk [vmem:[#allocation2 + $0x58] sm:$0xf] %vm372, %v916
        %985 = vst.msk [vmem:[#allocation2 + $0x64] sm:$0xf] %vm372, %v930
        %986 = vst.msk [vmem:[#allocation2 + $0x70] sm:$0xf] %vm372, %v940
        %987 = vst.msk [vmem:[#allocation2 + $0x7c] sm:$0xf] %vm372, %v954
        %988 = vst.msk [vmem:[#allocation2 + $0x88] sm:$0xf] %vm372, %v964
        %v989 = vld [vmem:[%s729] sm:$0xe]
        %v990 = vld [vmem:[%s729 + $0x4] sm:$0xf]
        %v991 = vld [vmem:[%s729 + $0x8] sm:$0x1]
        %v992 = vld [vmem:[%s729 + $0xc] sm:$0xe]
        %v993 = vld [vmem:[%s729 + $0x10] sm:$0xf]
        %v994 = vld [vmem:[%s729 + $0x14] sm:$0x1]
        %v995 = vld [vmem:[%s729 + $0x18] sm:$0xe]
        %v996 = vld [vmem:[%s729 + $0x1c] sm:$0xf]
        %v997 = vld [vmem:[%s729 + $0x20] sm:$0x1]
        %v998 = vld [vmem:[%s729 + $0x24] sm:$0xe]
        %v999 = vld [vmem:[%s729 + $0x28] sm:$0xf]
        %v1000 = vld [vmem:[%s729 + $0x2c] sm:$0x1]
        %v1001 = vld [vmem:[%s729 + $0x30] sm:$0xe]
        %v1002 = vld [vmem:[%s729 + $0x34] sm:$0xf]
        %v1003 = vld [vmem:[%s729 + $0x38] sm:$0x1]
        %v1004 = vld [vmem:[%s729 + $0x3c] sm:$0xe]
        %v1005 = vld [vmem:[%s729 + $0x40] sm:$0xf]
        %v1006 = vld [vmem:[%s729 + $0x44] sm:$0x1]
        %v1025 = vrot.slane %v989, 5
        %v1026 = vrot.slane %v1025, 4
        %v1027 = vrot.slane %v990, 5
        %v1028 = vsel %vm637, %v1026, %v1027
        %v1029 = vrot.slane %v1027, 4
        %v1030 = vrot.slane %v991, 5
        %v1031 = vsel %vm637, %v1029, %v1030
        %v1032 = vrot.slane %v992, 5
        %v1033 = vrot.slane %v1032, 4
        %v1034 = vrot.slane %v993, 5
        %v1035 = vsel %vm637, %v1033, %v1034
        %v1036 = vrot.slane %v1034, 4
        %v1037 = vrot.slane %v994, 5
        %v1038 = vsel %vm637, %v1036, %v1037
        %v1039 = vrot.slane %v995, 5
        %v1040 = vrot.slane %v1039, 4
        %v1041 = vrot.slane %v996, 5
        %v1042 = vsel %vm637, %v1040, %v1041
        %v1043 = vrot.slane %v1041, 4
        %v1044 = vrot.slane %v997, 5
        %v1045 = vsel %vm637, %v1043, %v1044
        %v1046 = vrot.slane %v998, 5
        %v1047 = vrot.slane %v1046, 4
        %v1048 = vrot.slane %v999, 5
        %v1049 = vsel %vm637, %v1047, %v1048
        %v1050 = vrot.slane %v1048, 4
        %v1051 = vrot.slane %v1000, 5
        %v1052 = vsel %vm637, %v1050, %v1051
        %v1053 = vrot.slane %v1001, 5
        %v1054 = vrot.slane %v1053, 4
        %v1055 = vrot.slane %v1002, 5
        %v1056 = vsel %vm637, %v1054, %v1055
        %v1057 = vrot.slane %v1055, 4
        %v1058 = vrot.slane %v1003, 5
        %v1059 = vsel %vm637, %v1057, %v1058
        %v1060 = vrot.slane %v1004, 5
        %v1061 = vrot.slane %v1060, 4
        %v1062 = vrot.slane %v1005, 5
        %v1063 = vsel %vm637, %v1061, %v1062
        %v1064 = vrot.slane %v1062, 4
        %v1065 = vrot.slane %v1006, 5
        %v1066 = vsel %vm637, %v1064, %v1065
        %1067 = vrot.lane.b32.xlu0 %v1028, 32
        %v1068 = vpop.permute.xlu0 %1067
        %1069 = vrot.lane.b32.xlu0 %v1031, 32
        %v1070 = vpop.permute.xlu0 %1069
        %1071 = vrot.lane.b32.xlu0 %v1035, 32
        %v1072 = vpop.permute.xlu0 %1071
        %1073 = vrot.lane.b32.xlu0 %v1038, 32
        %v1074 = vpop.permute.xlu0 %1073
        %1075 = vrot.lane.b32.xlu0 %v1042, 32
        %v1076 = vpop.permute.xlu0 %1075
        %1077 = vrot.lane.b32.xlu0 %v1045, 32
        %v1078 = vpop.permute.xlu0 %1077
        %1079 = vrot.lane.b32.xlu0 %v1049, 32
        %v1080 = vpop.permute.xlu0 %1079
        %1081 = vrot.lane.b32.xlu0 %v1052, 32
        %v1082 = vpop.permute.xlu0 %1081
        %1083 = vrot.lane.b32.xlu0 %v1056, 32
        %v1084 = vpop.permute.xlu0 %1083
        %1085 = vrot.lane.b32.xlu0 %v1059, 32
        %v1086 = vpop.permute.xlu0 %1085
        %1087 = vrot.lane.b32.xlu0 %v1063, 32
        %v1088 = vpop.permute.xlu0 %1087
        %1089 = vrot.lane.b32.xlu0 %v1066, 32
        %v1090 = vpop.permute.xlu0 %1089
        %1103 = vst.msk [vmem:[#allocation2 + $0x4] sm:$0xf] %vm586, %v1068
        %1104 = vst.msk [vmem:[#allocation2 + $0x10] sm:$0xf] %vm586, %v1070
        %1105 = vst.msk [vmem:[#allocation2 + $0x1c] sm:$0xf] %vm586, %v1072
        %1106 = vst.msk [vmem:[#allocation2 + $0x28] sm:$0xf] %vm586, %v1074
        %1107 = vst.msk [vmem:[#allocation2 + $0x34] sm:$0xf] %vm586, %v1076
        %1108 = vst.msk [vmem:[#allocation2 + $0x40] sm:$0xf] %vm586, %v1078
        %1109 = vst.msk [vmem:[#allocation2 + $0x4c] sm:$0xf] %vm586, %v1080
        %1110 = vst.msk [vmem:[#allocation2 + $0x58] sm:$0xf] %vm586, %v1082
        %1111 = vst.msk [vmem:[#allocation2 + $0x64] sm:$0xf] %vm586, %v1084
        %1112 = vst.msk [vmem:[#allocation2 + $0x70] sm:$0xf] %vm586, %v1086
        %1113 = vst.msk [vmem:[#allocation2 + $0x7c] sm:$0xf] %vm586, %v1088
        %1114 = vst.msk [vmem:[#allocation2 + $0x88] sm:$0xf] %vm586, %v1090
        %s1115 = scalar_lea.vmem %s344, 24
        %v1116 = vld [vmem:[%s1115] sm:$0xf]
        %v1117 = vld [vmem:[%s1115 + $0x4] sm:$0xf]
        %v1118 = vld [vmem:[%s1115 + $0xc] sm:$0xf]
        %v1119 = vld [vmem:[%s1115 + $0x10] sm:$0xf]
        %v1120 = vld [vmem:[%s1115 + $0x18] sm:$0xf]
        %v1121 = vld [vmem:[%s1115 + $0x1c] sm:$0xf]
        %v1122 = vld [vmem:[%s1115 + $0x24] sm:$0xf]
        %v1123 = vld [vmem:[%s1115 + $0x28] sm:$0xf]
        %v1124 = vld [vmem:[%s1115 + $0x30] sm:$0xf]
        %v1125 = vld [vmem:[%s1115 + $0x34] sm:$0xf]
        %v1126 = vld [vmem:[%s1115 + $0x3c] sm:$0xf]
        %v1127 = vld [vmem:[%s1115 + $0x40] sm:$0xf]
        %1140 = vrot.lane.b32.xlu0 %v1116, 64
        %v1141 = vpop.permute.xlu0 %1140
        %1142 = vrot.lane.b32.xlu0 %v1117, 64
        %v1143 = vpop.permute.xlu0 %1142
        %1144 = vrot.lane.b32.xlu0 %v1118, 64
        %v1145 = vpop.permute.xlu0 %1144
        %1146 = vrot.lane.b32.xlu0 %v1119, 64
        %v1147 = vpop.permute.xlu0 %1146
        %1148 = vrot.lane.b32.xlu0 %v1120, 64
        %v1149 = vpop.permute.xlu0 %1148
        %1150 = vrot.lane.b32.xlu0 %v1121, 64
        %v1151 = vpop.permute.xlu0 %1150
        %1152 = vrot.lane.b32.xlu0 %v1122, 64
        %v1153 = vpop.permute.xlu0 %1152
        %1154 = vrot.lane.b32.xlu0 %v1123, 64
        %v1155 = vpop.permute.xlu0 %1154
        %1156 = vrot.lane.b32.xlu0 %v1124, 64
        %v1157 = vpop.permute.xlu0 %1156
        %1158 = vrot.lane.b32.xlu0 %v1125, 64
        %v1159 = vpop.permute.xlu0 %1158
        %1160 = vrot.lane.b32.xlu0 %v1126, 64
        %v1161 = vpop.permute.xlu0 %1160
        %1162 = vrot.lane.b32.xlu0 %v1127, 64
        %v1163 = vpop.permute.xlu0 %1162
        %1176 = vst.msk [vmem:[#allocation2 + $0x4] sm:$0xf] %vm716, %v1141
        %1177 = vst.msk [vmem:[#allocation2 + $0x10] sm:$0xf] %vm716, %v1143
        %1178 = vst.msk [vmem:[#allocation2 + $0x1c] sm:$0xf] %vm716, %v1145
        %1179 = vst.msk [vmem:[#allocation2 + $0x28] sm:$0xf] %vm716, %v1147
        %1180 = vst.msk [vmem:[#allocation2 + $0x34] sm:$0xf] %vm716, %v1149
        %1181 = vst.msk [vmem:[#allocation2 + $0x40] sm:$0xf] %vm716, %v1151
        %1182 = vst.msk [vmem:[#allocation2 + $0x4c] sm:$0xf] %vm716, %v1153
        %1183 = vst.msk [vmem:[#allocation2 + $0x58] sm:$0xf] %vm716, %v1155
        %1184 = vst.msk [vmem:[#allocation2 + $0x64] sm:$0xf] %vm716, %v1157
        %1185 = vst.msk [vmem:[#allocation2 + $0x70] sm:$0xf] %vm716, %v1159
        %1186 = vst.msk [vmem:[#allocation2 + $0x7c] sm:$0xf] %vm716, %v1161
        %1187 = vst.msk [vmem:[#allocation2 + $0x88] sm:$0xf] %vm716, %v1163
        %v1188 = vld [vmem:[%s1115] sm:$0xf]
        %v1189 = vld [vmem:[%s1115 + $0x4] sm:$0xf]
        %v1190 = vld [vmem:[%s1115 + $0x8] sm:$0x1]
        %v1191 = vld [vmem:[%s1115 + $0xc] sm:$0xf]
        %v1192 = vld [vmem:[%s1115 + $0x10] sm:$0xf]
        %v1193 = vld [vmem:[%s1115 + $0x14] sm:$0x1]
        %v1194 = vld [vmem:[%s1115 + $0x18] sm:$0xf]
        %v1195 = vld [vmem:[%s1115 + $0x1c] sm:$0xf]
        %v1196 = vld [vmem:[%s1115 + $0x20] sm:$0x1]
        %v1197 = vld [vmem:[%s1115 + $0x24] sm:$0xf]
        %v1198 = vld [vmem:[%s1115 + $0x28] sm:$0xf]
        %v1199 = vld [vmem:[%s1115 + $0x2c] sm:$0x1]
        %v1200 = vld [vmem:[%s1115 + $0x30] sm:$0xf]
        %v1201 = vld [vmem:[%s1115 + $0x34] sm:$0xf]
        %v1202 = vld [vmem:[%s1115 + $0x38] sm:$0x1]
        %v1203 = vld [vmem:[%s1115 + $0x3c] sm:$0xf]
        %v1204 = vld [vmem:[%s1115 + $0x40] sm:$0xf]
        %v1205 = vld [vmem:[%s1115 + $0x44] sm:$0x1]
        %v1207 = vshrl.u32 %v1188, 16
        %v1209 = vrot.slane %v1207, 4
        %v1210 = vshll.u32 %v1188, 16
        %v1212 = vrot.slane %v1210, 5
        %v1213 = vor.u32 %v1209, %v1212
        %v1214 = vrot.slane %v1213, 4
        %v1216 = vshll.u32 %v1189, 16
        %v1218 = vrot.slane %v1216, 5
        %v1219 = vsel %vm405, %v1214, %v1218
        %v1220 = vshrl.u32 %v1189, 16
        %v1222 = vrot.slane %v1220, 4
        %v1223 = vor.u32 %v1222, %v1218
        %v1224 = vrot.slane %v1223, 4
        %v1226 = vshll.u32 %v1190, 16
        %v1228 = vrot.slane %v1226, 5
        %v1229 = vsel %vm405, %v1224, %v1228
        %v1231 = vshrl.u32 %v1191, 16
        %v1233 = vrot.slane %v1231, 4
        %v1234 = vshll.u32 %v1191, 16
        %v1236 = vrot.slane %v1234, 5
        %v1237 = vor.u32 %v1233, %v1236
        %v1238 = vrot.slane %v1237, 4
        %v1240 = vshll.u32 %v1192, 16
        %v1242 = vrot.slane %v1240, 5
        %v1243 = vsel %vm405, %v1238, %v1242
        %v1244 = vshrl.u32 %v1192, 16
        %v1246 = vrot.slane %v1244, 4
        %v1247 = vor.u32 %v1246, %v1242
        %v1248 = vrot.slane %v1247, 4
        %v1250 = vshll.u32 %v1193, 16
        %v1252 = vrot.slane %v1250, 5
        %v1253 = vsel %vm405, %v1248, %v1252
        %v1255 = vshrl.u32 %v1194, 16
        %v1257 = vrot.slane %v1255, 4
        %v1258 = vshll.u32 %v1194, 16
        %v1260 = vrot.slane %v1258, 5
        %v1261 = vor.u32 %v1257, %v1260
        %v1262 = vrot.slane %v1261, 4
        %v1264 = vshll.u32 %v1195, 16
        %v1266 = vrot.slane %v1264, 5
        %v1267 = vsel %vm405, %v1262, %v1266
        %v1268 = vshrl.u32 %v1195, 16
        %v1270 = vrot.slane %v1268, 4
        %v1271 = vor.u32 %v1270, %v1266
        %v1272 = vrot.slane %v1271, 4
        %v1274 = vshll.u32 %v1196, 16
        %v1276 = vrot.slane %v1274, 5
        %v1277 = vsel %vm405, %v1272, %v1276
        %v1279 = vshrl.u32 %v1197, 16
        %v1281 = vrot.slane %v1279, 4
        %v1282 = vshll.u32 %v1197, 16
        %v1284 = vrot.slane %v1282, 5
        %v1285 = vor.u32 %v1281, %v1284
        %v1286 = vrot.slane %v1285, 4
        %v1288 = vshll.u32 %v1198, 16
        %v1290 = vrot.slane %v1288, 5
        %v1291 = vsel %vm405, %v1286, %v1290
        %v1292 = vshrl.u32 %v1198, 16
        %v1294 = vrot.slane %v1292, 4
        %v1295 = vor.u32 %v1294, %v1290
        %v1296 = vrot.slane %v1295, 4
        %v1298 = vshll.u32 %v1199, 16
        %v1300 = vrot.slane %v1298, 5
        %v1301 = vsel %vm405, %v1296, %v1300
        %v1303 = vshrl.u32 %v1200, 16
        %v1305 = vrot.slane %v1303, 4
        %v1306 = vshll.u32 %v1200, 16
        %v1308 = vrot.slane %v1306, 5
        %v1309 = vor.u32 %v1305, %v1308
        %v1310 = vrot.slane %v1309, 4
        %v1312 = vshll.u32 %v1201, 16
        %v1314 = vrot.slane %v1312, 5
        %v1315 = vsel %vm405, %v1310, %v1314
        %v1316 = vshrl.u32 %v1201, 16
        %v1318 = vrot.slane %v1316, 4
        %v1319 = vor.u32 %v1318, %v1314
        %v1320 = vrot.slane %v1319, 4
        %v1322 = vshll.u32 %v1202, 16
        %v1324 = vrot.slane %v1322, 5
        %v1325 = vsel %vm405, %v1320, %v1324
        %v1327 = vshrl.u32 %v1203, 16
        %v1329 = vrot.slane %v1327, 4
        %v1330 = vshll.u32 %v1203, 16
        %v1332 = vrot.slane %v1330, 5
        %v1333 = vor.u32 %v1329, %v1332
        %v1334 = vrot.slane %v1333, 4
        %v1336 = vshll.u32 %v1204, 16
        %v1338 = vrot.slane %v1336, 5
        %v1339 = vsel %vm405, %v1334, %v1338
        %v1340 = vshrl.u32 %v1204, 16
        %v1342 = vrot.slane %v1340, 4
        %v1343 = vor.u32 %v1342, %v1338
        %v1344 = vrot.slane %v1343, 4
        %v1346 = vshll.u32 %v1205, 16
        %v1348 = vrot.slane %v1346, 5
        %v1349 = vsel %vm405, %v1344, %v1348
        %1350 = vrot.lane.b32.xlu0 %v1219, 96
        %v1351 = vpop.permute.xlu0 %1350
        %1352 = vrot.lane.b32.xlu0 %v1229, 96
        %v1353 = vpop.permute.xlu0 %1352
        %1354 = vrot.lane.b32.xlu0 %v1243, 96
        %v1355 = vpop.permute.xlu0 %1354
        %1356 = vrot.lane.b32.xlu0 %v1253, 96
        %v1357 = vpop.permute.xlu0 %1356
        %1358 = vrot.lane.b32.xlu0 %v1267, 96
        %v1359 = vpop.permute.xlu0 %1358
        %1360 = vrot.lane.b32.xlu0 %v1277, 96
        %v1361 = vpop.permute.xlu0 %1360
        %1362 = vrot.lane.b32.xlu0 %v1291, 96
        %v1363 = vpop.permute.xlu0 %1362
        %1364 = vrot.lane.b32.xlu0 %v1301, 96
        %v1365 = vpop.permute.xlu0 %1364
        %1366 = vrot.lane.b32.xlu0 %v1315, 96
        %v1367 = vpop.permute.xlu0 %1366
        %1368 = vrot.lane.b32.xlu0 %v1325, 96
        %v1369 = vpop.permute.xlu0 %1368
        %1370 = vrot.lane.b32.xlu0 %v1339, 96
        %v1371 = vpop.permute.xlu0 %1370
        %1372 = vrot.lane.b32.xlu0 %v1349, 96
        %v1373 = vpop.permute.xlu0 %1372
        %1386 = vst.msk [vmem:[#allocation2 + $0x4] sm:$0xf] %vm790, %v1351
        %1387 = vst.msk [vmem:[#allocation2 + $0x10] sm:$0xf] %vm790, %v1353
        %1388 = vst.msk [vmem:[#allocation2 + $0x1c] sm:$0xf] %vm790, %v1355
        %1389 = vst.msk [vmem:[#allocation2 + $0x28] sm:$0xf] %vm790, %v1357
        %1390 = vst.msk [vmem:[#allocation2 + $0x34] sm:$0xf] %vm790, %v1359
        %1391 = vst.msk [vmem:[#allocation2 + $0x40] sm:$0xf] %vm790, %v1361
        %1392 = vst.msk [vmem:[#allocation2 + $0x4c] sm:$0xf] %vm790, %v1363
        %1393 = vst.msk [vmem:[#allocation2 + $0x58] sm:$0xf] %vm790, %v1365
        %1394 = vst.msk [vmem:[#allocation2 + $0x64] sm:$0xf] %vm790, %v1367
        %1395 = vst.msk [vmem:[#allocation2 + $0x70] sm:$0xf] %vm790, %v1369
        %1396 = vst.msk [vmem:[#allocation2 + $0x7c] sm:$0xf] %vm790, %v1371
        %1397 = vst.msk [vmem:[#allocation2 + $0x88] sm:$0xf] %vm790, %v1373
        %v1398 = vld [vmem:[%s1115] sm:$0xe]
        %v1399 = vld [vmem:[%s1115 + $0x4] sm:$0xf]
        %v1400 = vld [vmem:[%s1115 + $0x8] sm:$0x1]
        %v1401 = vld [vmem:[%s1115 + $0xc] sm:$0xe]
        %v1402 = vld [vmem:[%s1115 + $0x10] sm:$0xf]
        %v1403 = vld [vmem:[%s1115 + $0x14] sm:$0x1]
        %v1404 = vld [vmem:[%s1115 + $0x18] sm:$0xe]
        %v1405 = vld [vmem:[%s1115 + $0x1c] sm:$0xf]
        %v1406 = vld [vmem:[%s1115 + $0x20] sm:$0x1]
        %v1407 = vld [vmem:[%s1115 + $0x24] sm:$0xe]
        %v1408 = vld [vmem:[%s1115 + $0x28] sm:$0xf]
        %v1409 = vld [vmem:[%s1115 + $0x2c] sm:$0x1]
        %v1410 = vld [vmem:[%s1115 + $0x30] sm:$0xe]
        %v1411 = vld [vmem:[%s1115 + $0x34] sm:$0xf]
        %v1412 = vld [vmem:[%s1115 + $0x38] sm:$0x1]
        %v1413 = vld [vmem:[%s1115 + $0x3c] sm:$0xe]
        %v1414 = vld [vmem:[%s1115 + $0x40] sm:$0xf]
        %v1415 = vld [vmem:[%s1115 + $0x44] sm:$0x1]
        %v1434 = vrot.slane %v1398, 5
        %v1435 = vrot.slane %v1434, 4
        %v1436 = vrot.slane %v1399, 5
        %v1437 = vsel %vm637, %v1435, %v1436
        %v1438 = vrot.slane %v1436, 4
        %v1439 = vrot.slane %v1400, 5
        %v1440 = vsel %vm637, %v1438, %v1439
        %v1441 = vrot.slane %v1401, 5
        %v1442 = vrot.slane %v1441, 4
        %v1443 = vrot.slane %v1402, 5
        %v1444 = vsel %vm637, %v1442, %v1443
        %v1445 = vrot.slane %v1443, 4
        %v1446 = vrot.slane %v1403, 5
        %v1447 = vsel %vm637, %v1445, %v1446
        %v1448 = vrot.slane %v1404, 5
        %v1449 = vrot.slane %v1448, 4
        %v1450 = vrot.slane %v1405, 5
        %v1451 = vsel %vm637, %v1449, %v1450
        %v1452 = vrot.slane %v1450, 4
        %v1453 = vrot.slane %v1406, 5
        %v1454 = vsel %vm637, %v1452, %v1453
        %v1455 = vrot.slane %v1407, 5
        %v1456 = vrot.slane %v1455, 4
        %v1457 = vrot.slane %v1408, 5
        %v1458 = vsel %vm637, %v1456, %v1457
        %v1459 = vrot.slane %v1457, 4
        %v1460 = vrot.slane %v1409, 5
        %v1461 = vsel %vm637, %v1459, %v1460
        %v1462 = vrot.slane %v1410, 5
        %v1463 = vrot.slane %v1462, 4
        %v1464 = vrot.slane %v1411, 5
        %v1465 = vsel %vm637, %v1463, %v1464
        %v1466 = vrot.slane %v1464, 4
        %v1467 = vrot.slane %v1412, 5
        %v1468 = vsel %vm637, %v1466, %v1467
        %v1469 = vrot.slane %v1413, 5
        %v1470 = vrot.slane %v1469, 4
        %v1471 = vrot.slane %v1414, 5
        %v1472 = vsel %vm637, %v1470, %v1471
        %v1473 = vrot.slane %v1471, 4
        %v1474 = vrot.slane %v1415, 5
        %v1475 = vsel %vm637, %v1473, %v1474
        %1488 = vst.msk [vmem:[#allocation2 + $0x8] sm:$0xf] %vm372, %v1437
        %1489 = vst.msk [vmem:[#allocation2 + $0x14] sm:$0xf] %vm372, %v1440
        %1490 = vst.msk [vmem:[#allocation2 + $0x20] sm:$0xf] %vm372, %v1444
        %1491 = vst.msk [vmem:[#allocation2 + $0x2c] sm:$0xf] %vm372, %v1447
        %1492 = vst.msk [vmem:[#allocation2 + $0x38] sm:$0xf] %vm372, %v1451
        %1493 = vst.msk [vmem:[#allocation2 + $0x44] sm:$0xf] %vm372, %v1454
        %1494 = vst.msk [vmem:[#allocation2 + $0x50] sm:$0xf] %vm372, %v1458
        %1495 = vst.msk [vmem:[#allocation2 + $0x5c] sm:$0xf] %vm372, %v1461
        %1496 = vst.msk [vmem:[#allocation2 + $0x68] sm:$0xf] %vm372, %v1465
        %1497 = vst.msk [vmem:[#allocation2 + $0x74] sm:$0xf] %vm372, %v1468
        %1498 = vst.msk [vmem:[#allocation2 + $0x80] sm:$0xf] %vm372, %v1472
        %1499 = vst.msk [vmem:[#allocation2 + $0x8c] sm:$0xf] %vm372, %v1475
        %v1500 = vld [vmem:[#allocation2] sm:$0xff]
        %v1501 = vld [vmem:[#allocation2 + $0x8] sm:$0xf]
        %v1502 = vld [vmem:[#allocation2 + $0xc] sm:$0xff]
        %v1503 = vld [vmem:[#allocation2 + $0x14] sm:$0xf]
        %v1504 = vld [vmem:[#allocation2 + $0x18] sm:$0xff]
        %v1505 = vld [vmem:[#allocation2 + $0x20] sm:$0xf]
        %v1506 = vld [vmem:[#allocation2 + $0x24] sm:$0xff]
        %v1507 = vld [vmem:[#allocation2 + $0x2c] sm:$0xf]
        %v1508 = vld [vmem:[#allocation2 + $0x30] sm:$0xff]
        %v1509 = vld [vmem:[#allocation2 + $0x38] sm:$0xf]
        %v1510 = vld [vmem:[#allocation2 + $0x3c] sm:$0xff]
        %v1511 = vld [vmem:[#allocation2 + $0x44] sm:$0xf]
        %v1512 = vld [vmem:[#allocation2 + $0x48] sm:$0xff]
        %v1513 = vld [vmem:[#allocation2 + $0x50] sm:$0xf]
        %v1514 = vld [vmem:[#allocation2 + $0x54] sm:$0xff]
        %v1515 = vld [vmem:[#allocation2 + $0x5c] sm:$0xf]
        %v1516 = vld [vmem:[#allocation2 + $0x60] sm:$0xff]
        %v1517 = vld [vmem:[#allocation2 + $0x68] sm:$0xf]
        %v1518 = vld [vmem:[#allocation2 + $0x6c] sm:$0xff]
        %v1519 = vld [vmem:[#allocation2 + $0x74] sm:$0xf]
        %v1520 = vld [vmem:[#allocation2 + $0x78] sm:$0xff]
        %v1521 = vld [vmem:[#allocation2 + $0x80] sm:$0xf]
        %v1522 = vld [vmem:[#allocation2 + $0x84] sm:$0xff]
        %v1523 = vld [vmem:[#allocation2 + $0x8c] sm:$0xf]
        %v1524 = vld [vmem:[%s1] sm:$0xff]
        %v1525 = vld [vmem:[%s1 + $0x8] sm:$0xff]
        %v1526 = vld [vmem:[%s1 + $0x10] sm:$0xff]
        %v1527 = vld [vmem:[%s1 + $0x18] sm:$0xff]
        %v1528 = vld [vmem:[%s1 + $0x20] sm:$0xff]
        %v1529 = vld [vmem:[%s1 + $0x28] sm:$0xff]
        %v1530 = vld [vmem:[%s1 + $0x30] sm:$0xff]
        %v1531 = vld [vmem:[%s1 + $0x38] sm:$0xff]
        %v1532 = vld [vmem:[%s1 + $0x40] sm:$0xff]
        %v1533 = vld [vmem:[%s1 + $0x48] sm:$0xff]
        %v1534 = vld [vmem:[%s1 + $0x50] sm:$0xff]
        %v1535 = vld [vmem:[%s1 + $0x58] sm:$0xff]
        %v1536 = vld [vmem:[%s1 + $0x60] sm:$0xff]
        %v1537 = vld [vmem:[%s1 + $0x68] sm:$0xff]
        %v1538 = vld [vmem:[%s1 + $0x70] sm:$0xff]
        %v1539 = vld [vmem:[%s1 + $0x78] sm:$0xff]
        %v1540 = vld [vmem:[%s1 + $0x80] sm:$0xff]
        %v1541 = vld [vmem:[%s1 + $0x88] sm:$0xff]
        %v1542 = vld [vmem:[%s1 + $0x90] sm:$0xff]
        %v1543 = vld [vmem:[%s1 + $0x98] sm:$0xff]
        %v1544 = vld [vmem:[%s1 + $0xa0] sm:$0xff]
        %v1545 = vld [vmem:[%s1 + $0xa8] sm:$0xff]
        %v1546 = vld [vmem:[%s1 + $0xb0] sm:$0xff]
        %v1547 = vld [vmem:[%s1 + $0xb8] sm:$0xff]
        %v1548 = vld [vmem:[%s1 + $0xc0] sm:$0xff]
        %v1549 = vld [vmem:[%s1 + $0xc8] sm:$0xff]
        %v1550 = vld [vmem:[%s1 + $0xd0] sm:$0xff]
        %v1551 = vld [vmem:[%s1 + $0xd8] sm:$0xff]
        %v1552 = vld [vmem:[%s1 + $0xe0] sm:$0xff]
        %v1553 = vld [vmem:[%s1 + $0xe8] sm:$0xff]
        %v1554 = vld [vmem:[%s1 + $0xf0] sm:$0xff]
        %v1555 = vld [vmem:[%s1 + $0xf8] sm:$0xff]
        %v1556 = vld [vmem:[%s1 + $0x100] sm:$0xff]
        %v1557 = vld [vmem:[%s1 + $0x108] sm:$0xff]
        %v1558 = vld [vmem:[%s1 + $0x110] sm:$0xff]
        %v1559 = vld [vmem:[%s1 + $0x118] sm:$0xff]
        %v1560 = vld [vmem:[%s1 + $0x120] sm:$0xff]
        %v1561 = vld [vmem:[%s1 + $0x128] sm:$0xff]
        %v1562 = vld [vmem:[%s1 + $0x130] sm:$0xff]
        %v1563 = vld [vmem:[%s1 + $0x138] sm:$0xff]
        %v1564 = vld [vmem:[%s1 + $0x140] sm:$0xff]
        %v1565 = vld [vmem:[%s1 + $0x148] sm:$0xff]
        %v1566 = vld [vmem:[%s1 + $0x150] sm:$0xff]
        %v1567 = vld [vmem:[%s1 + $0x158] sm:$0xff]
        %v1568 = vld [vmem:[%s1 + $0x160] sm:$0xff]
        %v1569 = vld [vmem:[%s1 + $0x168] sm:$0xff]
        %v1570 = vld [vmem:[%s1 + $0x170] sm:$0xff]
        %v1571 = vld [vmem:[%s1 + $0x178] sm:$0xff]
        %v1572 = vld [vmem:[%s1 + $0x180] sm:$0xff]
        %v1573 = vld [vmem:[%s1 + $0x188] sm:$0xff]
        %v1574 = vld [vmem:[%s1 + $0x190] sm:$0xff]
        %v1575 = vld [vmem:[%s1 + $0x198] sm:$0xff]
        %v1576 = vld [vmem:[%s1 + $0x1a0] sm:$0xff]
        %v1577 = vld [vmem:[%s1 + $0x1a8] sm:$0xff]
        %v1578 = vld [vmem:[%s1 + $0x1b0] sm:$0xff]
        %v1579 = vld [vmem:[%s1 + $0x1b8] sm:$0xff]
        %v1580 = vld [vmem:[%s1 + $0x1c0] sm:$0xff]
        %v1581 = vld [vmem:[%s1 + $0x1c8] sm:$0xff]
        %v1582 = vld [vmem:[%s1 + $0x1d0] sm:$0xff]
        %v1583 = vld [vmem:[%s1 + $0x1d8] sm:$0xff]
        %v1584 = vld [vmem:[%s1 + $0x1e0] sm:$0xff]
        %v1585 = vld [vmem:[%s1 + $0x1e8] sm:$0xff]
        %v1586 = vld [vmem:[%s1 + $0x1f0] sm:$0xff]
        %v1587 = vld [vmem:[%s1 + $0x1f8] sm:$0xff]
        %v1588 = vld [vmem:[%s1 + $0x200] sm:$0xff]
        %v1589 = vld [vmem:[%s1 + $0x208] sm:$0xff]
        %v1590 = vld [vmem:[%s1 + $0x210] sm:$0xff]
        %v1591 = vld [vmem:[%s1 + $0x218] sm:$0xff]
        %v1592 = vld [vmem:[%s1 + $0x220] sm:$0xff]
        %v1593 = vld [vmem:[%s1 + $0x228] sm:$0xff]
        %v1594 = vld [vmem:[%s1 + $0x230] sm:$0xff]
        %v1595 = vld [vmem:[%s1 + $0x238] sm:$0xff]
        %v1596 = vld [vmem:[%s2] sm:$0xf]
        %v1598 = vlaneseq
        %v1599 = vshrl.u32 %v1598, 7
        %v1600 = vsub.s32 0, %v1599
        %v1601 = vrot.slane %v1596, %v1600
        %v1602 = vlaneseq
        %v1603 = vshrl.u32 %v1602, 7
        %v1604 = vsub.s32 1, %v1603
        %v1605 = vrot.slane %v1596, %v1604
        %v1606 = vlaneseq
        %v1607 = vshrl.u32 %v1606, 7
        %v1608 = vsub.s32 2, %v1607
        %v1609 = vrot.slane %v1596, %v1608
        %v1610 = vlaneseq
        %v1611 = vshrl.u32 %v1610, 7
        %v1612 = vsub.s32 3, %v1611
        %v1613 = vrot.slane %v1596, %v1612
        %v1642 = vunpack.c.l.b16 %v1500
        %v1643 = vunpack.c.h.b16 %v1500
        %v1644 = vunpack.c.l.b16 %v1501
        %v1645 = vunpack.c.l.b16 %v1502
        %v1646 = vunpack.c.h.b16 %v1502
        %v1647 = vunpack.c.l.b16 %v1503
        %v1648 = vunpack.c.l.b16 %v1504
        %v1649 = vunpack.c.h.b16 %v1504
        %v1650 = vunpack.c.l.b16 %v1505
        %v1651 = vunpack.c.l.b16 %v1506
        %v1652 = vunpack.c.h.b16 %v1506
        %v1653 = vunpack.c.l.b16 %v1507
        %v1654 = vunpack.c.l.b16 %v1508
        %v1655 = vunpack.c.h.b16 %v1508
        %v1656 = vunpack.c.l.b16 %v1509
        %v1657 = vunpack.c.l.b16 %v1510
        %v1658 = vunpack.c.h.b16 %v1510
        %v1659 = vunpack.c.l.b16 %v1511
        %v1660 = vunpack.c.l.b16 %v1512
        %v1661 = vunpack.c.h.b16 %v1512
        %v1662 = vunpack.c.l.b16 %v1513
        %v1663 = vunpack.c.l.b16 %v1514
        %v1664 = vunpack.c.h.b16 %v1514
        %v1665 = vunpack.c.l.b16 %v1515
        %v1666 = vunpack.c.l.b16 %v1516
        %v1667 = vunpack.c.h.b16 %v1516
        %v1668 = vunpack.c.l.b16 %v1517
        %v1669 = vunpack.c.l.b16 %v1518
        %v1670 = vunpack.c.h.b16 %v1518
        %v1671 = vunpack.c.l.b16 %v1519
        %v1672 = vunpack.c.l.b16 %v1520
        %v1673 = vunpack.c.h.b16 %v1520
        %v1674 = vunpack.c.l.b16 %v1521
        %v1675 = vunpack.c.l.b16 %v1522
        %v1676 = vunpack.c.h.b16 %v1522
        %v1677 = vunpack.c.l.b16 %v1523
        %v1678 = vpack.c.b16 %v1645, %v1642
        %v1679 = vpack.c.b16 %v1646, %v1643
        %v1680 = vpack.c.b16 %v1647, %v1644
        %v1681 = vpack.c.b16 %v1651, %v1648
        %v1682 = vpack.c.b16 %v1652, %v1649
        %v1683 = vpack.c.b16 %v1653, %v1650
        %v1684 = vpack.c.b16 %v1657, %v1654
        %v1685 = vpack.c.b16 %v1658, %v1655
        %v1686 = vpack.c.b16 %v1659, %v1656
        %v1687 = vpack.c.b16 %v1663, %v1660
        %v1688 = vpack.c.b16 %v1664, %v1661
        %v1689 = vpack.c.b16 %v1665, %v1662
        %v1690 = vpack.c.b16 %v1669, %v1666
        %v1691 = vpack.c.b16 %v1670, %v1667
        %v1692 = vpack.c.b16 %v1671, %v1668
        %v1693 = vpack.c.b16 %v1675, %v1672
        %v1694 = vpack.c.b16 %v1676, %v1673
        %v1695 = vpack.c.b16 %v1677, %v1674
        %v1780 = vunpack.c.l.b16 %v1524
        %v1781 = vunpack.c.h.b16 %v1524
        %v1782 = vunpack.c.l.b16 %v1525
        %v1783 = vunpack.c.h.b16 %v1525
        %v1784 = vunpack.c.l.b16 %v1526
        %v1785 = vunpack.c.h.b16 %v1526
        %v1786 = vunpack.c.l.b16 %v1527
        %v1787 = vunpack.c.h.b16 %v1527
        %v1788 = vunpack.c.l.b16 %v1528
        %v1789 = vunpack.c.h.b16 %v1528
        %v1790 = vunpack.c.l.b16 %v1529
        %v1791 = vunpack.c.h.b16 %v1529
        %v1792 = vunpack.c.l.b16 %v1530
        %v1793 = vunpack.c.h.b16 %v1530
        %v1794 = vunpack.c.l.b16 %v1531
        %v1795 = vunpack.c.h.b16 %v1531
        %v1796 = vunpack.c.l.b16 %v1532
        %v1797 = vunpack.c.h.b16 %v1532
        %v1798 = vunpack.c.l.b16 %v1533
        %v1799 = vunpack.c.h.b16 %v1533
        %v1800 = vunpack.c.l.b16 %v1534
        %v1801 = vunpack.c.h.b16 %v1534
        %v1802 = vunpack.c.l.b16 %v1535
        %v1803 = vunpack.c.h.b16 %v1535
        %v1804 = vunpack.c.l.b16 %v1536
        %v1805 = vunpack.c.h.b16 %v1536
        %v1806 = vunpack.c.l.b16 %v1537
        %v1807 = vunpack.c.h.b16 %v1537
        %v1808 = vunpack.c.l.b16 %v1538
        %v1809 = vunpack.c.h.b16 %v1538
        %v1810 = vunpack.c.l.b16 %v1539
        %v1811 = vunpack.c.h.b16 %v1539
        %v1812 = vunpack.c.l.b16 %v1540
        %v1813 = vunpack.c.h.b16 %v1540
        %v1814 = vunpack.c.l.b16 %v1541
        %v1815 = vunpack.c.h.b16 %v1541
        %v1816 = vunpack.c.l.b16 %v1542
        %v1817 = vunpack.c.h.b16 %v1542
        %v1818 = vunpack.c.l.b16 %v1543
        %v1819 = vunpack.c.h.b16 %v1543
        %v1820 = vunpack.c.l.b16 %v1544
        %v1821 = vunpack.c.h.b16 %v1544
        %v1822 = vunpack.c.l.b16 %v1545
        %v1823 = vunpack.c.h.b16 %v1545
        %v1824 = vunpack.c.l.b16 %v1546
        %v1825 = vunpack.c.h.b16 %v1546
        %v1826 = vunpack.c.l.b16 %v1547
        %v1827 = vunpack.c.h.b16 %v1547
        %v1828 = vunpack.c.l.b16 %v1548
        %v1829 = vunpack.c.h.b16 %v1548
        %v1830 = vunpack.c.l.b16 %v1549
        %v1831 = vunpack.c.h.b16 %v1549
        %v1832 = vunpack.c.l.b16 %v1550
        %v1833 = vunpack.c.h.b16 %v1550
        %v1834 = vunpack.c.l.b16 %v1551
        %v1835 = vunpack.c.h.b16 %v1551
        %v1836 = vunpack.c.l.b16 %v1552
        %v1837 = vunpack.c.h.b16 %v1552
        %v1838 = vunpack.c.l.b16 %v1553
        %v1839 = vunpack.c.h.b16 %v1553
        %v1840 = vunpack.c.l.b16 %v1554
        %v1841 = vunpack.c.h.b16 %v1554
        %v1842 = vunpack.c.l.b16 %v1555
        %v1843 = vunpack.c.h.b16 %v1555
        %v1844 = vunpack.c.l.b16 %v1556
        %v1845 = vunpack.c.h.b16 %v1556
        %v1846 = vunpack.c.l.b16 %v1557
        %v1847 = vunpack.c.h.b16 %v1557
        %v1848 = vunpack.c.l.b16 %v1558
        %v1849 = vunpack.c.h.b16 %v1558
        %v1850 = vunpack.c.l.b16 %v1559
        %v1851 = vunpack.c.h.b16 %v1559
        %v1852 = vunpack.c.l.b16 %v1560
        %v1853 = vunpack.c.h.b16 %v1560
        %v1854 = vunpack.c.l.b16 %v1561
        %v1855 = vunpack.c.h.b16 %v1561
        %v1856 = vunpack.c.l.b16 %v1562
        %v1857 = vunpack.c.h.b16 %v1562
        %v1858 = vunpack.c.l.b16 %v1563
        %v1859 = vunpack.c.h.b16 %v1563
        %v1860 = vunpack.c.l.b16 %v1564
        %v1861 = vunpack.c.h.b16 %v1564
        %v1862 = vunpack.c.l.b16 %v1565
        %v1863 = vunpack.c.h.b16 %v1565
        %v1864 = vunpack.c.l.b16 %v1566
        %v1865 = vunpack.c.h.b16 %v1566
        %v1866 = vunpack.c.l.b16 %v1567
        %v1867 = vunpack.c.h.b16 %v1567
        %v1868 = vunpack.c.l.b16 %v1568
        %v1869 = vunpack.c.h.b16 %v1568
        %v1870 = vunpack.c.l.b16 %v1569
        %v1871 = vunpack.c.h.b16 %v1569
        %v1872 = vunpack.c.l.b16 %v1570
        %v1873 = vunpack.c.h.b16 %v1570
        %v1874 = vunpack.c.l.b16 %v1571
        %v1875 = vunpack.c.h.b16 %v1571
        %v1876 = vunpack.c.l.b16 %v1572
        %v1877 = vunpack.c.h.b16 %v1572
        %v1878 = vunpack.c.l.b16 %v1573
        %v1879 = vunpack.c.h.b16 %v1573
        %v1880 = vunpack.c.l.b16 %v1574
        %v1881 = vunpack.c.h.b16 %v1574
        %v1882 = vunpack.c.l.b16 %v1575
        %v1883 = vunpack.c.h.b16 %v1575
        %v1884 = vunpack.c.l.b16 %v1576
        %v1885 = vunpack.c.h.b16 %v1576
        %v1886 = vunpack.c.l.b16 %v1577
        %v1887 = vunpack.c.h.b16 %v1577
        %v1888 = vunpack.c.l.b16 %v1578
        %v1889 = vunpack.c.h.b16 %v1578
        %v1890 = vunpack.c.l.b16 %v1579
        %v1891 = vunpack.c.h.b16 %v1579
        %v1892 = vunpack.c.l.b16 %v1580
        %v1893 = vunpack.c.h.b16 %v1580
        %v1894 = vunpack.c.l.b16 %v1581
        %v1895 = vunpack.c.h.b16 %v1581
        %v1896 = vunpack.c.l.b16 %v1582
        %v1897 = vunpack.c.h.b16 %v1582
        %v1898 = vunpack.c.l.b16 %v1583
        %v1899 = vunpack.c.h.b16 %v1583
        %v1900 = vunpack.c.l.b16 %v1584
        %v1901 = vunpack.c.h.b16 %v1584
        %v1902 = vunpack.c.l.b16 %v1585
        %v1903 = vunpack.c.h.b16 %v1585
        %v1904 = vunpack.c.l.b16 %v1586
        %v1905 = vunpack.c.h.b16 %v1586
        %v1906 = vunpack.c.l.b16 %v1587
        %v1907 = vunpack.c.h.b16 %v1587
        %v1908 = vunpack.c.l.b16 %v1588
        %v1909 = vunpack.c.h.b16 %v1588
        %v1910 = vunpack.c.l.b16 %v1589
        %v1911 = vunpack.c.h.b16 %v1589
        %v1912 = vunpack.c.l.b16 %v1590
        %v1913 = vunpack.c.h.b16 %v1590
        %v1914 = vunpack.c.l.b16 %v1591
        %v1915 = vunpack.c.h.b16 %v1591
        %v1916 = vunpack.c.l.b16 %v1592
        %v1917 = vunpack.c.h.b16 %v1592
        %v1918 = vunpack.c.l.b16 %v1593
        %v1919 = vunpack.c.h.b16 %v1593
        %v1920 = vunpack.c.l.b16 %v1594
        %v1921 = vunpack.c.h.b16 %v1594
        %v1922 = vunpack.c.l.b16 %v1595
        %v1923 = vunpack.c.h.b16 %v1595
        %v1924 = vpack.c.b16 %v1784, %v1780
        %v1925 = vpack.c.b16 %v1785, %v1781
        %v1926 = vpack.c.b16 %v1786, %v1782
        %v1927 = vpack.c.b16 %v1787, %v1783
        %v1928 = vpack.c.b16 %v1792, %v1788
        %v1929 = vpack.c.b16 %v1793, %v1789
        %v1930 = vpack.c.b16 %v1794, %v1790
        %v1931 = vpack.c.b16 %v1795, %v1791
        %v1932 = vpack.c.b16 %v1800, %v1796
        %v1933 = vpack.c.b16 %v1801, %v1797
        %v1934 = vpack.c.b16 %v1802, %v1798
        %v1935 = vpack.c.b16 %v1803, %v1799
        %v1936 = vpack.c.b16 %v1808, %v1804
        %v1937 = vpack.c.b16 %v1809, %v1805
        %v1938 = vpack.c.b16 %v1810, %v1806
        %v1939 = vpack.c.b16 %v1811, %v1807
        %v1940 = vpack.c.b16 %v1816, %v1812
        %v1941 = vpack.c.b16 %v1817, %v1813
        %v1942 = vpack.c.b16 %v1818, %v1814
        %v1943 = vpack.c.b16 %v1819, %v1815
        %v1944 = vpack.c.b16 %v1824, %v1820
        %v1945 = vpack.c.b16 %v1825, %v1821
        %v1946 = vpack.c.b16 %v1826, %v1822
        %v1947 = vpack.c.b16 %v1827, %v1823
        %v1948 = vpack.c.b16 %v1832, %v1828
        %v1949 = vpack.c.b16 %v1833, %v1829
        %v1950 = vpack.c.b16 %v1834, %v1830
        %v1951 = vpack.c.b16 %v1835, %v1831
        %v1952 = vpack.c.b16 %v1840, %v1836
        %v1953 = vpack.c.b16 %v1841, %v1837
        %v1954 = vpack.c.b16 %v1842, %v1838
        %v1955 = vpack.c.b16 %v1843, %v1839
        %v1956 = vpack.c.b16 %v1848, %v1844
        %v1957 = vpack.c.b16 %v1849, %v1845
        %v1958 = vpack.c.b16 %v1850, %v1846
        %v1959 = vpack.c.b16 %v1851, %v1847
        %v1960 = vpack.c.b16 %v1856, %v1852
        %v1961 = vpack.c.b16 %v1857, %v1853
        %v1962 = vpack.c.b16 %v1858, %v1854
        %v1963 = vpack.c.b16 %v1859, %v1855
        %v1964 = vpack.c.b16 %v1864, %v1860
        %v1965 = vpack.c.b16 %v1865, %v1861
        %v1966 = vpack.c.b16 %v1866, %v1862
        %v1967 = vpack.c.b16 %v1867, %v1863
        %v1968 = vpack.c.b16 %v1872, %v1868
        %v1969 = vpack.c.b16 %v1873, %v1869
        %v1970 = vpack.c.b16 %v1874, %v1870
        %v1971 = vpack.c.b16 %v1875, %v1871
        %v1972 = vpack.c.b16 %v1880, %v1876
        %v1973 = vpack.c.b16 %v1881, %v1877
        %v1974 = vpack.c.b16 %v1882, %v1878
        %v1975 = vpack.c.b16 %v1883, %v1879
        %v1976 = vpack.c.b16 %v1888, %v1884
        %v1977 = vpack.c.b16 %v1889, %v1885
        %v1978 = vpack.c.b16 %v1890, %v1886
        %v1979 = vpack.c.b16 %v1891, %v1887
        %v1980 = vpack.c.b16 %v1896, %v1892
        %v1981 = vpack.c.b16 %v1897, %v1893
        %v1982 = vpack.c.b16 %v1898, %v1894
        %v1983 = vpack.c.b16 %v1899, %v1895
        %v1984 = vpack.c.b16 %v1904, %v1900
        %v1985 = vpack.c.b16 %v1905, %v1901
        %v1986 = vpack.c.b16 %v1906, %v1902
        %v1987 = vpack.c.b16 %v1907, %v1903
        %v1988 = vpack.c.b16 %v1912, %v1908
        %v1989 = vpack.c.b16 %v1913, %v1909
        %v1990 = vpack.c.b16 %v1914, %v1910
        %v1991 = vpack.c.b16 %v1915, %v1911
        %v1992 = vpack.c.b16 %v1920, %v1916
        %v1993 = vpack.c.b16 %v1921, %v1917
        %v1994 = vpack.c.b16 %v1922, %v1918
        %v1995 = vpack.c.b16 %v1923, %v1919
        %vm2068 = vcmask 261120
        %v2070 = vsel %vm2068, %v1680, 0
        %v2073 = vsel %vm2068, %v1683, 0
        %v2076 = vsel %vm2068, %v1686, 0
        %v2079 = vsel %vm2068, %v1689, 0
        %v2082 = vsel %vm2068, %v1692, 0
        %v2085 = vsel %vm2068, %v1695, 0
        %2087 = vmatprep.subr.bf16.mxu0 %v1953
        %2088 = vmatpush1.bf16.msra.mxu0 %v1952
        %2089 = vmatprep.subr.bf16.mxu0 %v1949
        %2090 = vmatpush1.bf16.msra.mxu0 %v1948
        %2091 = vmatprep.subr.bf16.mxu0 %v1945
        %2092 = vmatpush1.bf16.msra.mxu0 %v1944
        %2093 = vmatprep.subr.bf16.mxu0 %v1941
        %2094 = vmatpush1.bf16.msra.mxu0 %v1940
        %2095 = vmatprep.subr.bf16.mxu0 %v1937
        %2096 = vmatpush1.bf16.msra.mxu0 %v1936
        %2097 = vmatprep.subr.bf16.mxu0 %v1933
        %2098 = vmatpush1.bf16.msra.mxu0 %v1932
        %2099 = vmatprep.subr.bf16.mxu0 %v1929
        %2100 = vmatpush1.bf16.msra.mxu0 %v1928
        %2101 = vmatprep.subr.bf16.mxu0 %v1925
        %2102 = vmatpush1.bf16.msra.mxu0 %v1924
        %2103 = vmatprep.subr.bf16.mxu0 %v1985
        %2104 = vmatpush2.bf16.msra.mxu0 %v1984
        %2105 = vmatprep.subr.bf16.mxu0 %v1981
        %2106 = vmatpush2.bf16.msra.mxu0 %v1980
        %2107 = vmatprep.subr.bf16.mxu0 %v1977
        %2108 = vmatpush2.bf16.msra.mxu0 %v1976
        %2109 = vmatprep.subr.bf16.mxu0 %v1973
        %2110 = vmatpush2.bf16.msra.mxu0 %v1972
        %2111 = vmatprep.subr.bf16.mxu0 %v1969
        %2112 = vmatpush2.bf16.msra.mxu0 %v1968
        %2113 = vmatprep.subr.bf16.mxu0 %v1965
        %2114 = vmatpush2.bf16.msra.mxu0 %v1964
        %2115 = vmatprep.subr.bf16.mxu0 %v1961
        %2116 = vmatpush2.bf16.msra.mxu0 %v1960
        %2117 = vmatprep.subr.bf16.mxu0 %v1957
        %2118 = vmatpush2.bf16.msra.mxu0 %v1956
        %2119 = vmatprep.mubr.bf16.mxu0 %v1679
        %2120 = vmatmul.mubr.bf16.gmra.mxu0 %v1678
        %v2121 = vpop.f32.mrf.mxu0
        %v2122 = vpop.f32.mrf.mxu0
        %v2123 = vpop.f32.mrf.mxu0
        %v2124 = vpop.f32.mrf.mxu0
        %2125 = vmatprep.mubr.bf16.mxu0 %v1682
        %2126 = vmatmul.mubr.bf16.gmra.mxu0 %v1681
        %v2127 = vpop.f32.mrf.mxu0
        %v2128 = vadd.f32 %v1601, %v2127
        %v2129 = vpop.f32.mrf.mxu0
        %v2130 = vadd.f32 %v1605, %v2129
        %v2131 = vpop.f32.mrf.mxu0
        %v2132 = vadd.f32 %v1601, %v2131
        %v2133 = vpop.f32.mrf.mxu0
        %v2134 = vadd.f32 %v1605, %v2133
        %2135 = vmatprep.mubr.bf16.mxu0 %v1685
        %2136 = vmatmul.mubr.bf16.gmra.mxu0 %v1684
        %v2137 = vpop.f32.mrf.mxu0
        %v2138 = vadd.f32 %v1601, %v2137
        %v2139 = vpop.f32.mrf.mxu0
        %v2140 = vadd.f32 %v1605, %v2139
        %v2141 = vpop.f32.mrf.mxu0
        %v2142 = vadd.f32 %v1601, %v2141
        %v2143 = vpop.f32.mrf.mxu0
        %v2144 = vadd.f32 %v1605, %v2143
        %2145 = vmatprep.mubr.bf16.mxu0 %v1688
        %2146 = vmatmul.mubr.bf16.gmra.mxu0 %v1687
        %v2147 = vpop.f32.mrf.mxu0
        %v2148 = vadd.f32 %v1601, %v2147
        %v2149 = vpop.f32.mrf.mxu0
        %v2150 = vadd.f32 %v1605, %v2149
        %v2151 = vpop.f32.mrf.mxu0
        %v2152 = vadd.f32 %v1601, %v2151
        %v2153 = vpop.f32.mrf.mxu0
        %v2154 = vadd.f32 %v1605, %v2153
        %2155 = vmatprep.mubr.bf16.mxu0 %v1691
        %2156 = vmatmul.mubr.bf16.gmra.mxu0 %v1690
        %v2157 = vpop.f32.mrf.mxu0
        %v2158 = vadd.f32 %v1601, %v2157
        %v2159 = vpop.f32.mrf.mxu0
        %v2160 = vadd.f32 %v1605, %v2159
        %v2161 = vpop.f32.mrf.mxu0
        %v2162 = vadd.f32 %v1601, %v2161
        %v2163 = vpop.f32.mrf.mxu0
        %v2164 = vadd.f32 %v1605, %v2163
        %2165 = vmatprep.mubr.bf16.mxu0 %v1694
        %2166 = vmatmul.mubr.bf16.gmra.mxu0 %v1693
        %v2167 = vpop.f32.mrf.mxu0
        %v2168 = vpop.f32.mrf.mxu0
        %v2169 = vpop.f32.mrf.mxu0
        %v2170 = vpop.f32.mrf.mxu0
        %2171 = vdwg.mxu0
        %2172 = vmatprep.subr.bf16.mxu0 0
        %2173 = vmatpush1.bf16.msra.mxu0 0
        %2174 = vmatprep.subr.bf16.mxu0 0
        %2175 = vmatpush1.bf16.msra.mxu0 0
        %2176 = vmatprep.subr.bf16.mxu0 0
        %2177 = vmatpush1.bf16.msra.mxu0 0
        %2178 = vmatprep.subr.bf16.mxu0 0
        %2179 = vmatpush1.bf16.msra.mxu0 0
        %2180 = vmatprep.subr.bf16.mxu0 0
        %2181 = vmatpush1.bf16.msra.mxu0 0
        %2182 = vmatprep.subr.bf16.mxu0 0
        %2183 = vmatpush1.bf16.msra.mxu0 0
        %2184 = vmatprep.subr.bf16.mxu0 %v1993
        %2185 = vmatpush1.bf16.msra.mxu0 %v1992
        %2186 = vmatprep.subr.bf16.mxu0 %v1989
        %2187 = vmatpush1.bf16.msra.mxu0 %v1988
        %2188 = vmatprep.subr.bf16.mxu0 0
        %2189 = vmatpush2.bf16.msra.mxu0 0
        %2190 = vmatprep.subr.bf16.mxu0 0
        %2191 = vmatpush2.bf16.msra.mxu0 0
        %2192 = vmatprep.subr.bf16.mxu0 0
        %2193 = vmatpush2.bf16.msra.mxu0 0
        %2194 = vmatprep.subr.bf16.mxu0 0
        %2195 = vmatpush2.bf16.msra.mxu0 0
        %2196 = vmatprep.subr.bf16.mxu0 0
        %2197 = vmatpush2.bf16.msra.mxu0 0
        %2198 = vmatprep.subr.bf16.mxu0 0
        %2199 = vmatpush2.bf16.msra.mxu0 0
        %2200 = vmatprep.subr.bf16.mxu0 0
        %2201 = vmatpush2.bf16.msra.mxu0 0
        %2202 = vmatprep.subr.bf16.mxu0 0
        %2203 = vmatpush2.bf16.msra.mxu0 0
        %2204 = vmatprep.mubr.bf16.mxu0 0
        %2205 = vmatmul.mubr.bf16.gmra.mxu0 %v2070
        %v2206 = vpop.f32.mrf.mxu0
        %v2207 = vpop.f32.mrf.mxu0
        %v2208 = vpop.f32.mrf.mxu0
        %v2209 = vpop.f32.mrf.mxu0
        %2210 = vmatprep.mubr.bf16.mxu0 0
        %2211 = vmatmul.mubr.bf16.gmra.mxu0 %v2073
        %v2212 = vpop.f32.mrf.mxu0
        %v2213 = vadd.f32 %v2128, %v2212
        %v2214 = vpop.f32.mrf.mxu0
        %v2215 = vadd.f32 %v2130, %v2214
        %v2216 = vpop.f32.mrf.mxu0
        %v2217 = vadd.f32 %v2132, %v2216
        %v2218 = vpop.f32.mrf.mxu0
        %v2219 = vadd.f32 %v2134, %v2218
        %2220 = vmatprep.mubr.bf16.mxu0 0
        %2221 = vmatmul.mubr.bf16.gmra.mxu0 %v2076
        %v2222 = vpop.f32.mrf.mxu0
        %v2223 = vadd.f32 %v2138, %v2222
        %v2224 = vpop.f32.mrf.mxu0
        %v2225 = vadd.f32 %v2140, %v2224
        %v2226 = vpop.f32.mrf.mxu0
        %v2227 = vadd.f32 %v2142, %v2226
        %v2228 = vpop.f32.mrf.mxu0
        %v2229 = vadd.f32 %v2144, %v2228
        %2230 = vmatprep.mubr.bf16.mxu0 0
        %2231 = vmatmul.mubr.bf16.gmra.mxu0 %v2079
        %v2232 = vpop.f32.mrf.mxu0
        %v2233 = vadd.f32 %v2148, %v2232
        %v2234 = vpop.f32.mrf.mxu0
        %v2235 = vadd.f32 %v2150, %v2234
        %v2236 = vpop.f32.mrf.mxu0
        %v2237 = vadd.f32 %v2152, %v2236
        %v2238 = vpop.f32.mrf.mxu0
        %v2239 = vadd.f32 %v2154, %v2238
        %2240 = vmatprep.mubr.bf16.mxu0 0
        %2241 = vmatmul.mubr.bf16.gmra.mxu0 %v2082
        %v2242 = vpop.f32.mrf.mxu0
        %v2243 = vadd.f32 %v2158, %v2242
        %v2244 = vpop.f32.mrf.mxu0
        %v2245 = vadd.f32 %v2160, %v2244
        %v2246 = vpop.f32.mrf.mxu0
        %v2247 = vadd.f32 %v2162, %v2246
        %v2248 = vpop.f32.mrf.mxu0
        %v2249 = vadd.f32 %v2164, %v2248
        %2250 = vmatprep.mubr.bf16.mxu0 0
        %2251 = vmatmul.mubr.bf16.gmra.mxu0 %v2085
        %v2252 = vpop.f32.mrf.mxu0
        %v2253 = vpop.f32.mrf.mxu0
        %v2254 = vpop.f32.mrf.mxu0
        %v2255 = vpop.f32.mrf.mxu0
        %2256 = vdwg.mxu0
        %2257 = vmatprep.subr.bf16.mxu0 %v1955
        %2258 = vmatpush1.bf16.msra.mxu0 %v1954
        %2259 = vmatprep.subr.bf16.mxu0 %v1951
        %2260 = vmatpush1.bf16.msra.mxu0 %v1950
        %2261 = vmatprep.subr.bf16.mxu0 %v1947
        %2262 = vmatpush1.bf16.msra.mxu0 %v1946
        %2263 = vmatprep.subr.bf16.mxu0 %v1943
        %2264 = vmatpush1.bf16.msra.mxu0 %v1942
        %2265 = vmatprep.subr.bf16.mxu0 %v1939
        %2266 = vmatpush1.bf16.msra.mxu0 %v1938
        %2267 = vmatprep.subr.bf16.mxu0 %v1935
        %2268 = vmatpush1.bf16.msra.mxu0 %v1934
        %2269 = vmatprep.subr.bf16.mxu0 %v1931
        %2270 = vmatpush1.bf16.msra.mxu0 %v1930
        %2271 = vmatprep.subr.bf16.mxu0 %v1927
        %2272 = vmatpush1.bf16.msra.mxu0 %v1926
        %2273 = vmatprep.subr.bf16.mxu0 %v1987
        %2274 = vmatpush2.bf16.msra.mxu0 %v1986
        %2275 = vmatprep.subr.bf16.mxu0 %v1983
        %2276 = vmatpush2.bf16.msra.mxu0 %v1982
        %2277 = vmatprep.subr.bf16.mxu0 %v1979
        %2278 = vmatpush2.bf16.msra.mxu0 %v1978
        %2279 = vmatprep.subr.bf16.mxu0 %v1975
        %2280 = vmatpush2.bf16.msra.mxu0 %v1974
        %2281 = vmatprep.subr.bf16.mxu0 %v1971
        %2282 = vmatpush2.bf16.msra.mxu0 %v1970
        %2283 = vmatprep.subr.bf16.mxu0 %v1967
        %2284 = vmatpush2.bf16.msra.mxu0 %v1966
        %2285 = vmatprep.subr.bf16.mxu0 %v1963
        %2286 = vmatpush2.bf16.msra.mxu0 %v1962
        %2287 = vmatprep.subr.bf16.mxu0 %v1959
        %2288 = vmatpush2.bf16.msra.mxu0 %v1958
        %2289 = vmatprep.mubr.bf16.mxu0 %v1679
        %2290 = vmatmul.mubr.bf16.gmra.mxu0 %v1678
        %v2291 = vpop.f32.mrf.mxu0
        %v2292 = vadd.f32 %v1609, %v2291
        %v2293 = vpop.f32.mrf.mxu0
        %v2294 = vadd.f32 %v1613, %v2293
        %v2295 = vpop.f32.mrf.mxu0
        %v2296 = vadd.f32 %v1609, %v2295
        %v2297 = vpop.f32.mrf.mxu0
        %v2298 = vadd.f32 %v1613, %v2297
        %2299 = vmatprep.mubr.bf16.mxu0 %v1682
        %2300 = vmatmul.mubr.bf16.gmra.mxu0 %v1681
        %v2301 = vpop.f32.mrf.mxu0
        %v2302 = vadd.f32 %v1609, %v2301
        %v2303 = vpop.f32.mrf.mxu0
        %v2304 = vadd.f32 %v1613, %v2303
        %v2305 = vpop.f32.mrf.mxu0
        %v2306 = vadd.f32 %v1609, %v2305
        %v2307 = vpop.f32.mrf.mxu0
        %v2308 = vadd.f32 %v1613, %v2307
        %2309 = vmatprep.mubr.bf16.mxu0 %v1685
        %2310 = vmatmul.mubr.bf16.gmra.mxu0 %v1684
        %v2311 = vpop.f32.mrf.mxu0
        %v2312 = vadd.f32 %v1609, %v2311
        %v2313 = vpop.f32.mrf.mxu0
        %v2314 = vadd.f32 %v1613, %v2313
        %v2315 = vpop.f32.mrf.mxu0
        %v2316 = vadd.f32 %v1609, %v2315
        %v2317 = vpop.f32.mrf.mxu0
        %v2318 = vadd.f32 %v1613, %v2317
        %2319 = vmatprep.mubr.bf16.mxu0 %v1688
        %2320 = vmatmul.mubr.bf16.gmra.mxu0 %v1687
        %v2321 = vpop.f32.mrf.mxu0
        %v2322 = vadd.f32 %v1609, %v2321
        %v2323 = vpop.f32.mrf.mxu0
        %v2324 = vadd.f32 %v1613, %v2323
        %v2325 = vpop.f32.mrf.mxu0
        %v2326 = vadd.f32 %v1609, %v2325
        %v2327 = vpop.f32.mrf.mxu0
        %v2328 = vadd.f32 %v1613, %v2327
        %2329 = vmatprep.mubr.bf16.mxu0 %v1691
        %2330 = vmatmul.mubr.bf16.gmra.mxu0 %v1690
        %v2331 = vpop.f32.mrf.mxu0
        %v2332 = vadd.f32 %v1609, %v2331
        %v2333 = vpop.f32.mrf.mxu0
        %v2334 = vadd.f32 %v1613, %v2333
        %v2335 = vpop.f32.mrf.mxu0
        %v2336 = vadd.f32 %v1609, %v2335
        %v2337 = vpop.f32.mrf.mxu0
        %v2338 = vadd.f32 %v1613, %v2337
        %2339 = vmatprep.mubr.bf16.mxu0 %v1694
        %2340 = vmatmul.mubr.bf16.gmra.mxu0 %v1693
        %v2341 = vpop.f32.mrf.mxu0
        %v2342 = vadd.f32 %v1609, %v2341
        %v2343 = vpop.f32.mrf.mxu0
        %v2344 = vadd.f32 %v1613, %v2343
        %v2345 = vpop.f32.mrf.mxu0
        %v2346 = vadd.f32 %v1609, %v2345
        %v2347 = vpop.f32.mrf.mxu0
        %v2348 = vadd.f32 %v1613, %v2347
        %2349 = vdwg.mxu0
        %2350 = vmatprep.subr.bf16.mxu0 0
        %2351 = vmatpush1.bf16.msra.mxu0 0
        %2352 = vmatprep.subr.bf16.mxu0 0
        %2353 = vmatpush1.bf16.msra.mxu0 0
        %2354 = vmatprep.subr.bf16.mxu0 0
        %2355 = vmatpush1.bf16.msra.mxu0 0
        %2356 = vmatprep.subr.bf16.mxu0 0
        %2357 = vmatpush1.bf16.msra.mxu0 0
        %2358 = vmatprep.subr.bf16.mxu0 0
        %2359 = vmatpush1.bf16.msra.mxu0 0
        %2360 = vmatprep.subr.bf16.mxu0 0
        %2361 = vmatpush1.bf16.msra.mxu0 0
        %2362 = vmatprep.subr.bf16.mxu0 %v1995
        %2363 = vmatpush1.bf16.msra.mxu0 %v1994
        %2364 = vmatprep.subr.bf16.mxu0 %v1991
        %2365 = vmatpush1.bf16.msra.mxu0 %v1990
        %2366 = vmatprep.subr.bf16.mxu0 0
        %2367 = vmatpush2.bf16.msra.mxu0 0
        %2368 = vmatprep.subr.bf16.mxu0 0
        %2369 = vmatpush2.bf16.msra.mxu0 0
        %2370 = vmatprep.subr.bf16.mxu0 0
        %2371 = vmatpush2.bf16.msra.mxu0 0
        %2372 = vmatprep.subr.bf16.mxu0 0
        %2373 = vmatpush2.bf16.msra.mxu0 0
        %2374 = vmatprep.subr.bf16.mxu0 0
        %2375 = vmatpush2.bf16.msra.mxu0 0
        %2376 = vmatprep.subr.bf16.mxu0 0
        %2377 = vmatpush2.bf16.msra.mxu0 0
        %2378 = vmatprep.subr.bf16.mxu0 0
        %2379 = vmatpush2.bf16.msra.mxu0 0
        %2380 = vmatprep.subr.bf16.mxu0 0
        %2381 = vmatpush2.bf16.msra.mxu0 0
        %2382 = vmatprep.mubr.bf16.mxu0 0
        %2383 = vmatmul.mubr.bf16.gmra.mxu0 %v2070
        %v2384 = vpop.f32.mrf.mxu0
        %v2385 = vadd.f32 %v2292, %v2384
        %v2386 = vpop.f32.mrf.mxu0
        %v2387 = vadd.f32 %v2294, %v2386
        %v2388 = vpop.f32.mrf.mxu0
        %v2389 = vadd.f32 %v2296, %v2388
        %v2390 = vpop.f32.mrf.mxu0
        %v2391 = vadd.f32 %v2298, %v2390
        %2392 = vmatprep.mubr.bf16.mxu0 0
        %2393 = vmatmul.mubr.bf16.gmra.mxu0 %v2073
        %v2394 = vpop.f32.mrf.mxu0
        %v2395 = vadd.f32 %v2302, %v2394
        %v2396 = vpop.f32.mrf.mxu0
        %v2397 = vadd.f32 %v2304, %v2396
        %v2398 = vpop.f32.mrf.mxu0
        %v2399 = vadd.f32 %v2306, %v2398
        %v2400 = vpop.f32.mrf.mxu0
        %v2401 = vadd.f32 %v2308, %v2400
        %2402 = vmatprep.mubr.bf16.mxu0 0
        %2403 = vmatmul.mubr.bf16.gmra.mxu0 %v2076
        %v2404 = vpop.f32.mrf.mxu0
        %v2405 = vadd.f32 %v2312, %v2404
        %v2406 = vpop.f32.mrf.mxu0
        %v2407 = vadd.f32 %v2314, %v2406
        %v2408 = vpop.f32.mrf.mxu0
        %v2409 = vadd.f32 %v2316, %v2408
        %v2410 = vpop.f32.mrf.mxu0
        %v2411 = vadd.f32 %v2318, %v2410
        %2412 = vmatprep.mubr.bf16.mxu0 0
        %2413 = vmatmul.mubr.bf16.gmra.mxu0 %v2079
        %v2414 = vpop.f32.mrf.mxu0
        %v2415 = vadd.f32 %v2322, %v2414
        %v2416 = vpop.f32.mrf.mxu0
        %v2417 = vadd.f32 %v2324, %v2416
        %v2418 = vpop.f32.mrf.mxu0
        %v2419 = vadd.f32 %v2326, %v2418
        %v2420 = vpop.f32.mrf.mxu0
        %v2421 = vadd.f32 %v2328, %v2420
        %2422 = vmatprep.mubr.bf16.mxu0 0
        %2423 = vmatmul.mubr.bf16.gmra.mxu0 %v2082
        %v2424 = vpop.f32.mrf.mxu0
        %v2425 = vadd.f32 %v2332, %v2424
        %v2426 = vpop.f32.mrf.mxu0
        %v2427 = vadd.f32 %v2334, %v2426
        %v2428 = vpop.f32.mrf.mxu0
        %v2429 = vadd.f32 %v2336, %v2428
        %v2430 = vpop.f32.mrf.mxu0
        %v2431 = vadd.f32 %v2338, %v2430
        %2432 = vmatprep.mubr.bf16.mxu0 0
        %2433 = vmatmul.mubr.bf16.gmra.mxu0 %v2085
        %v2434 = vpop.f32.mrf.mxu0
        %v2435 = vadd.f32 %v2342, %v2434
        %v2436 = vpop.f32.mrf.mxu0
        %v2437 = vadd.f32 %v2344, %v2436
        %v2438 = vpop.f32.mrf.mxu0
        %v2439 = vadd.f32 %v2346, %v2438
        %v2440 = vpop.f32.mrf.mxu0
        %v2441 = vadd.f32 %v2348, %v2440
        %2442 = vdwg.mxu0
        %v2443 = vmax.f32 %v2385, 0.0
        %v2444 = vmax.f32 %v2387, 0.0
        %v2445 = vmax.f32 %v2389, 0.0
        %v2446 = vmax.f32 %v2391, 0.0
        %v2447 = vmax.f32 %v2213, 0.0
        %v2448 = vmax.f32 %v2215, 0.0
        %v2449 = vmax.f32 %v2395, 0.0
        %v2450 = vmax.f32 %v2397, 0.0
        %v2451 = vmax.f32 %v2217, 0.0
        %v2452 = vmax.f32 %v2219, 0.0
        %v2453 = vmax.f32 %v2399, 0.0
        %v2454 = vmax.f32 %v2401, 0.0
        %v2455 = vmax.f32 %v2223, 0.0
        %v2456 = vmax.f32 %v2225, 0.0
        %v2457 = vmax.f32 %v2405, 0.0
        %v2458 = vmax.f32 %v2407, 0.0
        %v2459 = vmax.f32 %v2227, 0.0
        %v2460 = vmax.f32 %v2229, 0.0
        %v2461 = vmax.f32 %v2409, 0.0
        %v2462 = vmax.f32 %v2411, 0.0
        %v2463 = vmax.f32 %v2233, 0.0
        %v2464 = vmax.f32 %v2235, 0.0
        %v2465 = vmax.f32 %v2415, 0.0
        %v2466 = vmax.f32 %v2417, 0.0
        %v2467 = vmax.f32 %v2237, 0.0
        %v2468 = vmax.f32 %v2239, 0.0
        %v2469 = vmax.f32 %v2419, 0.0
        %v2470 = vmax.f32 %v2421, 0.0
        %v2471 = vmax.f32 %v2243, 0.0
        %v2472 = vmax.f32 %v2245, 0.0
        %v2473 = vmax.f32 %v2425, 0.0
        %v2474 = vmax.f32 %v2427, 0.0
        %v2475 = vmax.f32 %v2247, 0.0
        %v2476 = vmax.f32 %v2249, 0.0
        %v2477 = vmax.f32 %v2429, 0.0
        %v2478 = vmax.f32 %v2431, 0.0
        %v2479 = vmax.f32 %v2435, 0.0
        %v2480 = vmax.f32 %v2437, 0.0
        %v2481 = vmax.f32 %v2439, 0.0
        %v2482 = vmax.f32 %v2441, 0.0
        %v2483 = vpack.c.bf16 %v2451, %v2447
        %v2484 = vpack.c.bf16 %v2452, %v2448
        %v2485 = vpack.c.bf16 %v2459, %v2455
        %v2486 = vpack.c.bf16 %v2460, %v2456
        %v2487 = vpack.c.bf16 %v2467, %v2463
        %v2488 = vpack.c.bf16 %v2468, %v2464
        %v2489 = vpack.c.bf16 %v2475, %v2471
        %v2490 = vpack.c.bf16 %v2476, %v2472
        %v2491 = vld [vmem:[%s3] sm:$0xff]
        %v2492 = vld [vmem:[%s3 + $0x8] sm:$0xff]
        %v2493 = vld [vmem:[%s3 + $0x10] sm:$0xf]
        %v2494 = vld [vmem:[%s3 + $0x14] sm:$0xff]
        %v2495 = vld [vmem:[%s3 + $0x1c] sm:$0xff]
        %v2496 = vld [vmem:[%s3 + $0x24] sm:$0xf]
        %v2497 = vld [vmem:[%s3 + $0x28] sm:$0xff]
        %v2498 = vld [vmem:[%s3 + $0x30] sm:$0xff]
        %v2499 = vld [vmem:[%s3 + $0x38] sm:$0xf]
        %v2500 = vld [vmem:[%s3 + $0x3c] sm:$0xff]
        %v2501 = vld [vmem:[%s3 + $0x44] sm:$0xff]
        %v2502 = vld [vmem:[%s3 + $0x4c] sm:$0xf]
        %v2503 = vld [vmem:[%s3 + $0x50] sm:$0xff]
        %v2504 = vld [vmem:[%s3 + $0x58] sm:$0xff]
        %v2505 = vld [vmem:[%s3 + $0x60] sm:$0xf]
        %v2506 = vld [vmem:[%s3 + $0x64] sm:$0xff]
        %v2507 = vld [vmem:[%s3 + $0x6c] sm:$0xff]
        %v2508 = vld [vmem:[%s3 + $0x74] sm:$0xf]
        %v2509 = vld [vmem:[%s3 + $0x78] sm:$0xff]
        %v2510 = vld [vmem:[%s3 + $0x80] sm:$0xff]
        %v2511 = vld [vmem:[%s3 + $0x88] sm:$0xf]
        %v2512 = vld [vmem:[%s3 + $0x8c] sm:$0xff]
        %v2513 = vld [vmem:[%s3 + $0x94] sm:$0xff]
        %v2514 = vld [vmem:[%s3 + $0x9c] sm:$0xf]
        %v2515 = vld [vmem:[%s3 + $0xa0] sm:$0xff]
        %v2516 = vld [vmem:[%s3 + $0xa8] sm:$0xff]
        %v2517 = vld [vmem:[%s3 + $0xb0] sm:$0xf]
        %v2518 = vld [vmem:[%s3 + $0xb4] sm:$0xff]
        %v2519 = vld [vmem:[%s3 + $0xbc] sm:$0xff]
        %v2520 = vld [vmem:[%s3 + $0xc4] sm:$0xf]
        %v2521 = vld [vmem:[%s3 + $0xc8] sm:$0xff]
        %v2522 = vld [vmem:[%s3 + $0xd0] sm:$0xff]
        %v2523 = vld [vmem:[%s3 + $0xd8] sm:$0xf]
        %v2524 = vld [vmem:[%s3 + $0xdc] sm:$0xff]
        %v2525 = vld [vmem:[%s3 + $0xe4] sm:$0xff]
        %v2526 = vld [vmem:[%s3 + $0xec] sm:$0xf]
        %v2527 = vld [vmem:[%s3 + $0xf0] sm:$0xff]
        %v2528 = vld [vmem:[%s3 + $0xf8] sm:$0xff]
        %v2529 = vld [vmem:[%s3 + $0x100] sm:$0xf]
        %v2530 = vld [vmem:[%s3 + $0x104] sm:$0xff]
        %v2531 = vld [vmem:[%s3 + $0x10c] sm:$0xff]
        %v2532 = vld [vmem:[%s3 + $0x114] sm:$0xf]
        %v2533 = vld [vmem:[%s3 + $0x118] sm:$0xff]
        %v2534 = vld [vmem:[%s3 + $0x120] sm:$0xff]
        %v2535 = vld [vmem:[%s3 + $0x128] sm:$0xf]
        %v2536 = vld [vmem:[%s3 + $0x12c] sm:$0xff]
        %v2537 = vld [vmem:[%s3 + $0x134] sm:$0xff]
        %v2538 = vld [vmem:[%s3 + $0x13c] sm:$0xf]
        %v2539 = vld [vmem:[%s3 + $0x140] sm:$0xff]
        %v2540 = vld [vmem:[%s3 + $0x148] sm:$0xff]
        %v2541 = vld [vmem:[%s3 + $0x150] sm:$0xf]
        %v2542 = vld [vmem:[%s3 + $0x154] sm:$0xff]
        %v2543 = vld [vmem:[%s3 + $0x15c] sm:$0xff]
        %v2544 = vld [vmem:[%s3 + $0x164] sm:$0xf]
        %v2545 = vld [vmem:[%s3 + $0x168] sm:$0xff]
        %v2546 = vld [vmem:[%s3 + $0x170] sm:$0xff]
        %v2547 = vld [vmem:[%s3 + $0x178] sm:$0xf]
        %v2548 = vld [vmem:[%s3 + $0x17c] sm:$0xff]
        %v2549 = vld [vmem:[%s3 + $0x184] sm:$0xff]
        %v2550 = vld [vmem:[%s3 + $0x18c] sm:$0xf]
        %v2551 = vld [vmem:[%s3 + $0x190] sm:$0xff]
        %v2552 = vld [vmem:[%s3 + $0x198] sm:$0xff]
        %v2553 = vld [vmem:[%s3 + $0x1a0] sm:$0xf]
        %v2554 = vld [vmem:[%s3 + $0x1a4] sm:$0xff]
        %v2555 = vld [vmem:[%s3 + $0x1ac] sm:$0xff]
        %v2556 = vld [vmem:[%s3 + $0x1b4] sm:$0xf]
        %v2557 = vld [vmem:[%s3 + $0x1b8] sm:$0xff]
        %v2558 = vld [vmem:[%s3 + $0x1c0] sm:$0xff]
        %v2559 = vld [vmem:[%s3 + $0x1c8] sm:$0xf]
        %v2560 = vld [vmem:[%s3 + $0x1cc] sm:$0xff]
        %v2561 = vld [vmem:[%s3 + $0x1d4] sm:$0xff]
        %v2562 = vld [vmem:[%s3 + $0x1dc] sm:$0xf]
        %v2563 = vld [vmem:[%s3 + $0x1e0] sm:$0xff]
        %v2564 = vld [vmem:[%s3 + $0x1e8] sm:$0xff]
        %v2565 = vld [vmem:[%s3 + $0x1f0] sm:$0xf]
        %v2566 = vld [vmem:[%s3 + $0x1f4] sm:$0xff]
        %v2567 = vld [vmem:[%s3 + $0x1fc] sm:$0xff]
        %v2568 = vld [vmem:[%s3 + $0x204] sm:$0xf]
        %v2569 = vld [vmem:[%s3 + $0x208] sm:$0xff]
        %v2570 = vld [vmem:[%s3 + $0x210] sm:$0xff]
        %v2571 = vld [vmem:[%s3 + $0x218] sm:$0xf]
        %v2572 = vld [vmem:[%s3 + $0x21c] sm:$0xff]
        %v2573 = vld [vmem:[%s3 + $0x224] sm:$0xff]
        %v2574 = vld [vmem:[%s3 + $0x22c] sm:$0xf]
        %v2575 = vld [vmem:[%s3 + $0x230] sm:$0xff]
        %v2576 = vld [vmem:[%s3 + $0x238] sm:$0xff]
        %v2577 = vld [vmem:[%s3 + $0x240] sm:$0xf]
        %v2578 = vld [vmem:[%s3 + $0x244] sm:$0xff]
        %v2579 = vld [vmem:[%s3 + $0x24c] sm:$0xff]
        %v2580 = vld [vmem:[%s3 + $0x254] sm:$0xf]
        %v2581 = vld [vmem:[%s3 + $0x258] sm:$0xff]
        %v2582 = vld [vmem:[%s3 + $0x260] sm:$0xff]
        %v2583 = vld [vmem:[%s3 + $0x268] sm:$0xf]
        %v2584 = vld [vmem:[%s3 + $0x26c] sm:$0xff]
        %v2585 = vld [vmem:[%s3 + $0x274] sm:$0xff]
        %v2586 = vld [vmem:[%s3 + $0x27c] sm:$0xf]
        %v2587 = vld [vmem:[%s4] sm:$0x1f]
        %v2589 = vlaneseq
        %v2590 = vshrl.u32 %v2589, 7
        %v2591 = vsub.s32 0, %v2590
        %v2592 = vrot.slane %v2587, %v2591
        %v2593 = vlaneseq
        %v2594 = vshrl.u32 %v2593, 7
        %v2595 = vsub.s32 1, %v2594
        %v2596 = vrot.slane %v2587, %v2595
        %v2597 = vlaneseq
        %v2598 = vshrl.u32 %v2597, 7
        %v2599 = vsub.s32 2, %v2598
        %v2600 = vrot.slane %v2587, %v2599
        %v2601 = vlaneseq
        %v2602 = vshrl.u32 %v2601, 7
        %v2603 = vsub.s32 3, %v2602
        %v2604 = vrot.slane %v2587, %v2603
        %v2605 = vlaneseq
        %v2606 = vshrl.u32 %v2605, 7
        %v2607 = vsub.s32 4, %v2606
        %v2608 = vrot.slane %v2587, %v2607
        %v2710 = vunpack.c.l.b16 %v2491
        %v2711 = vunpack.c.h.b16 %v2491
        %v2712 = vunpack.c.l.b16 %v2492
        %v2713 = vunpack.c.h.b16 %v2492
        %v2714 = vunpack.c.l.b16 %v2493
        %v2715 = vunpack.c.l.b16 %v2494
        %v2716 = vunpack.c.h.b16 %v2494
        %v2717 = vunpack.c.l.b16 %v2495
        %v2718 = vunpack.c.h.b16 %v2495
        %v2719 = vunpack.c.l.b16 %v2496
        %v2720 = vunpack.c.l.b16 %v2497
        %v2721 = vunpack.c.h.b16 %v2497
        %v2722 = vunpack.c.l.b16 %v2498
        %v2723 = vunpack.c.h.b16 %v2498
        %v2724 = vunpack.c.l.b16 %v2499
        %v2725 = vunpack.c.l.b16 %v2500
        %v2726 = vunpack.c.h.b16 %v2500
        %v2727 = vunpack.c.l.b16 %v2501
        %v2728 = vunpack.c.h.b16 %v2501
        %v2729 = vunpack.c.l.b16 %v2502
        %v2730 = vunpack.c.l.b16 %v2503
        %v2731 = vunpack.c.h.b16 %v2503
        %v2732 = vunpack.c.l.b16 %v2504
        %v2733 = vunpack.c.h.b16 %v2504
        %v2734 = vunpack.c.l.b16 %v2505
        %v2735 = vunpack.c.l.b16 %v2506
        %v2736 = vunpack.c.h.b16 %v2506
        %v2737 = vunpack.c.l.b16 %v2507
        %v2738 = vunpack.c.h.b16 %v2507
        %v2739 = vunpack.c.l.b16 %v2508
        %v2740 = vunpack.c.l.b16 %v2509
        %v2741 = vunpack.c.h.b16 %v2509
        %v2742 = vunpack.c.l.b16 %v2510
        %v2743 = vunpack.c.h.b16 %v2510
        %v2744 = vunpack.c.l.b16 %v2511
        %v2745 = vunpack.c.l.b16 %v2512
        %v2746 = vunpack.c.h.b16 %v2512
        %v2747 = vunpack.c.l.b16 %v2513
        %v2748 = vunpack.c.h.b16 %v2513
        %v2749 = vunpack.c.l.b16 %v2514
        %v2750 = vunpack.c.l.b16 %v2515
        %v2751 = vunpack.c.h.b16 %v2515
        %v2752 = vunpack.c.l.b16 %v2516
        %v2753 = vunpack.c.h.b16 %v2516
        %v2754 = vunpack.c.l.b16 %v2517
        %v2755 = vunpack.c.l.b16 %v2518
        %v2756 = vunpack.c.h.b16 %v2518
        %v2757 = vunpack.c.l.b16 %v2519
        %v2758 = vunpack.c.h.b16 %v2519
        %v2759 = vunpack.c.l.b16 %v2520
        %v2760 = vunpack.c.l.b16 %v2521
        %v2761 = vunpack.c.h.b16 %v2521
        %v2762 = vunpack.c.l.b16 %v2522
        %v2763 = vunpack.c.h.b16 %v2522
        %v2764 = vunpack.c.l.b16 %v2523
        %v2765 = vunpack.c.l.b16 %v2524
        %v2766 = vunpack.c.h.b16 %v2524
        %v2767 = vunpack.c.l.b16 %v2525
        %v2768 = vunpack.c.h.b16 %v2525
        %v2769 = vunpack.c.l.b16 %v2526
        %v2770 = vunpack.c.l.b16 %v2527
        %v2771 = vunpack.c.h.b16 %v2527
        %v2772 = vunpack.c.l.b16 %v2528
        %v2773 = vunpack.c.h.b16 %v2528
        %v2774 = vunpack.c.l.b16 %v2529
        %v2775 = vunpack.c.l.b16 %v2530
        %v2776 = vunpack.c.h.b16 %v2530
        %v2777 = vunpack.c.l.b16 %v2531
        %v2778 = vunpack.c.h.b16 %v2531
        %v2779 = vunpack.c.l.b16 %v2532
        %v2780 = vunpack.c.l.b16 %v2533
        %v2781 = vunpack.c.h.b16 %v2533
        %v2782 = vunpack.c.l.b16 %v2534
        %v2783 = vunpack.c.h.b16 %v2534
        %v2784 = vunpack.c.l.b16 %v2535
        %v2785 = vunpack.c.l.b16 %v2536
        %v2786 = vunpack.c.h.b16 %v2536
        %v2787 = vunpack.c.l.b16 %v2537
        %v2788 = vunpack.c.h.b16 %v2537
        %v2789 = vunpack.c.l.b16 %v2538
        %v2790 = vunpack.c.l.b16 %v2539
        %v2791 = vunpack.c.h.b16 %v2539
        %v2792 = vunpack.c.l.b16 %v2540
        %v2793 = vunpack.c.h.b16 %v2540
        %v2794 = vunpack.c.l.b16 %v2541
        %v2795 = vunpack.c.l.b16 %v2542
        %v2796 = vunpack.c.h.b16 %v2542
        %v2797 = vunpack.c.l.b16 %v2543
        %v2798 = vunpack.c.h.b16 %v2543
        %v2799 = vunpack.c.l.b16 %v2544
        %v2800 = vunpack.c.l.b16 %v2545
        %v2801 = vunpack.c.h.b16 %v2545
        %v2802 = vunpack.c.l.b16 %v2546
        %v2803 = vunpack.c.h.b16 %v2546
        %v2804 = vunpack.c.l.b16 %v2547
        %v2805 = vunpack.c.l.b16 %v2548
        %v2806 = vunpack.c.h.b16 %v2548
        %v2807 = vunpack.c.l.b16 %v2549
        %v2808 = vunpack.c.h.b16 %v2549
        %v2809 = vunpack.c.l.b16 %v2550
        %v2810 = vunpack.c.l.b16 %v2551
        %v2811 = vunpack.c.h.b16 %v2551
        %v2812 = vunpack.c.l.b16 %v2552
        %v2813 = vunpack.c.h.b16 %v2552
        %v2814 = vunpack.c.l.b16 %v2553
        %v2815 = vunpack.c.l.b16 %v2554
        %v2816 = vunpack.c.h.b16 %v2554
        %v2817 = vunpack.c.l.b16 %v2555
        %v2818 = vunpack.c.h.b16 %v2555
        %v2819 = vunpack.c.l.b16 %v2556
        %v2820 = vunpack.c.l.b16 %v2557
        %v2821 = vunpack.c.h.b16 %v2557
        %v2822 = vunpack.c.l.b16 %v2558
        %v2823 = vunpack.c.h.b16 %v2558
        %v2824 = vunpack.c.l.b16 %v2559
        %v2825 = vunpack.c.l.b16 %v2560
        %v2826 = vunpack.c.h.b16 %v2560
        %v2827 = vunpack.c.l.b16 %v2561
        %v2828 = vunpack.c.h.b16 %v2561
        %v2829 = vunpack.c.l.b16 %v2562
        %v2830 = vunpack.c.l.b16 %v2563
        %v2831 = vunpack.c.h.b16 %v2563
        %v2832 = vunpack.c.l.b16 %v2564
        %v2833 = vunpack.c.h.b16 %v2564
        %v2834 = vunpack.c.l.b16 %v2565
        %v2835 = vunpack.c.l.b16 %v2566
        %v2836 = vunpack.c.h.b16 %v2566
        %v2837 = vunpack.c.l.b16 %v2567
        %v2838 = vunpack.c.h.b16 %v2567
        %v2839 = vunpack.c.l.b16 %v2568
        %v2840 = vunpack.c.l.b16 %v2569
        %v2841 = vunpack.c.h.b16 %v2569
        %v2842 = vunpack.c.l.b16 %v2570
        %v2843 = vunpack.c.h.b16 %v2570
        %v2844 = vunpack.c.l.b16 %v2571
        %v2845 = vunpack.c.l.b16 %v2572
        %v2846 = vunpack.c.h.b16 %v2572
        %v2847 = vunpack.c.l.b16 %v2573
        %v2848 = vunpack.c.h.b16 %v2573
        %v2849 = vunpack.c.l.b16 %v2574
        %v2850 = vunpack.c.l.b16 %v2575
        %v2851 = vunpack.c.h.b16 %v2575
        %v2852 = vunpack.c.l.b16 %v2576
        %v2853 = vunpack.c.h.b16 %v2576
        %v2854 = vunpack.c.l.b16 %v2577
        %v2855 = vunpack.c.l.b16 %v2578
        %v2856 = vunpack.c.h.b16 %v2578
        %v2857 = vunpack.c.l.b16 %v2579
        %v2858 = vunpack.c.h.b16 %v2579
        %v2859 = vunpack.c.l.b16 %v2580
        %v2860 = vunpack.c.l.b16 %v2581
        %v2861 = vunpack.c.h.b16 %v2581
        %v2862 = vunpack.c.l.b16 %v2582
        %v2863 = vunpack.c.h.b16 %v2582
        %v2864 = vunpack.c.l.b16 %v2583
        %v2865 = vunpack.c.l.b16 %v2584
        %v2866 = vunpack.c.h.b16 %v2584
        %v2867 = vunpack.c.l.b16 %v2585
        %v2868 = vunpack.c.h.b16 %v2585
        %v2869 = vunpack.c.l.b16 %v2586
        %v2870 = vpack.c.b16 %v2715, %v2710
        %v2871 = vpack.c.b16 %v2716, %v2711
        %v2872 = vpack.c.b16 %v2717, %v2712
        %v2873 = vpack.c.b16 %v2718, %v2713
        %v2874 = vpack.c.b16 %v2719, %v2714
        %v2875 = vpack.c.b16 %v2725, %v2720
        %v2876 = vpack.c.b16 %v2726, %v2721
        %v2877 = vpack.c.b16 %v2727, %v2722
        %v2878 = vpack.c.b16 %v2728, %v2723
        %v2879 = vpack.c.b16 %v2729, %v2724
        %v2880 = vpack.c.b16 %v2735, %v2730
        %v2881 = vpack.c.b16 %v2736, %v2731
        %v2882 = vpack.c.b16 %v2737, %v2732
        %v2883 = vpack.c.b16 %v2738, %v2733
        %v2884 = vpack.c.b16 %v2739, %v2734
        %v2885 = vpack.c.b16 %v2745, %v2740
        %v2886 = vpack.c.b16 %v2746, %v2741
        %v2887 = vpack.c.b16 %v2747, %v2742
        %v2888 = vpack.c.b16 %v2748, %v2743
        %v2889 = vpack.c.b16 %v2749, %v2744
        %v2890 = vpack.c.b16 %v2755, %v2750
        %v2891 = vpack.c.b16 %v2756, %v2751
        %v2892 = vpack.c.b16 %v2757, %v2752
        %v2893 = vpack.c.b16 %v2758, %v2753
        %v2894 = vpack.c.b16 %v2759, %v2754
        %v2895 = vpack.c.b16 %v2765, %v2760
        %v2896 = vpack.c.b16 %v2766, %v2761
        %v2897 = vpack.c.b16 %v2767, %v2762
        %v2898 = vpack.c.b16 %v2768, %v2763
        %v2899 = vpack.c.b16 %v2769, %v2764
        %v2900 = vpack.c.b16 %v2775, %v2770
        %v2901 = vpack.c.b16 %v2776, %v2771
        %v2902 = vpack.c.b16 %v2777, %v2772
        %v2903 = vpack.c.b16 %v2778, %v2773
        %v2904 = vpack.c.b16 %v2779, %v2774
        %v2905 = vpack.c.b16 %v2785, %v2780
        %v2906 = vpack.c.b16 %v2786, %v2781
        %v2907 = vpack.c.b16 %v2787, %v2782
        %v2908 = vpack.c.b16 %v2788, %v2783
        %v2909 = vpack.c.b16 %v2789, %v2784
        %v2910 = vpack.c.b16 %v2795, %v2790
        %v2911 = vpack.c.b16 %v2796, %v2791
        %v2912 = vpack.c.b16 %v2797, %v2792
        %v2913 = vpack.c.b16 %v2798, %v2793
        %v2914 = vpack.c.b16 %v2799, %v2794
        %v2915 = vpack.c.b16 %v2805, %v2800
        %v2916 = vpack.c.b16 %v2806, %v2801
        %v2917 = vpack.c.b16 %v2807, %v2802
        %v2918 = vpack.c.b16 %v2808, %v2803
        %v2919 = vpack.c.b16 %v2809, %v2804
        %v2920 = vpack.c.b16 %v2815, %v2810
        %v2921 = vpack.c.b16 %v2816, %v2811
        %v2922 = vpack.c.b16 %v2817, %v2812
        %v2923 = vpack.c.b16 %v2818, %v2813
        %v2924 = vpack.c.b16 %v2819, %v2814
        %v2925 = vpack.c.b16 %v2825, %v2820
        %v2926 = vpack.c.b16 %v2826, %v2821
        %v2927 = vpack.c.b16 %v2827, %v2822
        %v2928 = vpack.c.b16 %v2828, %v2823
        %v2929 = vpack.c.b16 %v2829, %v2824
        %v2930 = vpack.c.b16 %v2835, %v2830
        %v2931 = vpack.c.b16 %v2836, %v2831
        %v2932 = vpack.c.b16 %v2837, %v2832
        %v2933 = vpack.c.b16 %v2838, %v2833
        %v2934 = vpack.c.b16 %v2839, %v2834
        %v2935 = vpack.c.b16 %v2845, %v2840
        %v2936 = vpack.c.b16 %v2846, %v2841
        %v2937 = vpack.c.b16 %v2847, %v2842
        %v2938 = vpack.c.b16 %v2848, %v2843
        %v2939 = vpack.c.b16 %v2849, %v2844
        %v2940 = vpack.c.b16 %v2855, %v2850
        %v2941 = vpack.c.b16 %v2856, %v2851
        %v2942 = vpack.c.b16 %v2857, %v2852
        %v2943 = vpack.c.b16 %v2858, %v2853
        %v2944 = vpack.c.b16 %v2859, %v2854
        %v2945 = vpack.c.b16 %v2865, %v2860
        %v2946 = vpack.c.b16 %v2866, %v2861
        %v2947 = vpack.c.b16 %v2867, %v2862
        %v2948 = vpack.c.b16 %v2868, %v2863
        %v2949 = vpack.c.b16 %v2869, %v2864
        %3030 = vmatprep.subr.bf16.mxu0 %v2906
        %3031 = vmatpush1.bf16.msra.mxu0 %v2905
        %3032 = vmatprep.subr.bf16.mxu0 %v2901
        %3033 = vmatpush1.bf16.msra.mxu0 %v2900
        %3034 = vmatprep.subr.bf16.mxu0 %v2896
        %3035 = vmatpush1.bf16.msra.mxu0 %v2895
        %3036 = vmatprep.subr.bf16.mxu0 %v2891
        %3037 = vmatpush1.bf16.msra.mxu0 %v2890
        %3038 = vmatprep.subr.bf16.mxu0 %v2886
        %3039 = vmatpush1.bf16.msra.mxu0 %v2885
        %3040 = vmatprep.subr.bf16.mxu0 %v2881
        %3041 = vmatpush1.bf16.msra.mxu0 %v2880
        %3042 = vmatprep.subr.bf16.mxu0 %v2876
        %3043 = vmatpush1.bf16.msra.mxu0 %v2875
        %3044 = vmatprep.subr.bf16.mxu0 %v2871
        %3045 = vmatpush1.bf16.msra.mxu0 %v2870
        %3046 = vmatprep.subr.bf16.mxu0 %v2946
        %3047 = vmatpush2.bf16.msra.mxu0 %v2945
        %3048 = vmatprep.subr.bf16.mxu0 %v2941
        %3049 = vmatpush2.bf16.msra.mxu0 %v2940
        %3050 = vmatprep.subr.bf16.mxu0 %v2936
        %3051 = vmatpush2.bf16.msra.mxu0 %v2935
        %3052 = vmatprep.subr.bf16.mxu0 %v2931
        %3053 = vmatpush2.bf16.msra.mxu0 %v2930
        %3054 = vmatprep.subr.bf16.mxu0 %v2926
        %3055 = vmatpush2.bf16.msra.mxu0 %v2925
        %3056 = vmatprep.subr.bf16.mxu0 %v2921
        %3057 = vmatpush2.bf16.msra.mxu0 %v2920
        %3058 = vmatprep.subr.bf16.mxu0 %v2916
        %3059 = vmatpush2.bf16.msra.mxu0 %v2915
        %3060 = vmatprep.subr.bf16.mxu0 %v2911
        %3061 = vmatpush2.bf16.msra.mxu0 %v2910
        %3062 = vmatprep.mubr.bf16.mxu0 %v2484
        %3063 = vmatmul.mubr.bf16.gmra.mxu0 %v2483
        %v3064 = vpop.f32.mrf.mxu0
        %v3065 = vadd.f32 %v2592, %v3064
        %v3066 = vpop.f32.mrf.mxu0
        %v3067 = vadd.f32 %v2596, %v3066
        %v3068 = vpop.f32.mrf.mxu0
        %v3069 = vadd.f32 %v2592, %v3068
        %v3070 = vpop.f32.mrf.mxu0
        %v3071 = vadd.f32 %v2596, %v3070
        %3072 = vmatprep.mubr.bf16.mxu0 %v2486
        %3073 = vmatmul.mubr.bf16.gmra.mxu0 %v2485
        %v3074 = vpop.f32.mrf.mxu0
        %v3075 = vadd.f32 %v2592, %v3074
        %v3076 = vpop.f32.mrf.mxu0
        %v3077 = vadd.f32 %v2596, %v3076
        %v3078 = vpop.f32.mrf.mxu0
        %v3079 = vadd.f32 %v2592, %v3078
        %v3080 = vpop.f32.mrf.mxu0
        %v3081 = vadd.f32 %v2596, %v3080
        %3082 = vmatprep.mubr.bf16.mxu0 %v2488
        %3083 = vmatmul.mubr.bf16.gmra.mxu0 %v2487
        %v3084 = vpop.f32.mrf.mxu0
        %v3085 = vadd.f32 %v2592, %v3084
        %v3086 = vpop.f32.mrf.mxu0
        %v3087 = vadd.f32 %v2596, %v3086
        %v3088 = vpop.f32.mrf.mxu0
        %v3089 = vadd.f32 %v2592, %v3088
        %v3090 = vpop.f32.mrf.mxu0
        %v3091 = vadd.f32 %v2596, %v3090
        %3092 = vmatprep.mubr.bf16.mxu0 %v2490
        %3093 = vmatmul.mubr.bf16.gmra.mxu0 %v2489
        %v3094 = vpop.f32.mrf.mxu0
        %v3095 = vadd.f32 %v2592, %v3094
        %v3096 = vpop.f32.mrf.mxu0
        %v3097 = vadd.f32 %v2596, %v3096
        %v3098 = vpop.f32.mrf.mxu0
        %v3099 = vadd.f32 %v2592, %v3098
        %v3100 = vpop.f32.mrf.mxu0
        %v3101 = vadd.f32 %v2596, %v3100
        %3102 = vdwg.mxu0
        %3103 = vmatprep.subr.bf16.mxu0 %v2908
        %3104 = vmatpush1.bf16.msra.mxu0 %v2907
        %3105 = vmatprep.subr.bf16.mxu0 %v2903
        %3106 = vmatpush1.bf16.msra.mxu0 %v2902
        %3107 = vmatprep.subr.bf16.mxu0 %v2898
        %3108 = vmatpush1.bf16.msra.mxu0 %v2897
        %3109 = vmatprep.subr.bf16.mxu0 %v2893
        %3110 = vmatpush1.bf16.msra.mxu0 %v2892
        %3111 = vmatprep.subr.bf16.mxu0 %v2888
        %3112 = vmatpush1.bf16.msra.mxu0 %v2887
        %3113 = vmatprep.subr.bf16.mxu0 %v2883
        %3114 = vmatpush1.bf16.msra.mxu0 %v2882
        %3115 = vmatprep.subr.bf16.mxu0 %v2878
        %3116 = vmatpush1.bf16.msra.mxu0 %v2877
        %3117 = vmatprep.subr.bf16.mxu0 %v2873
        %3118 = vmatpush1.bf16.msra.mxu0 %v2872
        %3119 = vmatprep.subr.bf16.mxu0 %v2948
        %3120 = vmatpush2.bf16.msra.mxu0 %v2947
        %3121 = vmatprep.subr.bf16.mxu0 %v2943
        %3122 = vmatpush2.bf16.msra.mxu0 %v2942
        %3123 = vmatprep.subr.bf16.mxu0 %v2938
        %3124 = vmatpush2.bf16.msra.mxu0 %v2937
        %3125 = vmatprep.subr.bf16.mxu0 %v2933
        %3126 = vmatpush2.bf16.msra.mxu0 %v2932
        %3127 = vmatprep.subr.bf16.mxu0 %v2928
        %3128 = vmatpush2.bf16.msra.mxu0 %v2927
        %3129 = vmatprep.subr.bf16.mxu0 %v2923
        %3130 = vmatpush2.bf16.msra.mxu0 %v2922
        %3131 = vmatprep.subr.bf16.mxu0 %v2918
        %3132 = vmatpush2.bf16.msra.mxu0 %v2917
        %3133 = vmatprep.subr.bf16.mxu0 %v2913
        %3134 = vmatpush2.bf16.msra.mxu0 %v2912
        %3135 = vmatprep.mubr.bf16.mxu0 %v2484
        %3136 = vmatmul.mubr.bf16.gmra.mxu0 %v2483
        %v3137 = vpop.f32.mrf.mxu0
        %v3138 = vadd.f32 %v2600, %v3137
        %v3139 = vpop.f32.mrf.mxu0
        %v3140 = vadd.f32 %v2604, %v3139
        %v3141 = vpop.f32.mrf.mxu0
        %v3142 = vadd.f32 %v2600, %v3141
        %v3143 = vpop.f32.mrf.mxu0
        %v3144 = vadd.f32 %v2604, %v3143
        %3145 = vmatprep.mubr.bf16.mxu0 %v2486
        %3146 = vmatmul.mubr.bf16.gmra.mxu0 %v2485
        %v3147 = vpop.f32.mrf.mxu0
        %v3148 = vadd.f32 %v2600, %v3147
        %v3149 = vpop.f32.mrf.mxu0
        %v3150 = vadd.f32 %v2604, %v3149
        %v3151 = vpop.f32.mrf.mxu0
        %v3152 = vadd.f32 %v2600, %v3151
        %v3153 = vpop.f32.mrf.mxu0
        %v3154 = vadd.f32 %v2604, %v3153
        %3155 = vmatprep.mubr.bf16.mxu0 %v2488
        %3156 = vmatmul.mubr.bf16.gmra.mxu0 %v2487
        %v3157 = vpop.f32.mrf.mxu0
        %v3158 = vadd.f32 %v2600, %v3157
        %v3159 = vpop.f32.mrf.mxu0
        %v3160 = vadd.f32 %v2604, %v3159
        %v3161 = vpop.f32.mrf.mxu0
        %v3162 = vadd.f32 %v2600, %v3161
        %v3163 = vpop.f32.mrf.mxu0
        %v3164 = vadd.f32 %v2604, %v3163
        %3165 = vmatprep.mubr.bf16.mxu0 %v2490
        %3166 = vmatmul.mubr.bf16.gmra.mxu0 %v2489
        %v3167 = vpop.f32.mrf.mxu0
        %v3168 = vadd.f32 %v2600, %v3167
        %v3169 = vpop.f32.mrf.mxu0
        %v3170 = vadd.f32 %v2604, %v3169
        %v3171 = vpop.f32.mrf.mxu0
        %v3172 = vadd.f32 %v2600, %v3171
        %v3173 = vpop.f32.mrf.mxu0
        %v3174 = vadd.f32 %v2604, %v3173
        %3175 = vdwg.mxu0
        %3176 = vmatprep.subr.bf16.mxu0 0
        %3177 = vmatpush1.bf16.msra.mxu0 %v2909
        %3178 = vmatprep.subr.bf16.mxu0 0
        %3179 = vmatpush1.bf16.msra.mxu0 %v2904
        %3180 = vmatprep.subr.bf16.mxu0 0
        %3181 = vmatpush1.bf16.msra.mxu0 %v2899
        %3182 = vmatprep.subr.bf16.mxu0 0
        %3183 = vmatpush1.bf16.msra.mxu0 %v2894
        %3184 = vmatprep.subr.bf16.mxu0 0
        %3185 = vmatpush1.bf16.msra.mxu0 %v2889
        %3186 = vmatprep.subr.bf16.mxu0 0
        %3187 = vmatpush1.bf16.msra.mxu0 %v2884
        %3188 = vmatprep.subr.bf16.mxu0 0
        %3189 = vmatpush1.bf16.msra.mxu0 %v2879
        %3190 = vmatprep.subr.bf16.mxu0 0
        %3191 = vmatpush1.bf16.msra.mxu0 %v2874
        %3192 = vmatprep.subr.bf16.mxu0 0
        %3193 = vmatpush2.bf16.msra.mxu0 %v2949
        %3194 = vmatprep.subr.bf16.mxu0 0
        %3195 = vmatpush2.bf16.msra.mxu0 %v2944
        %3196 = vmatprep.subr.bf16.mxu0 0
        %3197 = vmatpush2.bf16.msra.mxu0 %v2939
        %3198 = vmatprep.subr.bf16.mxu0 0
        %3199 = vmatpush2.bf16.msra.mxu0 %v2934
        %3200 = vmatprep.subr.bf16.mxu0 0
        %3201 = vmatpush2.bf16.msra.mxu0 %v2929
        %3202 = vmatprep.subr.bf16.mxu0 0
        %3203 = vmatpush2.bf16.msra.mxu0 %v2924
        %3204 = vmatprep.subr.bf16.mxu0 0
        %3205 = vmatpush2.bf16.msra.mxu0 %v2919
        %3206 = vmatprep.subr.bf16.mxu0 0
        %3207 = vmatpush2.bf16.msra.mxu0 %v2914
        %3208 = vmatprep.mubr.bf16.mxu0 %v2484
        %3209 = vmatmul.mubr.bf16.gmra.mxu0 %v2483
        %v3210 = vpop.f32.mrf.mxu0
        %v3211 = vadd.f32 %v2608, %v3210
        %v3212 = vpop.f32.mrf.mxu0
        %v3213 = vpop.f32.mrf.mxu0
        %v3214 = vadd.f32 %v2608, %v3213
        %v3215 = vpop.f32.mrf.mxu0
        %3216 = vmatprep.mubr.bf16.mxu0 %v2486
        %3217 = vmatmul.mubr.bf16.gmra.mxu0 %v2485
        %v3218 = vpop.f32.mrf.mxu0
        %v3219 = vadd.f32 %v2608, %v3218
        %v3220 = vpop.f32.mrf.mxu0
        %v3221 = vpop.f32.mrf.mxu0
        %v3222 = vadd.f32 %v2608, %v3221
        %v3223 = vpop.f32.mrf.mxu0
        %3224 = vmatprep.mubr.bf16.mxu0 %v2488
        %3225 = vmatmul.mubr.bf16.gmra.mxu0 %v2487
        %v3226 = vpop.f32.mrf.mxu0
        %v3227 = vadd.f32 %v2608, %v3226
        %v3228 = vpop.f32.mrf.mxu0
        %v3229 = vpop.f32.mrf.mxu0
        %v3230 = vadd.f32 %v2608, %v3229
        %v3231 = vpop.f32.mrf.mxu0
        %3232 = vmatprep.mubr.bf16.mxu0 %v2490
        %3233 = vmatmul.mubr.bf16.gmra.mxu0 %v2489
        %v3234 = vpop.f32.mrf.mxu0
        %v3235 = vadd.f32 %v2608, %v3234
        %v3236 = vpop.f32.mrf.mxu0
        %v3237 = vpop.f32.mrf.mxu0
        %v3238 = vadd.f32 %v2608, %v3237
        %v3239 = vpop.f32.mrf.mxu0
        %3240 = vdwg.mxu0
        %3241 = vst [vmem:[%s325] sm:$0xff] %v3065
        %3242 = vst [vmem:[%s325 + $0x8] sm:$0xff] %v3067
        %3243 = vst [vmem:[%s325 + $0x10] sm:$0xff] %v3138
        %3244 = vst [vmem:[%s325 + $0x18] sm:$0xff] %v3140
        %vm3245 = vcmask 523264
        %3246 = vst.msk [vmem:[%s325 + $0x20] sm:$0xff] %vm3245, %v3211
        %3247 = vst [vmem:[%s325 + $0x28] sm:$0xff] %v3069
        %3248 = vst [vmem:[%s325 + $0x30] sm:$0xff] %v3071
        %3249 = vst [vmem:[%s325 + $0x38] sm:$0xff] %v3142
        %3250 = vst [vmem:[%s325 + $0x40] sm:$0xff] %v3144
        %3251 = vst.msk [vmem:[%s325 + $0x48] sm:$0xff] %vm3245, %v3214
        %3252 = vst [vmem:[%s325 + $0x50] sm:$0xff] %v3075
        %3253 = vst [vmem:[%s325 + $0x58] sm:$0xff] %v3077
        %3254 = vst [vmem:[%s325 + $0x60] sm:$0xff] %v3148
        %3255 = vst [vmem:[%s325 + $0x68] sm:$0xff] %v3150
        %3256 = vst.msk [vmem:[%s325 + $0x70] sm:$0xff] %vm3245, %v3219
        %3257 = vst [vmem:[%s325 + $0x78] sm:$0xff] %v3079
        %3258 = vst [vmem:[%s325 + $0x80] sm:$0xff] %v3081
        %3259 = vst [vmem:[%s325 + $0x88] sm:$0xff] %v3152
        %3260 = vst [vmem:[%s325 + $0x90] sm:$0xff] %v3154
        %3261 = vst.msk [vmem:[%s325 + $0x98] sm:$0xff] %vm3245, %v3222
        %3262 = vst [vmem:[%s325 + $0xa0] sm:$0xff] %v3085
        %3263 = vst [vmem:[%s325 + $0xa8] sm:$0xff] %v3087
        %3264 = vst [vmem:[%s325 + $0xb0] sm:$0xff] %v3158
        %3265 = vst [vmem:[%s325 + $0xb8] sm:$0xff] %v3160
        %3266 = vst.msk [vmem:[%s325 + $0xc0] sm:$0xff] %vm3245, %v3227
        %3267 = vst [vmem:[%s325 + $0xc8] sm:$0xff] %v3089
        %3268 = vst [vmem:[%s325 + $0xd0] sm:$0xff] %v3091
        %3269 = vst [vmem:[%s325 + $0xd8] sm:$0xff] %v3162
        %3270 = vst [vmem:[%s325 + $0xe0] sm:$0xff] %v3164
        %3271 = vst.msk [vmem:[%s325 + $0xe8] sm:$0xff] %vm3245, %v3230
        %3272 = vst [vmem:[%s325 + $0xf0] sm:$0xff] %v3095
        %3273 = vst [vmem:[%s325 + $0xf8] sm:$0xff] %v3097
        %3274 = vst [vmem:[%s325 + $0x100] sm:$0xff] %v3168
        %3275 = vst [vmem:[%s325 + $0x108] sm:$0xff] %v3170
        %3276 = vst.msk [vmem:[%s325 + $0x110] sm:$0xff] %vm3245, %v3235
        %3277 = vst [vmem:[%s325 + $0x118] sm:$0xff] %v3099
        %3278 = vst [vmem:[%s325 + $0x120] sm:$0xff] %v3101
        %3279 = vst [vmem:[%s325 + $0x128] sm:$0xff] %v3172
        %3280 = vst [vmem:[%s325 + $0x130] sm:$0xff] %v3174
        %3281 = vst.msk [vmem:[%s325 + $0x138] sm:$0xff] %vm3245, %v3238
        %v3282 = vpack.c.bf16 %v2445, %v2443
        %v3283 = vpack.c.bf16 %v2446, %v2444
        %v3284 = vpack.c.bf16 %v2453, %v2449
        %v3285 = vpack.c.bf16 %v2454, %v2450
        %v3286 = vpack.c.bf16 %v2461, %v2457
        %v3287 = vpack.c.bf16 %v2462, %v2458
        %v3288 = vpack.c.bf16 %v2469, %v2465
        %v3289 = vpack.c.bf16 %v2470, %v2466
        %v3290 = vpack.c.bf16 %v2477, %v2473
        %v3291 = vpack.c.bf16 %v2478, %v2474
        %v3292 = vpack.c.bf16 %v2481, %v2479
        %v3293 = vpack.c.bf16 %v2482, %v2480
        %v3294 = vld [vmem:[%s5] sm:$0xf]
        %v3295 = vld [vmem:[%s5 + $0x4] sm:$0xf]
        %v3296 = vld [vmem:[%s5 + $0x8] sm:$0xf]
        %v3297 = vld [vmem:[%s5 + $0xc] sm:$0xf]
        %v3298 = vld [vmem:[%s5 + $0x10] sm:$0xf]
        %v3299 = vld [vmem:[%s5 + $0x14] sm:$0xf]
        %v3300 = vld [vmem:[%s5 + $0x18] sm:$0xf]
        %v3301 = vld [vmem:[%s5 + $0x1c] sm:$0xf]
        %v3302 = vld [vmem:[%s5 + $0x20] sm:$0xf]
        %v3303 = vld [vmem:[%s5 + $0x24] sm:$0xf]
        %v3304 = vld [vmem:[%s5 + $0x28] sm:$0xf]
        %v3305 = vld [vmem:[%s5 + $0x2c] sm:$0xf]
        %v3306 = vld [vmem:[%s5 + $0x30] sm:$0xf]
        %v3307 = vld [vmem:[%s5 + $0x34] sm:$0xf]
        %v3308 = vld [vmem:[%s5 + $0x38] sm:$0xf]
        %v3309 = vld [vmem:[%s5 + $0x3c] sm:$0xf]
        %v3310 = vld [vmem:[%s5 + $0x40] sm:$0xf]
        %v3311 = vld [vmem:[%s5 + $0x44] sm:$0xf]
        %v3312 = vld [vmem:[%s5 + $0x48] sm:$0xf]
        %v3313 = vld [vmem:[%s5 + $0x4c] sm:$0xf]
        %v3314 = vld [vmem:[%s5 + $0x50] sm:$0xf]
        %v3315 = vld [vmem:[%s5 + $0x54] sm:$0xf]
        %v3316 = vld [vmem:[%s5 + $0x58] sm:$0xf]
        %v3317 = vld [vmem:[%s5 + $0x5c] sm:$0xf]
        %v3318 = vld [vmem:[%s5 + $0x60] sm:$0xf]
        %v3319 = vld [vmem:[%s5 + $0x64] sm:$0xf]
        %v3320 = vld [vmem:[%s5 + $0x68] sm:$0xf]
        %v3321 = vld [vmem:[%s5 + $0x6c] sm:$0xf]
        %v3322 = vld [vmem:[%s5 + $0x70] sm:$0xf]
        %v3323 = vld [vmem:[%s5 + $0x74] sm:$0xf]
        %v3324 = vld [vmem:[%s5 + $0x78] sm:$0xf]
        %v3325 = vld [vmem:[%s5 + $0x7c] sm:$0xf]
        %v3358 = vunpack.c.l.b16 %v3294
        %v3359 = vunpack.c.l.b16 %v3295
        %v3360 = vunpack.c.l.b16 %v3296
        %v3361 = vunpack.c.l.b16 %v3297
        %v3362 = vunpack.c.l.b16 %v3298
        %v3363 = vunpack.c.l.b16 %v3299
        %v3364 = vunpack.c.l.b16 %v3300
        %v3365 = vunpack.c.l.b16 %v3301
        %v3366 = vunpack.c.l.b16 %v3302
        %v3367 = vunpack.c.l.b16 %v3303
        %v3368 = vunpack.c.l.b16 %v3304
        %v3369 = vunpack.c.l.b16 %v3305
        %v3370 = vunpack.c.l.b16 %v3306
        %v3371 = vunpack.c.l.b16 %v3307
        %v3372 = vunpack.c.l.b16 %v3308
        %v3373 = vunpack.c.l.b16 %v3309
        %v3374 = vunpack.c.l.b16 %v3310
        %v3375 = vunpack.c.l.b16 %v3311
        %v3376 = vunpack.c.l.b16 %v3312
        %v3377 = vunpack.c.l.b16 %v3313
        %v3378 = vunpack.c.l.b16 %v3314
        %v3379 = vunpack.c.l.b16 %v3315
        %v3380 = vunpack.c.l.b16 %v3316
        %v3381 = vunpack.c.l.b16 %v3317
        %v3382 = vunpack.c.l.b16 %v3318
        %v3383 = vunpack.c.l.b16 %v3319
        %v3384 = vunpack.c.l.b16 %v3320
        %v3385 = vunpack.c.l.b16 %v3321
        %v3386 = vunpack.c.l.b16 %v3322
        %v3387 = vunpack.c.l.b16 %v3323
        %v3388 = vunpack.c.l.b16 %v3324
        %v3389 = vunpack.c.l.b16 %v3325
        %v3390 = vpack.c.b16 %v3359, %v3358
        %v3391 = vpack.c.b16 %v3361, %v3360
        %v3392 = vpack.c.b16 %v3363, %v3362
        %v3393 = vpack.c.b16 %v3365, %v3364
        %v3394 = vpack.c.b16 %v3367, %v3366
        %v3395 = vpack.c.b16 %v3369, %v3368
        %v3396 = vpack.c.b16 %v3371, %v3370
        %v3397 = vpack.c.b16 %v3373, %v3372
        %v3398 = vpack.c.b16 %v3375, %v3374
        %v3399 = vpack.c.b16 %v3377, %v3376
        %v3400 = vpack.c.b16 %v3379, %v3378
        %v3401 = vpack.c.b16 %v3381, %v3380
        %v3402 = vpack.c.b16 %v3383, %v3382
        %v3403 = vpack.c.b16 %v3385, %v3384
        %v3404 = vpack.c.b16 %v3387, %v3386
        %v3405 = vpack.c.b16 %v3389, %v3388
        %3422 = vmatprep.subr.bf16.mxu0 0
        %3423 = vmatpush1.bf16.msra.mxu0 %v3397
        %3424 = vmatprep.subr.bf16.mxu0 0
        %3425 = vmatpush1.bf16.msra.mxu0 %v3396
        %3426 = vmatprep.subr.bf16.mxu0 0
        %3427 = vmatpush1.bf16.msra.mxu0 %v3395
        %3428 = vmatprep.subr.bf16.mxu0 0
        %3429 = vmatpush1.bf16.msra.mxu0 %v3394
        %3430 = vmatprep.subr.bf16.mxu0 0
        %3431 = vmatpush1.bf16.msra.mxu0 %v3393
        %3432 = vmatprep.subr.bf16.mxu0 0
        %3433 = vmatpush1.bf16.msra.mxu0 %v3392
        %3434 = vmatprep.subr.bf16.mxu0 0
        %3435 = vmatpush1.bf16.msra.mxu0 %v3391
        %3436 = vmatprep.subr.bf16.mxu0 0
        %3437 = vmatpush1.bf16.msra.mxu0 %v3390
        %3438 = vmatprep.subr.bf16.mxu0 0
        %3439 = vmatpush2.bf16.msra.mxu0 %v3405
        %3440 = vmatprep.subr.bf16.mxu0 0
        %3441 = vmatpush2.bf16.msra.mxu0 %v3404
        %3442 = vmatprep.subr.bf16.mxu0 0
        %3443 = vmatpush2.bf16.msra.mxu0 %v3403
        %3444 = vmatprep.subr.bf16.mxu0 0
        %3445 = vmatpush2.bf16.msra.mxu0 %v3402
        %3446 = vmatprep.subr.bf16.mxu0 0
        %3447 = vmatpush2.bf16.msra.mxu0 %v3401
        %3448 = vmatprep.subr.bf16.mxu0 0
        %3449 = vmatpush2.bf16.msra.mxu0 %v3400
        %3450 = vmatprep.subr.bf16.mxu0 0
        %3451 = vmatpush2.bf16.msra.mxu0 %v3399
        %3452 = vmatprep.subr.bf16.mxu0 0
        %3453 = vmatpush2.bf16.msra.mxu0 %v3398
        %3454 = vmatprep.mubr.bf16.mxu0 %v3283
        %3455 = vmatmul.mubr.bf16.gmra.mxu0 %v3282
        %v3456 = vpop.f32.mrf.mxu0
        %v3457 = vadd.f32 0.0, %v3456
        %v3458 = vpop.f32.mrf.mxu0
        %v3459 = vpop.f32.mrf.mxu0
        %v3460 = vadd.f32 0.0, %v3459
        %v3461 = vpop.f32.mrf.mxu0
        %3462 = vmatprep.mubr.bf16.mxu0 %v3285
        %3463 = vmatmul.mubr.bf16.gmra.mxu0 %v3284
        %v3464 = vpop.f32.mrf.mxu0
        %v3465 = vadd.f32 0.0, %v3464
        %v3466 = vpop.f32.mrf.mxu0
        %v3467 = vpop.f32.mrf.mxu0
        %v3468 = vadd.f32 0.0, %v3467
        %v3469 = vpop.f32.mrf.mxu0
        %3470 = vmatprep.mubr.bf16.mxu0 %v3287
        %3471 = vmatmul.mubr.bf16.gmra.mxu0 %v3286
        %v3472 = vpop.f32.mrf.mxu0
        %v3473 = vadd.f32 0.0, %v3472
        %v3474 = vpop.f32.mrf.mxu0
        %v3475 = vpop.f32.mrf.mxu0
        %v3476 = vadd.f32 0.0, %v3475
        %v3477 = vpop.f32.mrf.mxu0
        %3478 = vmatprep.mubr.bf16.mxu0 %v3289
        %3479 = vmatmul.mubr.bf16.gmra.mxu0 %v3288
        %v3480 = vpop.f32.mrf.mxu0
        %v3481 = vadd.f32 0.0, %v3480
        %v3482 = vpop.f32.mrf.mxu0
        %v3483 = vpop.f32.mrf.mxu0
        %v3484 = vadd.f32 0.0, %v3483
        %v3485 = vpop.f32.mrf.mxu0
        %3486 = vmatprep.mubr.bf16.mxu0 %v3291
        %3487 = vmatmul.mubr.bf16.gmra.mxu0 %v3290
        %v3488 = vpop.f32.mrf.mxu0
        %v3489 = vadd.f32 0.0, %v3488
        %v3490 = vpop.f32.mrf.mxu0
        %v3491 = vpop.f32.mrf.mxu0
        %v3492 = vadd.f32 0.0, %v3491
        %v3493 = vpop.f32.mrf.mxu0
        %3494 = vmatprep.mubr.bf16.mxu0 %v3293
        %3495 = vmatmul.mubr.bf16.gmra.mxu0 %v3292
        %v3496 = vpop.f32.mrf.mxu0
        %v3497 = vadd.f32 0.0, %v3496
        %v3498 = vpop.f32.mrf.mxu0
        %v3499 = vpop.f32.mrf.mxu0
        %v3500 = vadd.f32 0.0, %v3499
        %v3501 = vpop.f32.mrf.mxu0
        %3502 = vdwg.mxu0
        %vm3503 = vcmask 146432
        %3504 = vst.msk [vmem:[#allocation3 + $0x1] sm:$0xff] %vm3503, %v3457
        %3505 = vst.msk [vmem:[#allocation3 + $0x9] sm:$0xff] %vm3503, %v3460
        %3506 = vst.msk [vmem:[#allocation3 + $0x19] sm:$0xff] %vm3503, %v3465
        %3507 = vst.msk [vmem:[#allocation3 + $0x21] sm:$0xff] %vm3503, %v3468
        %3508 = vst.msk [vmem:[#allocation3 + $0x31] sm:$0xff] %vm3503, %v3473
        %3509 = vst.msk [vmem:[#allocation3 + $0x39] sm:$0xff] %vm3503, %v3476
        %3510 = vst.msk [vmem:[#allocation3 + $0x49] sm:$0xff] %vm3503, %v3481
        %3511 = vst.msk [vmem:[#allocation3 + $0x51] sm:$0xff] %vm3503, %v3484
        %3512 = vst.msk [vmem:[#allocation3 + $0x61] sm:$0xff] %vm3503, %v3489
        %3513 = vst.msk [vmem:[#allocation3 + $0x69] sm:$0xff] %vm3503, %v3492
        %3514 = vst.msk [vmem:[#allocation3 + $0x79] sm:$0xff] %vm3503, %v3497
        %3515 = vst.msk [vmem:[#allocation3 + $0x81] sm:$0xff] %vm3503, %v3500
        %vm3516 = vcmask 139264
        %3517 = vst.msk [vmem:[#allocation3] sm:$0x1] %vm3516, 0.0
        %3518 = vst.msk [vmem:[#allocation3 + $0x18] sm:$0x1] %vm3516, 0.0
        %3519 = vst.msk [vmem:[#allocation3 + $0x30] sm:$0x1] %vm3516, 0.0
        %3520 = vst.msk [vmem:[#allocation3 + $0x48] sm:$0x1] %vm3516, 0.0
        %3521 = vst.msk [vmem:[#allocation3 + $0x60] sm:$0x1] %vm3516, 0.0
        %3522 = vst.msk [vmem:[#allocation3 + $0x78] sm:$0x1] %vm3516, 0.0
        %3523 = vst.msk [vmem:[#allocation3 + $0x11] sm:$0x1] %vm3516, 0.0
        %3524 = vst.msk [vmem:[#allocation3 + $0x29] sm:$0x1] %vm3516, 0.0
        %3525 = vst.msk [vmem:[#allocation3 + $0x41] sm:$0x1] %vm3516, 0.0
        %3526 = vst.msk [vmem:[#allocation3 + $0x59] sm:$0x1] %vm3516, 0.0
        %3527 = vst.msk [vmem:[#allocation3 + $0x71] sm:$0x1] %vm3516, 0.0
        %3528 = vst.msk [vmem:[#allocation3 + $0x89] sm:$0x1] %vm3516, 0.0
        %p3529 = scmp.eq.s32.totalorder %s28, 0
        // Predicated region
        $region49: #{update_block_pallas.1} parent=47 // pred_check
          %p3530 = pneg %p3529
        $region50: #{update_block_pallas.1} parent=47 // pred_check_branch
          %3532 = sbr.rel (%p3530) target = $region52
        $region51: #{update_block_pallas.1} parent=47 // pred_region
          %3533 = vst.msk [vmem:[#allocation3] sm:$0xff] %vm3503, 0.0
          %3534 = vst.msk [vmem:[#allocation3 + $0x8] sm:$0xff] %vm3503, 0.0
          %vm3535 = vcmask 140288
          %3536 = vst.msk [vmem:[#allocation3 + $0x10] sm:$0x3] %vm3535, 0.0
        $region52: #{update_block_pallas.1} parent=47 // pred_fallthru
          _
        %p3537 = scmp.eq.s32.totalorder %s28, 3
        // Predicated region
        $region53: #{update_block_pallas.1} parent=47 // pred_check
          %p3538 = pneg %p3537
        $region54: #{update_block_pallas.1} parent=47 // pred_check_branch
          %3540 = sbr.rel (%p3538) target = $region56
        $region55: #{update_block_pallas.1} parent=47 // pred_region
          %s3541 = scalar_lea.vmem [#allocation3], 120
          %3542 = vst.msk [vmem:[%s3541] sm:$0xff] %vm3503, 0.0
          %3543 = vst.msk [vmem:[%s3541 + $0x8] sm:$0xff] %vm3503, 0.0
          %vm3544 = vcmask 140288
          %3545 = vst.msk [vmem:[%s3541 + $0x10] sm:$0x3] %vm3544, 0.0
        $region56: #{update_block_pallas.1} parent=47 // pred_fallthru
          _
        %v3546 = vld [vmem:[#allocation3] sm:$0xff]
        %v3547 = vld [vmem:[#allocation3 + $0x8] sm:$0xff]
        %v3548 = vld [vmem:[#allocation3 + $0x18] sm:$0xff]
        %v3549 = vld [vmem:[#allocation3 + $0x20] sm:$0xff]
        %v3550 = vld [vmem:[#allocation3 + $0x30] sm:$0xff]
        %v3551 = vld [vmem:[#allocation3 + $0x38] sm:$0xff]
        %v3552 = vld [vmem:[#allocation3 + $0x48] sm:$0xff]
        %v3553 = vld [vmem:[#allocation3 + $0x50] sm:$0xff]
        %v3554 = vadd.f32 %v3546, 0.0
        %v3555 = vadd.f32 %v3547, 0.0
        %v3556 = vadd.f32 %v3548, 0.0
        %v3557 = vadd.f32 %v3549, 0.0
        %v3558 = vadd.f32 %v3550, 0.0
        %v3559 = vadd.f32 %v3551, 0.0
        %v3560 = vadd.f32 %v3552, 0.0
        %v3561 = vadd.f32 %v3553, 0.0
        %v3562 = vld [vmem:[#allocation3 + $0x1] sm:$0xff]
        %v3563 = vld [vmem:[#allocation3 + $0x9] sm:$0xff]
        %v3564 = vld [vmem:[#allocation3 + $0x19] sm:$0xff]
        %v3565 = vld [vmem:[#allocation3 + $0x21] sm:$0xff]
        %v3566 = vld [vmem:[#allocation3 + $0x31] sm:$0xff]
        %v3567 = vld [vmem:[#allocation3 + $0x39] sm:$0xff]
        %v3568 = vld [vmem:[#allocation3 + $0x49] sm:$0xff]
        %v3569 = vld [vmem:[#allocation3 + $0x51] sm:$0xff]
        %3578 = vrot.lane.b32.xlu0 %v3562, 126
        %v3579 = vpop.permute.xlu0 %3578
        %3580 = vrot.lane.b32.xlu0 %v3563, 126
        %v3581 = vpop.permute.xlu0 %3580
        %3582 = vrot.lane.b32.xlu0 %v3564, 126
        %v3583 = vpop.permute.xlu0 %3582
        %3584 = vrot.lane.b32.xlu0 %v3565, 126
        %v3585 = vpop.permute.xlu0 %3584
        %3586 = vrot.lane.b32.xlu0 %v3566, 126
        %v3587 = vpop.permute.xlu0 %3586
        %3588 = vrot.lane.b32.xlu0 %v3567, 126
        %v3589 = vpop.permute.xlu0 %3588
        %3590 = vrot.lane.b32.xlu0 %v3568, 126
        %v3591 = vpop.permute.xlu0 %3590
        %3592 = vrot.lane.b32.xlu0 %v3569, 126
        %v3593 = vpop.permute.xlu0 %3592
        %v3602 = vadd.f32 %v3554, %v3579
        %v3603 = vadd.f32 %v3555, %v3581
        %v3604 = vadd.f32 %v3556, %v3583
        %v3605 = vadd.f32 %v3557, %v3585
        %v3606 = vadd.f32 %v3558, %v3587
        %v3607 = vadd.f32 %v3559, %v3589
        %v3608 = vadd.f32 %v3560, %v3591
        %v3609 = vadd.f32 %v3561, %v3593
        %v3610 = vld [vmem:[#allocation3 + $0x2] sm:$0xff]
        %v3611 = vld [vmem:[#allocation3 + $0xa] sm:$0xff]
        %v3612 = vld [vmem:[#allocation3 + $0x1a] sm:$0xff]
        %v3613 = vld [vmem:[#allocation3 + $0x22] sm:$0xff]
        %v3614 = vld [vmem:[#allocation3 + $0x32] sm:$0xff]
        %v3615 = vld [vmem:[#allocation3 + $0x3a] sm:$0xff]
        %v3616 = vld [vmem:[#allocation3 + $0x4a] sm:$0xff]
        %v3617 = vld [vmem:[#allocation3 + $0x52] sm:$0xff]
        %3626 = vrot.lane.b32.xlu0 %v3610, 124
        %v3627 = vpop.permute.xlu0 %3626
        %3628 = vrot.lane.b32.xlu0 %v3611, 124
        %v3629 = vpop.permute.xlu0 %3628
        %3630 = vrot.lane.b32.xlu0 %v3612, 124
        %v3631 = vpop.permute.xlu0 %3630
        %3632 = vrot.lane.b32.xlu0 %v3613, 124
        %v3633 = vpop.permute.xlu0 %3632
        %3634 = vrot.lane.b32.xlu0 %v3614, 124
        %v3635 = vpop.permute.xlu0 %3634
        %3636 = vrot.lane.b32.xlu0 %v3615, 124
        %v3637 = vpop.permute.xlu0 %3636
        %3638 = vrot.lane.b32.xlu0 %v3616, 124
        %v3639 = vpop.permute.xlu0 %3638
        %3640 = vrot.lane.b32.xlu0 %v3617, 124
        %v3641 = vpop.permute.xlu0 %3640
        %v3650 = vadd.f32 %v3602, %v3627
        %v3651 = vadd.f32 %v3603, %v3629
        %v3652 = vadd.f32 %v3604, %v3631
        %v3653 = vadd.f32 %v3605, %v3633
        %v3654 = vadd.f32 %v3606, %v3635
        %v3655 = vadd.f32 %v3607, %v3637
        %v3656 = vadd.f32 %v3608, %v3639
        %v3657 = vadd.f32 %v3609, %v3641
        %s3658 = scalar_lea.vmem [#allocation3], 24
        %v3659 = vld [vmem:[%s3658] sm:$0xff]
        %v3660 = vld [vmem:[%s3658 + $0x8] sm:$0xff]
        %v3661 = vld [vmem:[%s3658 + $0x18] sm:$0xff]
        %v3662 = vld [vmem:[%s3658 + $0x20] sm:$0xff]
        %v3663 = vld [vmem:[%s3658 + $0x30] sm:$0xff]
        %v3664 = vld [vmem:[%s3658 + $0x38] sm:$0xff]
        %v3665 = vld [vmem:[%s3658 + $0x48] sm:$0xff]
        %v3666 = vld [vmem:[%s3658 + $0x50] sm:$0xff]
        %3675 = vrot.lane.b32.xlu0 %v3659, 122
        %v3676 = vpop.permute.xlu0 %3675
        %3677 = vrot.lane.b32.xlu0 %v3660, 122
        %v3678 = vpop.permute.xlu0 %3677
        %3679 = vrot.lane.b32.xlu0 %v3661, 122
        %v3680 = vpop.permute.xlu0 %3679
        %3681 = vrot.lane.b32.xlu0 %v3662, 122
        %v3682 = vpop.permute.xlu0 %3681
        %3683 = vrot.lane.b32.xlu0 %v3663, 122
        %v3684 = vpop.permute.xlu0 %3683
        %3685 = vrot.lane.b32.xlu0 %v3664, 122
        %v3686 = vpop.permute.xlu0 %3685
        %3687 = vrot.lane.b32.xlu0 %v3665, 122
        %v3688 = vpop.permute.xlu0 %3687
        %3689 = vrot.lane.b32.xlu0 %v3666, 122
        %v3690 = vpop.permute.xlu0 %3689
        %v3699 = vadd.f32 %v3650, %v3676
        %v3700 = vadd.f32 %v3651, %v3678
        %v3701 = vadd.f32 %v3652, %v3680
        %v3702 = vadd.f32 %v3653, %v3682
        %v3703 = vadd.f32 %v3654, %v3684
        %v3704 = vadd.f32 %v3655, %v3686
        %v3705 = vadd.f32 %v3656, %v3688
        %v3706 = vadd.f32 %v3657, %v3690
        %v3707 = vld [vmem:[%s3658 + $0x1] sm:$0xff]
        %v3708 = vld [vmem:[%s3658 + $0x9] sm:$0xff]
        %v3709 = vld [vmem:[%s3658 + $0x19] sm:$0xff]
        %v3710 = vld [vmem:[%s3658 + $0x21] sm:$0xff]
        %v3711 = vld [vmem:[%s3658 + $0x31] sm:$0xff]
        %v3712 = vld [vmem:[%s3658 + $0x39] sm:$0xff]
        %v3713 = vld [vmem:[%s3658 + $0x49] sm:$0xff]
        %v3714 = vld [vmem:[%s3658 + $0x51] sm:$0xff]
        %3723 = vrot.lane.b32.xlu0 %v3707, 120
        %v3724 = vpop.permute.xlu0 %3723
        %3725 = vrot.lane.b32.xlu0 %v3708, 120
        %v3726 = vpop.permute.xlu0 %3725
        %3727 = vrot.lane.b32.xlu0 %v3709, 120
        %v3728 = vpop.permute.xlu0 %3727
        %3729 = vrot.lane.b32.xlu0 %v3710, 120
        %v3730 = vpop.permute.xlu0 %3729
        %3731 = vrot.lane.b32.xlu0 %v3711, 120
        %v3732 = vpop.permute.xlu0 %3731
        %3733 = vrot.lane.b32.xlu0 %v3712, 120
        %v3734 = vpop.permute.xlu0 %3733
        %3735 = vrot.lane.b32.xlu0 %v3713, 120
        %v3736 = vpop.permute.xlu0 %3735
        %3737 = vrot.lane.b32.xlu0 %v3714, 120
        %v3738 = vpop.permute.xlu0 %3737
        %v3747 = vadd.f32 %v3699, %v3724
        %v3748 = vadd.f32 %v3700, %v3726
        %v3749 = vadd.f32 %v3701, %v3728
        %v3750 = vadd.f32 %v3702, %v3730
        %v3751 = vadd.f32 %v3703, %v3732
        %v3752 = vadd.f32 %v3704, %v3734
        %v3753 = vadd.f32 %v3705, %v3736
        %v3754 = vadd.f32 %v3706, %v3738
        %v3755 = vld [vmem:[%s3658 + $0x2] sm:$0xff]
        %v3756 = vld [vmem:[%s3658 + $0xa] sm:$0xff]
        %v3757 = vld [vmem:[%s3658 + $0x1a] sm:$0xff]
        %v3758 = vld [vmem:[%s3658 + $0x22] sm:$0xff]
        %v3759 = vld [vmem:[%s3658 + $0x32] sm:$0xff]
        %v3760 = vld [vmem:[%s3658 + $0x3a] sm:$0xff]
        %v3761 = vld [vmem:[%s3658 + $0x4a] sm:$0xff]
        %v3762 = vld [vmem:[%s3658 + $0x52] sm:$0xff]
        %3771 = vrot.lane.b32.xlu0 %v3755, 118
        %v3772 = vpop.permute.xlu0 %3771
        %3773 = vrot.lane.b32.xlu0 %v3756, 118
        %v3774 = vpop.permute.xlu0 %3773
        %3775 = vrot.lane.b32.xlu0 %v3757, 118
        %v3776 = vpop.permute.xlu0 %3775
        %3777 = vrot.lane.b32.xlu0 %v3758, 118
        %v3778 = vpop.permute.xlu0 %3777
        %3779 = vrot.lane.b32.xlu0 %v3759, 118
        %v3780 = vpop.permute.xlu0 %3779
        %3781 = vrot.lane.b32.xlu0 %v3760, 118
        %v3782 = vpop.permute.xlu0 %3781
        %3783 = vrot.lane.b32.xlu0 %v3761, 118
        %v3784 = vpop.permute.xlu0 %3783
        %3785 = vrot.lane.b32.xlu0 %v3762, 118
        %v3786 = vpop.permute.xlu0 %3785
        %v3795 = vadd.f32 %v3747, %v3772
        %v3796 = vadd.f32 %v3748, %v3774
        %v3797 = vadd.f32 %v3749, %v3776
        %v3798 = vadd.f32 %v3750, %v3778
        %v3799 = vadd.f32 %v3751, %v3780
        %v3800 = vadd.f32 %v3752, %v3782
        %v3801 = vadd.f32 %v3753, %v3784
        %v3802 = vadd.f32 %v3754, %v3786
        %s3803 = scalar_lea.vmem [#allocation3], 48
        %v3804 = vld [vmem:[%s3803] sm:$0xff]
        %v3805 = vld [vmem:[%s3803 + $0x8] sm:$0xff]
        %v3806 = vld [vmem:[%s3803 + $0x18] sm:$0xff]
        %v3807 = vld [vmem:[%s3803 + $0x20] sm:$0xff]
        %v3808 = vld [vmem:[%s3803 + $0x30] sm:$0xff]
        %v3809 = vld [vmem:[%s3803 + $0x38] sm:$0xff]
        %v3810 = vld [vmem:[%s3803 + $0x48] sm:$0xff]
        %v3811 = vld [vmem:[%s3803 + $0x50] sm:$0xff]
        %3820 = vrot.lane.b32.xlu0 %v3804, 116
        %v3821 = vpop.permute.xlu0 %3820
        %3822 = vrot.lane.b32.xlu0 %v3805, 116
        %v3823 = vpop.permute.xlu0 %3822
        %3824 = vrot.lane.b32.xlu0 %v3806, 116
        %v3825 = vpop.permute.xlu0 %3824
        %3826 = vrot.lane.b32.xlu0 %v3807, 116
        %v3827 = vpop.permute.xlu0 %3826
        %3828 = vrot.lane.b32.xlu0 %v3808, 116
        %v3829 = vpop.permute.xlu0 %3828
        %3830 = vrot.lane.b32.xlu0 %v3809, 116
        %v3831 = vpop.permute.xlu0 %3830
        %3832 = vrot.lane.b32.xlu0 %v3810, 116
        %v3833 = vpop.permute.xlu0 %3832
        %3834 = vrot.lane.b32.xlu0 %v3811, 116
        %v3835 = vpop.permute.xlu0 %3834
        %v3844 = vadd.f32 %v3795, %v3821
        %v3845 = vadd.f32 %v3796, %v3823
        %v3846 = vadd.f32 %v3797, %v3825
        %v3847 = vadd.f32 %v3798, %v3827
        %v3848 = vadd.f32 %v3799, %v3829
        %v3849 = vadd.f32 %v3800, %v3831
        %v3850 = vadd.f32 %v3801, %v3833
        %v3851 = vadd.f32 %v3802, %v3835
        %v3852 = vld [vmem:[%s3803 + $0x1] sm:$0xff]
        %v3853 = vld [vmem:[%s3803 + $0x9] sm:$0xff]
        %v3854 = vld [vmem:[%s3803 + $0x19] sm:$0xff]
        %v3855 = vld [vmem:[%s3803 + $0x21] sm:$0xff]
        %v3856 = vld [vmem:[%s3803 + $0x31] sm:$0xff]
        %v3857 = vld [vmem:[%s3803 + $0x39] sm:$0xff]
        %v3858 = vld [vmem:[%s3803 + $0x49] sm:$0xff]
        %v3859 = vld [vmem:[%s3803 + $0x51] sm:$0xff]
        %3868 = vrot.lane.b32.xlu0 %v3852, 114
        %v3869 = vpop.permute.xlu0 %3868
        %3870 = vrot.lane.b32.xlu0 %v3853, 114
        %v3871 = vpop.permute.xlu0 %3870
        %3872 = vrot.lane.b32.xlu0 %v3854, 114
        %v3873 = vpop.permute.xlu0 %3872
        %3874 = vrot.lane.b32.xlu0 %v3855, 114
        %v3875 = vpop.permute.xlu0 %3874
        %3876 = vrot.lane.b32.xlu0 %v3856, 114
        %v3877 = vpop.permute.xlu0 %3876
        %3878 = vrot.lane.b32.xlu0 %v3857, 114
        %v3879 = vpop.permute.xlu0 %3878
        %3880 = vrot.lane.b32.xlu0 %v3858, 114
        %v3881 = vpop.permute.xlu0 %3880
        %3882 = vrot.lane.b32.xlu0 %v3859, 114
        %v3883 = vpop.permute.xlu0 %3882
        %v3892 = vadd.f32 %v3844, %v3869
        %v3893 = vadd.f32 %v3845, %v3871
        %v3894 = vadd.f32 %v3846, %v3873
        %v3895 = vadd.f32 %v3847, %v3875
        %v3896 = vadd.f32 %v3848, %v3877
        %v3897 = vadd.f32 %v3849, %v3879
        %v3898 = vadd.f32 %v3850, %v3881
        %v3899 = vadd.f32 %v3851, %v3883
        %v3900 = vld [vmem:[%s3803 + $0x2] sm:$0xff]
        %v3901 = vld [vmem:[%s3803 + $0xa] sm:$0xff]
        %v3902 = vld [vmem:[%s3803 + $0x1a] sm:$0xff]
        %v3903 = vld [vmem:[%s3803 + $0x22] sm:$0xff]
        %v3904 = vld [vmem:[%s3803 + $0x32] sm:$0xff]
        %v3905 = vld [vmem:[%s3803 + $0x3a] sm:$0xff]
        %v3906 = vld [vmem:[%s3803 + $0x4a] sm:$0xff]
        %v3907 = vld [vmem:[%s3803 + $0x52] sm:$0xff]
        %3916 = vrot.lane.b32.xlu0 %v3900, 112
        %v3917 = vpop.permute.xlu0 %3916
        %3918 = vrot.lane.b32.xlu0 %v3901, 112
        %v3919 = vpop.permute.xlu0 %3918
        %3920 = vrot.lane.b32.xlu0 %v3902, 112
        %v3921 = vpop.permute.xlu0 %3920
        %3922 = vrot.lane.b32.xlu0 %v3903, 112
        %v3923 = vpop.permute.xlu0 %3922
        %3924 = vrot.lane.b32.xlu0 %v3904, 112
        %v3925 = vpop.permute.xlu0 %3924
        %3926 = vrot.lane.b32.xlu0 %v3905, 112
        %v3927 = vpop.permute.xlu0 %3926
        %3928 = vrot.lane.b32.xlu0 %v3906, 112
        %v3929 = vpop.permute.xlu0 %3928
        %3930 = vrot.lane.b32.xlu0 %v3907, 112
        %v3931 = vpop.permute.xlu0 %3930
        %v3940 = vadd.f32 %v3892, %v3917
        %v3941 = vadd.f32 %v3893, %v3919
        %v3942 = vadd.f32 %v3894, %v3921
        %v3943 = vadd.f32 %v3895, %v3923
        %v3944 = vadd.f32 %v3896, %v3925
        %v3945 = vadd.f32 %v3897, %v3927
        %v3946 = vadd.f32 %v3898, %v3929
        %v3947 = vadd.f32 %v3899, %v3931
        %v3948 = vld [vmem:[%s6] sm:$0x1]
        %v3950 = vlaneseq
        %v3951 = vshrl.u32 %v3950, 7
        %v3952 = vsub.s32 0, %v3951
        %v3953 = vrot.slane %v3948, %v3952
        %v3955 = vadd.f32 %v3940, %v3953
        %v3956 = vadd.f32 %v3941, %v3953
        %v3957 = vadd.f32 %v3942, %v3953
        %v3958 = vadd.f32 %v3943, %v3953
        %v3959 = vadd.f32 %v3944, %v3953
        %v3960 = vadd.f32 %v3945, %v3953
        %v3961 = vadd.f32 %v3946, %v3953
        %v3962 = vadd.f32 %v3947, %v3953
        %vm3963 = vcmask 15360
        %3964 = vst.msk [vmem:[%s357] sm:$0xff] %vm3963, %v3955
        %3965 = vst.msk [vmem:[%s357 + $0x8] sm:$0xff] %vm3963, %v3956
        %3966 = vst.msk [vmem:[%s357 + $0x10] sm:$0xff] %vm3963, %v3957
        %3967 = vst.msk [vmem:[%s357 + $0x18] sm:$0xff] %vm3963, %v3958
        %3968 = vst.msk [vmem:[%s357 + $0x20] sm:$0xff] %vm3963, %v3959
        %3969 = vst.msk [vmem:[%s357 + $0x28] sm:$0xff] %vm3963, %v3960
        %3970 = vst.msk [vmem:[%s357 + $0x30] sm:$0xff] %vm3963, %v3961
        %3971 = vst.msk [vmem:[%s357 + $0x38] sm:$0xff] %vm3963, %v3962
        %s3972 = sand.u32 %s201, 1
        %s3973 = scalar_lea.sflag [#allocation5], %s3972
        %s3974 = sand.u32 %s201, 1
        %s3975 = smul.addr %s3974, 320
        %s3976 = scalar_lea.vmem [#allocation4], %s3975
        %s3977 = smul.u32 4, %s28
        %p3978 = scmp.lt.s32.totalorder %s27, 1
        %s3979 = scalar_select %p3978, %s27, 1
        %p3980 = scmp.lt.s32.totalorder %s3977, 15
        %s3981 = scalar_select %p3980, %s3977, 15
        %s3982 = smul.addr %s3981, 2
        %s3983 = smul.addr %s3979, 32
        %s3984 = sadd.s32 %s3982, %s3983
        %s3985 = smul.addr %s3984, 8
        %s3986 = scalar_lea.vmem %s8, %s3985
        // Predicated region
        $region57: #{update_block_pallas.1} parent=47 // pred_check
          %p3987 = pneg %p211
        $region58: #{update_block_pallas.1} parent=47 // pred_check_branch
          %3989 = sbr.rel (%p3987) target = $region60
        $region59: #{update_block_pallas.1} parent=47 // pred_region
          %s3990 = smul.u32 4, %s28
          %s3992 = ssub.s32 5120, 5120
          %3993 = vsyncadd %s3973, %s3992
          %s3994 = smul.addr %s3990, 10
          %s3995 = smul.addr %s27, 160
          %s3996 = sadd.s32 %s3994, %s3995
          %s3997 = smul.addr %s3996, 128
          %s3998 = scalar_lea.hbm %s7, %s3997
          %s3999 = sshll.u32 %s3976, 4
          %s4000 = int_to_ptr.vmem [resolvable:$true] %s3999
          %4005 = dma.vmem_to_hbm [thread:$0]  %s4000, 5120, %s3998, %s3973, 640, 640, 40
        $region60: #{update_block_pallas.1} parent=47 // pred_fallthru
          _
        // Predicated region
        $region61: #{update_block_pallas.1} parent=47 // pred_check
          %p4006 = pneg %p239
        $region62: #{update_block_pallas.1} parent=47 // pred_check_branch
          %4008 = sbr.rel (%p4006) target = $region64
        $region63: #{update_block_pallas.1} parent=47 // pred_region
          %s4009 = smul.u32 4, %s28
        $region64: #{update_block_pallas.1} parent=47 // pred_fallthru
          _
      $region48: #{update_block_pallas.1} parent=5 // pred_fallthru
        _
      %p4010 = scmp.le.s32.totalorder 2, %s18
      // Predicated region
      $region65: #{update_block_pallas.1} parent=5 // pred_check
        %p4011 = pneg %p4010
      $region66: #{update_block_pallas.1} parent=5 // pred_check_branch
        %4013 = sbr.rel (%p4011) target = $region68
      $region67: #{update_block_pallas.1} parent=5 // pred_region
        %s4014 = ssub.s32 %s18, 2
        // Predicated region
        $region69: #{update_block_pallas.1} parent=67 // pred_check
          %p4015 = pneg %p217
        $region70: #{update_block_pallas.1} parent=67 // pred_check_branch
          %4017 = sbr.rel (%p4015) target = $region72
        $region71: #{update_block_pallas.1} parent=67 // pred_region
          %s4018 = sand.u32 %s202, 1
          %s4019 = scalar_lea.sflag [#allocation5], %s4018
          %s4020 = sand.u32 %s202, 1
          %s4021 = smul.addr %s4020, 320
          %s4022 = scalar_lea.vmem [#allocation4], %s4021
          %4023 = dma.done %s4019, 5120
        $region72: #{update_block_pallas.1} parent=67 // pred_fallthru
          _
        // Predicated region
        $region73: #{update_block_pallas.1} parent=67 // pred_check
          %p4024 = pneg %p245
        $region74: #{update_block_pallas.1} parent=67 // pred_check_branch
          %4026 = sbr.rel (%p4024) target = $region76
        $region75: #{update_block_pallas.1} parent=67 // pred_region
          %s4027 = smul.u32 4, %s30
          %p4028 = scmp.lt.s32.totalorder %s29, 1
          %s4029 = scalar_select %p4028, %s29, 1
          %p4030 = scmp.lt.s32.totalorder %s4027, 15
          %s4031 = scalar_select %p4030, %s4027, 15
          %s4032 = smul.addr %s4031, 2
          %s4033 = smul.addr %s4029, 32
          %s4034 = sadd.s32 %s4032, %s4033
          %s4035 = smul.addr %s4034, 8
          %s4036 = scalar_lea.vmem %s8, %s4035
        $region76: #{update_block_pallas.1} parent=67 // pred_fallthru
          _
      $region68: #{update_block_pallas.1} parent=5 // pred_fallthru
        _
    $region6: #{update_block_pallas.1} parent=1 // loop_footer
      %s22 = sadd.s32 1, %s18
    $region7: #{update_block_pallas.1} parent=1 // loop_footer_branch
      %17 = sbr.rel target = $region3
    $region8: #{update_block_pallas.1} parent=1 // loop_exit
      _
    %4037 = vsyncpa [#allocation5], 1
    %s4038 = scalar_lea.sflag [#allocation5], 1
    %4039 = vsyncpa %s4038, 1

</llo_original>
